<compile_context>
chip_gen: v7x
topology: tpu7x:2x2x1
jax: 0.10.0
libtpu: 0.0.40
codegen_flags: <defaults>
</compile_context>

<pallas_src>
import functools

import jax
import jax.numpy as jnp
from jax import lax
from jax.experimental import pallas as pl
from jax.experimental.pallas import tpu as pltpu

EPS = 1e-5


# ------------------------------ Pallas kernel --------------------------------

def _resblock_kernel(xflat_ref, w1_ref, b1_ref, w2_ref, b2_ref, mask_ref, *rest,
                     proj, Ho, Wf, cin_p, cout_p, s1_starts, sc_start):
    """Fused residual block for one batch image (one grid step).

    xflat_ref: (Lp, cin_p)        bf16  phase-decomposed, zero-padded input,
                                        flattened into rows of width Wf
    w1_ref   : (9*cin_p, cout_p)  bf16  fused ACBlock1+BN1 3x3 weights (resident)
    w2_ref   : (9*cout_p, cout_p) bf16  fused ACBlock2+BN2 3x3 weights (resident)
    mask_ref : (M, 1)             f32   1.0 on valid flat columns (j < Wo), else 0
    wsc_ref  : (cin_p, cout_p)    bf16  1x1 projection-shortcut weights (proj only)
    acc_ref  : (M, cout_p)        f32   shared accumulator scratch (both stages)
    yh_ref   : (Hs, cout_p)       bf16  y1 with zero halo, flat rows of width Wf
    """
    if proj:
        wsc_ref, bsc_ref, o_ref, acc_ref, yh_ref = rest
    else:
        wsc_ref = bsc_ref = None
        o_ref, acc_ref, yh_ref = rest

    f32, bf16 = jnp.float32, jnp.bfloat16
    M = Ho * Wf                   # flat output rows; columns j >= Wo are garbage

    # ---- stage 1: ACBlock1+BN1 (3x3, stride s) as 9 flat-shifted matmuls ----
    # Each tap reads a *contiguous* (M, cin_p) slice of the resident input block
    # (no im2col, no slice+reshape relayout copies).
    for t in range(9):
        xs = xflat_ref[s1_starts[t]:s1_starts[t] + M, :]
        wk = w1_ref[t * cin_p:(t + 1) * cin_p, :]
        d = jnp.dot(xs, wk, preferred_element_type=f32)
        if t == 0:
            acc_ref[...] = d
        else:
            acc_ref[...] += d

    # Bias + ReLU; zero the Wf-Wo garbage columns so the flat store below leaves
    # the left/right halo columns of yh at exactly zero.
    y1 = (jnp.maximum(acc_ref[...] + b1_ref[...], 0.0) * mask_ref[...]).astype(bf16)

    # ---- keep y1 on-chip: bf16 flat scratch with a zero halo -----------------
    # Border-only zeroing: (Wf+1)-row top strip and the bottom strip; interior and
    # left/right halo columns are fully overwritten by the masked y1 store.
    Hs = yh_ref.shape[0]
    bot = (Ho + 1) * Wf + 1
    yh_ref[0:Wf + 1, :] = jnp.zeros((Wf + 1, cout_p), bf16)
    yh_ref[bot:Hs, :] = jnp.zeros((Hs - bot, cout_p), bf16)
    yh_ref[Wf + 1:Wf + 1 + M, :] = y1

    # ---- shortcut: re-uses the resident input block (no extra DMA) -----------
    xsc = xflat_ref[sc_start:sc_start + M, :]
    if proj:                 # 1x1 conv (stride s) with BN folded into the weights
        acc_ref[...] = (jnp.dot(xsc, wsc_ref[...], preferred_element_type=f32)
                        + bsc_ref[...])
    else:                    # identity shortcut: plain VPU add, no eye-matmul
        acc_ref[...] = xsc.astype(f32)

    # ---- stage 2: ACBlock2+BN2 (3x3, stride 1) + residual --------------------
    for t in range(9):
        ki, kj = divmod(t, 3)
        ys = yh_ref[ki * Wf + kj:ki * Wf + kj + M, :]       # contiguous bf16 slice
        wk = w2_ref[t * cout_p:(t + 1) * cout_p, :]
        acc_ref[...] += jnp.dot(ys, wk, preferred_element_type=f32)

    # Final bias + ReLU; lane-dense, channel-padded bf16 store.  Valid-column /
    # channel slicing and the NCHW transpose happen once in the wrapper epilogue.
    o_ref[...] = jnp.maximum(acc_ref[...] + b2_ref[...], 0.0).astype(o_ref.dtype)


# ------------------------------ parameter folding ----------------------------

def bn_fold(bn):
    s = bn['gamma'] / jnp.sqrt(bn['var'] + EPS)
    return s, bn['beta'] - bn['mean'] * s


def fuse_acblock(p):
    """ACNet deploy-style fusion: 3x3 + 3x1 + 1x3 branches (BN-folded) -> one 3x3."""
    s_sq, b_sq = bn_fold(p['sq_bn'])
    s_v, b_v = bn_fold(p['ver_bn'])
    s_h, b_h = bn_fold(p['hor_bn'])
    W = p['sq_w'] * s_sq[:, None, None, None]
    W = W.at[:, :, :, 1].add(p['ver_w'][:, :, :, 0] * s_v[:, None, None])
    W = W.at[:, :, 1, :].add(p['hor_w'][:, :, 0, :] * s_h[:, None, None])
    return W, b_sq + b_v + b_h                       # OIHW (Co,Ci,3,3), (Co,)


def apply_bn_to_conv(W, b, bn):
    s, t = bn_fold(bn)
    return W * s[:, None, None, None], b * s + t


def _round_up(v, m):
    return (v + m - 1) // m * m


def conv3x3_w_to_mat(w_oihw, ci_pad, co_pad):
    """OIHW -> (9*ci_pad, co_pad) bf16; tap (ki,kj) owns rows [(ki*3+kj)*ci_pad, ...)."""
    co, ci, kh, kw = w_oihw.shape
    wt = jnp.transpose(w_oihw, (2, 3, 1, 0))                      # (KH,KW,Ci,Co)
    wt = jnp.pad(wt, ((0, 0), (0, 0), (0, ci_pad - ci), (0, co_pad - co)))
    return wt.reshape(kh * kw * ci_pad, co_pad).astype(jnp.bfloat16)


def _pad_bias(b, co_pad):
    return jnp.pad(b, (0, co_pad - b.shape[0])).reshape(1, co_pad).astype(jnp.float32)


# ------------------------------ forward (wrapper) ----------------------------

def residual_block_forward(x_nchw, params, stride):
    x = jnp.transpose(x_nchw, (0, 2, 3, 1)).astype(jnp.float32)   # NCHW -> NHWC
    N, H, W, Cin = x.shape
    s, K, P = stride, 3, 1

    # Fold BN + ACNet branches into single 3x3 conv weights/biases (param setup).
    W1, b1 = apply_bn_to_conv(*fuse_acblock(params['acb1']), params['bn1'])
    W2, b2 = apply_bn_to_conv(*fuse_acblock(params['acb2']), params['bn2'])
    Cout = W1.shape[0]
    proj = (s != 1) or (Cin != Cout)

    cin_p, cout_p = _round_up(Cin, 128), _round_up(Cout, 128)     # lane-dense channels
    Ho = (H + 2 * P - K) // s + 1
    Wo = (W + 2 * P - K) // s + 1
    Hq = Ho + (K - 1) // s          # rows per stride-phase touched by the 3x3 taps
    Wf = Wo + 2                     # common flat row width (>= Wo+(K-1)//s and Wo+2)
    M = Ho * Wf                     # flat rows per image in accumulators / output

    # Channel-pad, spatially zero-pad, phase-decompose, flatten rows of width Wf.
    xcp = jnp.pad(x, ((0, 0), (0, 0), (0, 0), (0, cin_p - Cin)))
    hp_ext = max(H + 2 * P, s * Hq)
    wp_ext = max(W + 2 * P, s * Wf)
    xsp = jnp.pad(xcp, ((0, 0), (P, hp_ext - H - P), (P, wp_ext - W - P), (0, 0)))
    phases = [xsp[:, a:a + Hq * s:s, b:b + Wf * s:s, :]
              for a in range(s) for b in range(s)]
    xph = jnp.concatenate(phases, axis=1)                   # (N, s*s*Hq, Wf, cin_p)
    Lr = s * s * Hq * Wf
    Lp = _round_up(Lr + 2, 8)       # zero tail: last-phase taps may over-read by <=2
    xflat = jnp.pad(xph.reshape(N, Lr, cin_p),
                    ((0, 0), (0, Lp - Lr), (0, 0))).astype(jnp.bfloat16)

    # Static flat start offsets for the 9 stage-1 taps and the shortcut slice.
    s1_starts = tuple(
        (((ki % s) * s + (kj % s)) * Hq + ki // s) * Wf + kj // s
        for ki in range(3) for kj in range(3))
    sc_start = ((P % s) * s + (P % s)) * Hq * Wf + (P // s) * (Wf + 1)

    w1m = conv3x3_w_to_mat(W1, cin_p, cout_p)                     # (9*cin_p, cout_p)
    w2m = conv3x3_w_to_mat(W2, cout_p, cout_p)                    # (9*cout_p, cout_p)
    b1m, b2m = _pad_bias(b1, cout_p), _pad_bias(b2, cout_p)
    maskm = (jnp.arange(M) % Wf < Wo).astype(jnp.float32).reshape(M, 1)

    inputs = [xflat, w1m, b1m, w2m, b2m, maskm]
    in_specs = [
        pl.BlockSpec((None, Lp, cin_p), lambda n: (n, 0, 0)),
        pl.BlockSpec((9 * cin_p, cout_p), lambda n: (0, 0)),      # resident weights
        pl.BlockSpec((1, cout_p), lambda n: (0, 0)),
        pl.BlockSpec((9 * cout_p, cout_p), lambda n: (0, 0)),     # resident weights
        pl.BlockSpec((1, cout_p), lambda n: (0, 0)),
        pl.BlockSpec((M, 1), lambda n: (0, 0)),                   # resident mask
    ]
    if proj:                         # projection shortcut: 1x1 conv (stride s) + BN
        Wsc, bsc = apply_bn_to_conv(params['sc_w'],
                                    jnp.zeros((Cout,), jnp.float32),
                                    params['sc_bn'])
        wscm = jnp.pad(jnp.transpose(Wsc[:, :, 0, 0], (1, 0)),
                       ((0, cin_p - Cin), (0, cout_p - Cout))).astype(jnp.bfloat16)
        inputs += [wscm, _pad_bias(bsc, cout_p)]
        in_specs += [pl.BlockSpec((cin_p, cout_p), lambda n: (0, 0)),
                     pl.BlockSpec((1, cout_p), lambda n: (0, 0))]

    Hs = _round_up((Ho + 2) * Wf + 2, 8)   # +2: stage-2 taps over-read garbage cols

    kernel = functools.partial(_resblock_kernel, proj=proj, Ho=Ho, Wf=Wf,
                               cin_p=cin_p, cout_p=cout_p,
                               s1_starts=s1_starts, sc_start=sc_start)

    # VMEM budget: double-buffered activation/output blocks + weights (default
    # double-buffered) + accumulator / y1-halo scratches; headroom, not the full cap.
    blk = (Lp * cin_p + M * cout_p) * 2
    wts = (9 * cin_p + 9 * cout_p + (cin_p if proj else 0)) * cout_p * 2 \
        + 4 * cout_p * 4 + M * 128 * 4
    scr = M * cout_p * 4 + Hs * cout_p * 2
    vmem_limit = int(min(max(2 * blk + 2 * wts + scr + (8 << 20), 32 << 20),
                         112 << 20))

    flops = 2 * N * M * (9 * cin_p + 9 * cout_p + (cin_p if proj else 0)) * cout_p
    bytes_accessed = int(N * (Lp * cin_p + M * cout_p) * 2 + wts)

    out = pl.pallas_call(
        kernel,
        out_shape=jax.ShapeDtypeStruct((N, M, cout_p), jnp.bfloat16),
        grid_spec=pltpu.PrefetchScalarGridSpec(
            num_scalar_prefetch=0,
            grid=(N,),
            in_specs=in_specs,
            out_specs=pl.BlockSpec((None, M, cout_p), lambda n: (n, 0, 0)),
            scratch_shapes=[pltpu.VMEM((M, cout_p), jnp.float32),      # shared acc
                            pltpu.VMEM((Hs, cout_p), jnp.bfloat16)],   # y1 + halo
        ),
        compiler_params=pltpu.CompilerParams(
            dimension_semantics=("parallel",),
            vmem_limit_bytes=vmem_limit),
        cost_estimate=pl.CostEstimate(flops=flops, transcendentals=0,
                                      bytes_accessed=bytes_accessed),
    )(*inputs)

    # Epilogue (one HBM pass): drop garbage flat columns + channel padding, back to
    # NCHW f32.  When chaining blocks, keep the NHWC channel-padded bf16 layout.
    out = out.reshape(N, Ho, Wf, cout_p)[:, :, :Wo, :Cout]
    return jnp.transpose(out, (0, 3, 1, 2)).astype(jnp.float32)


# ------------------------------ reference (pure JAX, unfused) ----------------

def _conv2d_ref(x, w, stride, pad):
    return lax.conv_general_dilated(
        x, w, (stride, stride), padding=list(pad),
        dimension_numbers=('NCHW', 'OIHW', 'NCHW'))


def _bn_ref(x, bn):
    s = bn['gamma'] / jnp.sqrt(bn['var'] + EPS)
    t = bn['beta'] - bn['mean'] * s
    return x * s[None, :, None, None] + t[None, :, None, None]


def _acblock_ref(x, p, stride):
    sq = _bn_ref(_conv2d_ref(x, p['sq_w'], stride, ((1, 1), (1, 1))), p['sq_bn'])
    ver = _bn_ref(_conv2d_ref(x, p['ver_w'], stride, ((1, 1), (0, 0))), p['ver_bn'])
    hor = _bn_ref(_conv2d_ref(x, p['hor_w'], stride, ((0, 0), (1, 1))), p['hor_bn'])
    return sq + ver + hor


def residual_block_ref(x, params, stride):
    y = jax.nn.relu(_bn_ref(_acblock_ref(x, params['acb1'], stride), params['bn1']))
    y = _bn_ref(_acblock_ref(y, params['acb2'], 1), params['bn2'])
    cin, cout = x.shape[1], y.shape[1]
    if stride != 1 or cin != cout:
        sc = _bn_ref(_conv2d_ref(x, params['sc_w'], stride, ((0, 0), (0, 0))),
                     params['sc_bn'])
    else:
        sc = x
    return jax.nn.relu(y + sc)


# ------------------------------ parameter init -------------------------------

def init_params(key, cin, cout):
    keys = iter(jax.random.split(key, 64))

    def conv(co, ci, kh, kw):
        return 0.2 * jax.random.normal(next(keys), (co, ci, kh, kw), jnp.float32)

    def bn(c):
        return dict(
            gamma=1.0 + 0.1 * jax.random.normal(next(keys), (c,), jnp.float32),
            beta=0.1 * jax.random.normal(next(keys), (c,), jnp.float32),
            mean=0.1 * jax.random.normal(next(keys), (c,), jnp.float32),
            var=0.5 + 0.5 * jnp.abs(jax.random.normal(next(keys), (c,), jnp.float32)),
        )

    def acb(ci, co):
        return dict(sq_w=conv(co, ci, 3, 3), sq_bn=bn(co),
                    ver_w=conv(co, ci, 3, 1), ver_bn=bn(co),
                    hor_w=conv(co, ci, 1, 3), hor_bn=bn(co))

    return dict(acb1=acb(cin, cout), bn1=bn(cout),
                acb2=acb(cout, cout), bn2=bn(cout),
                sc_w=conv(cout, cin, 1, 1), sc_bn=bn(cout))


# ------------------------------ main ------------------------------------------

def _check(x, params, stride, name):
    out = jax.block_until_ready(residual_block_forward(x, params, stride))
    ref = residual_block_ref(x, params, stride)
    assert out.shape == ref.shape, (name, out.shape, ref.shape)
    err = float(jnp.max(jnp.abs(out - ref)))
    scale = 1.0 + float(jnp.max(jnp.abs(ref)))
    # bf16 MXU inputs / bf16 output with f32 accumulation -> scale-relative tolerance.
    assert err / scale < 4e-2, f"{name}: mismatch abs={err:.4f} rel={err / scale:.4f}"
    return out


if __name__ == "__main__":
    key = jax.random.PRNGKey(0)
    k1, k2, k3, k4 = jax.random.split(key, 4)

    # Downsampling block: stride 2, channel expansion, projection shortcut.
    N, CIN, COUT, H, W, STRIDE = 2, 4, 8, 16, 16, 2
    x = jax.random.normal(k1, (N, CIN, H, W), jnp.float32)
    params = init_params(k2, CIN, COUT)
    out = _check(x, params, STRIDE, "stride2_proj")
    assert out.shape == (N, COUT, H // STRIDE, W // STRIDE), out.shape

    # Identity-shortcut block: stride 1, same channels.
    x2 = jax.random.normal(k3, (2, 8, 8, 8), jnp.float32)
    params2 = init_params(k4, 8, 8)
    _check(x2, params2, 1, "stride1_identity")

    print("KERNEL_OK")
</pallas_src>

<mosaic_0001>
module attributes {stable_mosaic.version = 11 : i64} {
  func.func @_resblock_kernel(%arg0: i32, %arg1: memref<1x368x128xbf16, #tpu.memory_space<vmem>>, %arg2: memref<1152x128xbf16, #tpu.memory_space<vmem>>, %arg3: memref<1x128xf32, #tpu.memory_space<vmem>>, %arg4: memref<1152x128xbf16, #tpu.memory_space<vmem>>, %arg5: memref<1x128xf32, #tpu.memory_space<vmem>>, %arg6: memref<80x1xf32, #tpu.memory_space<vmem>>, %arg7: memref<128x128xbf16, #tpu.memory_space<vmem>>, %arg8: memref<1x128xf32, #tpu.memory_space<vmem>>, %arg9: memref<1x80x128xbf16, #tpu.memory_space<vmem>>, %arg10: memref<80x128xf32, #tpu.memory_space<vmem>>, %arg11: memref<104x128xbf16, #tpu.memory_space<vmem>>) attributes {dimension_semantics = [#tpu.dimension_semantics<parallel>], iteration_bounds = array<i64: 2>, scalar_prefetch = 0 : i64, scratch_operands = 2 : i64, tpu.core_type = #tpu.core_type<tc>, window_params = [{transform_indices = @transform_0, window_bounds = array<i64: 1, 368, 128>}, {pipeline_mode = #tpu.pipeline_mode<synchronous>, transform_indices = @transform_1, window_bounds = array<i64: 1152, 128>}, {pipeline_mode = #tpu.pipeline_mode<synchronous>, transform_indices = @transform_2, window_bounds = array<i64: 1, 128>}, {pipeline_mode = #tpu.pipeline_mode<synchronous>, transform_indices = @transform_3, window_bounds = array<i64: 1152, 128>}, {pipeline_mode = #tpu.pipeline_mode<synchronous>, transform_indices = @transform_4, window_bounds = array<i64: 1, 128>}, {pipeline_mode = #tpu.pipeline_mode<synchronous>, transform_indices = @transform_5, window_bounds = array<i64: 80, 1>}, {pipeline_mode = #tpu.pipeline_mode<synchronous>, transform_indices = @transform_6, window_bounds = array<i64: 128, 128>}, {pipeline_mode = #tpu.pipeline_mode<synchronous>, transform_indices = @transform_7, window_bounds = array<i64: 1, 128>}, {transform_indices = @transform_8, window_bounds = array<i64: 1, 80, 128>}]} {
    %c0 = arith.constant 0 : index
    %c0_0 = arith.constant 0 : index
    %c0_1 = arith.constant 0 : index
    %0 = vector.load %arg1[%c0, %c0_0, %c0_1] : memref<1x368x128xbf16, #tpu.memory_space<vmem>>, vector<1x80x128xbf16>
    %1 = vector.shape_cast %0 : vector<1x80x128xbf16> to vector<80x128xbf16>
    %c0_2 = arith.constant 0 : index
    %c0_3 = arith.constant 0 : index
    %2 = vector.load %arg2[%c0_2, %c0_3] : memref<1152x128xbf16, #tpu.memory_space<vmem>>, vector<128x128xbf16>
    %cst = arith.constant dense<0.000000e+00> : vector<80x128xf32>
    %3 = tpu.matmul %1, %2, %cst {dimension_numbers = #tpu.dot_dimension_numbers<[1], [0], [0], [1], [0, 0, 1, 1], [], []>} : vector<80x128xbf16>, vector<128x128xbf16>, vector<80x128xf32> -> vector<80x128xf32>
    %c0_4 = arith.constant 0 : index
    %c0_5 = arith.constant 0 : index
    %4 = vector.load %arg10[%c0_4, %c0_5] : memref<80x128xf32, #tpu.memory_space<vmem>>, vector<80x128xf32>
    tpu.vector_store %arg10[%c0_4, %c0_5], %3 {strides = array<i32>} : memref<80x128xf32, #tpu.memory_space<vmem>>, vector<80x128xf32>,
    %c0_6 = arith.constant 0 : index
    %c90 = arith.constant 90 : index
    %c0_7 = arith.constant 0 : index
    %5 = vector.load %arg1[%c0_6, %c90, %c0_7] : memref<1x368x128xbf16, #tpu.memory_space<vmem>>, vector<1x80x128xbf16>
    %6 = vector.shape_cast %5 : vector<1x80x128xbf16> to vector<80x128xbf16>
    %c128 = arith.constant 128 : index
    %c0_8 = arith.constant 0 : index
    %7 = vector.load %arg2[%c128, %c0_8] : memref<1152x128xbf16, #tpu.memory_space<vmem>>, vector<128x128xbf16>
    %cst_9 = arith.constant dense<0.000000e+00> : vector<80x128xf32>
    %8 = tpu.matmul %6, %7, %cst_9 {dimension_numbers = #tpu.dot_dimension_numbers<[1], [0], [0], [1], [0, 0, 1, 1], [], []>} : vector<80x128xbf16>, vector<128x128xbf16>, vector<80x128xf32> -> vector<80x128xf32>
    %c0_10 = arith.constant 0 : index
    %c0_11 = arith.constant 0 : index
    %9 = vector.load %arg10[%c0_10, %c0_11] : memref<80x128xf32, #tpu.memory_space<vmem>>, vector<80x128xf32>
    %10 = arith.addf %9, %8 : vector<80x128xf32>
    %c0_12 = arith.constant 0 : index
    %c0_13 = arith.constant 0 : index
    %11 = vector.load %arg10[%c0_12, %c0_13] : memref<80x128xf32, #tpu.memory_space<vmem>>, vector<80x128xf32>
    tpu.vector_store %arg10[%c0_12, %c0_13], %10 {strides = array<i32>} : memref<80x128xf32, #tpu.memory_space<vmem>>, vector<80x128xf32>,
    %c0_14 = arith.constant 0 : index
    %c1 = arith.constant 1 : index
    %c0_15 = arith.constant 0 : index
    %12 = vector.load %arg1[%c0_14, %c1, %c0_15] : memref<1x368x128xbf16, #tpu.memory_space<vmem>>, vector<1x80x128xbf16>
    %13 = vector.shape_cast %12 : vector<1x80x128xbf16> to vector<80x128xbf16>
    %c256 = arith.constant 256 : index
    %c0_16 = arith.constant 0 : index
    %14 = vector.load %arg2[%c256, %c0_16] : memref<1152x128xbf16, #tpu.memory_space<vmem>>, vector<128x128xbf16>
    %cst_17 = arith.constant dense<0.000000e+00> : vector<80x128xf32>
    %15 = tpu.matmul %13, %14, %cst_17 {dimension_numbers = #tpu.dot_dimension_numbers<[1], [0], [0], [1], [0, 0, 1, 1], [], []>} : vector<80x128xbf16>, vector<128x128xbf16>, vector<80x128xf32> -> vector<80x128xf32>
    %c0_18 = arith.constant 0 : index
    %c0_19 = arith.constant 0 : index
    %16 = vector.load %arg10[%c0_18, %c0_19] : memref<80x128xf32, #tpu.memory_space<vmem>>, vector<80x128xf32>
    %17 = arith.addf %16, %15 : vector<80x128xf32>
    %c0_20 = arith.constant 0 : index
    %c0_21 = arith.constant 0 : index
    %18 = vector.load %arg10[%c0_20, %c0_21] : memref<80x128xf32, #tpu.memory_space<vmem>>, vector<80x128xf32>
    tpu.vector_store %arg10[%c0_20, %c0_21], %17 {strides = array<i32>} : memref<80x128xf32, #tpu.memory_space<vmem>>, vector<80x128xf32>,
    %c0_22 = arith.constant 0 : index
    %c180 = arith.constant 180 : index
    %c0_23 = arith.constant 0 : index
    %19 = vector.load %arg1[%c0_22, %c180, %c0_23] : memref<1x368x128xbf16, #tpu.memory_space<vmem>>, vector<1x80x128xbf16>
    %20 = vector.shape_cast %19 : vector<1x80x128xbf16> to vector<80x128xbf16>
    %c384 = arith.constant 384 : index
    %c0_24 = arith.constant 0 : index
    %21 = vector.load %arg2[%c384, %c0_24] : memref<1152x128xbf16, #tpu.memory_space<vmem>>, vector<128x128xbf16>
    %cst_25 = arith.constant dense<0.000000e+00> : vector<80x128xf32>
    %22 = tpu.matmul %20, %21, %cst_25 {dimension_numbers = #tpu.dot_dimension_numbers<[1], [0], [0], [1], [0, 0, 1, 1], [], []>} : vector<80x128xbf16>, vector<128x128xbf16>, vector<80x128xf32> -> vector<80x128xf32>
    %c0_26 = arith.constant 0 : index
    %c0_27 = arith.constant 0 : index
    %23 = vector.load %arg10[%c0_26, %c0_27] : memref<80x128xf32, #tpu.memory_space<vmem>>, vector<80x128xf32>
    %24 = arith.addf %23, %22 : vector<80x128xf32>
    %c0_28 = arith.constant 0 : index
    %c0_29 = arith.constant 0 : index
    %25 = vector.load %arg10[%c0_28, %c0_29] : memref<80x128xf32, #tpu.memory_space<vmem>>, vector<80x128xf32>
    tpu.vector_store %arg10[%c0_28, %c0_29], %24 {strides = array<i32>} : memref<80x128xf32, #tpu.memory_space<vmem>>, vector<80x128xf32>,
    %c0_30 = arith.constant 0 : index
    %c270 = arith.constant 270 : index
    %c0_31 = arith.constant 0 : index
    %26 = vector.load %arg1[%c0_30, %c270, %c0_31] : memref<1x368x128xbf16, #tpu.memory_space<vmem>>, vector<1x80x128xbf16>
    %27 = vector.shape_cast %26 : vector<1x80x128xbf16> to vector<80x128xbf16>
    %c512 = arith.constant 512 : index
    %c0_32 = arith.constant 0 : index
    %28 = vector.load %arg2[%c512, %c0_32] : memref<1152x128xbf16, #tpu.memory_space<vmem>>, vector<128x128xbf16>
    %cst_33 = arith.constant dense<0.000000e+00> : vector<80x128xf32>
    %29 = tpu.matmul %27, %28, %cst_33 {dimension_numbers = #tpu.dot_dimension_numbers<[1], [0], [0], [1], [0, 0, 1, 1], [], []>} : vector<80x128xbf16>, vector<128x128xbf16>, vector<80x128xf32> -> vector<80x128xf32>
    %c0_34 = arith.constant 0 : index
    %c0_35 = arith.constant 0 : index
    %30 = vector.load %arg10[%c0_34, %c0_35] : memref<80x128xf32, #tpu.memory_space<vmem>>, vector<80x128xf32>
    %31 = arith.addf %30, %29 : vector<80x128xf32>
    %c0_36 = arith.constant 0 : index
    %c0_37 = arith.constant 0 : index
    %32 = vector.load %arg10[%c0_36, %c0_37] : memref<80x128xf32, #tpu.memory_space<vmem>>, vector<80x128xf32>
    tpu.vector_store %arg10[%c0_36, %c0_37], %31 {strides = array<i32>} : memref<80x128xf32, #tpu.memory_space<vmem>>, vector<80x128xf32>,
    %c0_38 = arith.constant 0 : index
    %c181 = arith.constant 181 : index
    %c0_39 = arith.constant 0 : index
    %33 = vector.load %arg1[%c0_38, %c181, %c0_39] : memref<1x368x128xbf16, #tpu.memory_space<vmem>>, vector<1x80x128xbf16>
    %34 = vector.shape_cast %33 : vector<1x80x128xbf16> to vector<80x128xbf16>
    %c640 = arith.constant 640 : index
    %c0_40 = arith.constant 0 : index
    %35 = vector.load %arg2[%c640, %c0_40] : memref<1152x128xbf16, #tpu.memory_space<vmem>>, vector<128x128xbf16>
    %cst_41 = arith.constant dense<0.000000e+00> : vector<80x128xf32>
    %36 = tpu.matmul %34, %35, %cst_41 {dimension_numbers = #tpu.dot_dimension_numbers<[1], [0], [0], [1], [0, 0, 1, 1], [], []>} : vector<80x128xbf16>, vector<128x128xbf16>, vector<80x128xf32> -> vector<80x128xf32>
    %c0_42 = arith.constant 0 : index
    %c0_43 = arith.constant 0 : index
    %37 = vector.load %arg10[%c0_42, %c0_43] : memref<80x128xf32, #tpu.memory_space<vmem>>, vector<80x128xf32>
    %38 = arith.addf %37, %36 : vector<80x128xf32>
    %c0_44 = arith.constant 0 : index
    %c0_45 = arith.constant 0 : index
    %39 = vector.load %arg10[%c0_44, %c0_45] : memref<80x128xf32, #tpu.memory_space<vmem>>, vector<80x128xf32>
    tpu.vector_store %arg10[%c0_44, %c0_45], %38 {strides = array<i32>} : memref<80x128xf32, #tpu.memory_space<vmem>>, vector<80x128xf32>,
    %c0_46 = arith.constant 0 : index
    %c10 = arith.constant 10 : index
    %c0_47 = arith.constant 0 : index
    %40 = vector.load %arg1[%c0_46, %c10, %c0_47] : memref<1x368x128xbf16, #tpu.memory_space<vmem>>, vector<1x80x128xbf16>
    %41 = vector.shape_cast %40 : vector<1x80x128xbf16> to vector<80x128xbf16>
    %c768 = arith.constant 768 : index
    %c0_48 = arith.constant 0 : index
    %42 = vector.load %arg2[%c768, %c0_48] : memref<1152x128xbf16, #tpu.memory_space<vmem>>, vector<128x128xbf16>
    %cst_49 = arith.constant dense<0.000000e+00> : vector<80x128xf32>
    %43 = tpu.matmul %41, %42, %cst_49 {dimension_numbers = #tpu.dot_dimension_numbers<[1], [0], [0], [1], [0, 0, 1, 1], [], []>} : vector<80x128xbf16>, vector<128x128xbf16>, vector<80x128xf32> -> vector<80x128xf32>
    %c0_50 = arith.constant 0 : index
    %c0_51 = arith.constant 0 : index
    %44 = vector.load %arg10[%c0_50, %c0_51] : memref<80x128xf32, #tpu.memory_space<vmem>>, vector<80x128xf32>
    %45 = arith.addf %44, %43 : vector<80x128xf32>
    %c0_52 = arith.constant 0 : index
    %c0_53 = arith.constant 0 : index
    %46 = vector.load %arg10[%c0_52, %c0_53] : memref<80x128xf32, #tpu.memory_space<vmem>>, vector<80x128xf32>
    tpu.vector_store %arg10[%c0_52, %c0_53], %45 {strides = array<i32>} : memref<80x128xf32, #tpu.memory_space<vmem>>, vector<80x128xf32>,
    %c0_54 = arith.constant 0 : index
    %c100 = arith.constant 100 : index
    %c0_55 = arith.constant 0 : index
    %47 = vector.load %arg1[%c0_54, %c100, %c0_55] : memref<1x368x128xbf16, #tpu.memory_space<vmem>>, vector<1x80x128xbf16>
    %48 = vector.shape_cast %47 : vector<1x80x128xbf16> to vector<80x128xbf16>
    %c896 = arith.constant 896 : index
    %c0_56 = arith.constant 0 : index
    %49 = vector.load %arg2[%c896, %c0_56] : memref<1152x128xbf16, #tpu.memory_space<vmem>>, vector<128x128xbf16>
    %cst_57 = arith.constant dense<0.000000e+00> : vector<80x128xf32>
    %50 = tpu.matmul %48, %49, %cst_57 {dimension_numbers = #tpu.dot_dimension_numbers<[1], [0], [0], [1], [0, 0, 1, 1], [], []>} : vector<80x128xbf16>, vector<128x128xbf16>, vector<80x128xf32> -> vector<80x128xf32>
    %c0_58 = arith.constant 0 : index
    %c0_59 = arith.constant 0 : index
    %51 = vector.load %arg10[%c0_58, %c0_59] : memref<80x128xf32, #tpu.memory_space<vmem>>, vector<80x128xf32>
    %52 = arith.addf %51, %50 : vector<80x128xf32>
    %c0_60 = arith.constant 0 : index
    %c0_61 = arith.constant 0 : index
    %53 = vector.load %arg10[%c0_60, %c0_61] : memref<80x128xf32, #tpu.memory_space<vmem>>, vector<80x128xf32>
    tpu.vector_store %arg10[%c0_60, %c0_61], %52 {strides = array<i32>} : memref<80x128xf32, #tpu.memory_space<vmem>>, vector<80x128xf32>,
    %c0_62 = arith.constant 0 : index
    %c11 = arith.constant 11 : index
    %c0_63 = arith.constant 0 : index
    %54 = vector.load %arg1[%c0_62, %c11, %c0_63] : memref<1x368x128xbf16, #tpu.memory_space<vmem>>, vector<1x80x128xbf16>
    %55 = vector.shape_cast %54 : vector<1x80x128xbf16> to vector<80x128xbf16>
    %c1024 = arith.constant 1024 : index
    %c0_64 = arith.constant 0 : index
    %56 = vector.load %arg2[%c1024, %c0_64] : memref<1152x128xbf16, #tpu.memory_space<vmem>>, vector<128x128xbf16>
    %cst_65 = arith.constant dense<0.000000e+00> : vector<80x128xf32>
    %57 = tpu.matmul %55, %56, %cst_65 {dimension_numbers = #tpu.dot_dimension_numbers<[1], [0], [0], [1], [0, 0, 1, 1], [], []>} : vector<80x128xbf16>, vector<128x128xbf16>, vector<80x128xf32> -> vector<80x128xf32>
    %c0_66 = arith.constant 0 : index
    %c0_67 = arith.constant 0 : index
    %58 = vector.load %arg10[%c0_66, %c0_67] : memref<80x128xf32, #tpu.memory_space<vmem>>, vector<80x128xf32>
    %59 = arith.addf %58, %57 : vector<80x128xf32>
    %c0_68 = arith.constant 0 : index
    %c0_69 = arith.constant 0 : index
    %60 = vector.load %arg10[%c0_68, %c0_69] : memref<80x128xf32, #tpu.memory_space<vmem>>, vector<80x128xf32>
    tpu.vector_store %arg10[%c0_68, %c0_69], %59 {strides = array<i32>} : memref<80x128xf32, #tpu.memory_space<vmem>>, vector<80x128xf32>,
    %c0_70 = arith.constant 0 : index
    %c0_71 = arith.constant 0 : index
    %61 = vector.load %arg10[%c0_70, %c0_71] : memref<80x128xf32, #tpu.memory_space<vmem>>, vector<80x128xf32>
    %c0_72 = arith.constant 0 : index
    %c0_73 = arith.constant 0 : index
    %62 = vector.load %arg3[%c0_72, %c0_73] : memref<1x128xf32, #tpu.memory_space<vmem>>, vector<1x128xf32>
    %63 = vector.broadcast %62 : vector<1x128xf32> to vector<80x128xf32>
    %64 = arith.addf %61, %63 : vector<80x128xf32>
    %cst_74 = arith.constant 0.000000e+00 : f32
    %65 = vector.broadcast %cst_74 : f32 to vector<80x128xf32>
    %66 = arith.maximumf %64, %65 : vector<80x128xf32>
    %c0_75 = arith.constant 0 : index
    %c0_76 = arith.constant 0 : index
    %67 = vector.load %arg6[%c0_75, %c0_76] : memref<80x1xf32, #tpu.memory_space<vmem>>, vector<80x1xf32>
    %68 = vector.broadcast %67 : vector<80x1xf32> to vector<80x128xf32>
    %69 = arith.mulf %66, %68 : vector<80x128xf32>
    %70 = arith.truncf %69 : vector<80x128xf32> to vector<80x128xbf16>
    %cst_77 = arith.constant 0.000000e+00 : bf16
    %71 = vector.broadcast %cst_77 : bf16 to vector<11x128xbf16>
    %c0_78 = arith.constant 0 : index
    %c0_79 = arith.constant 0 : index
    %72 = vector.load %arg11[%c0_78, %c0_79] : memref<104x128xbf16, #tpu.memory_space<vmem>>, vector<11x128xbf16>
    tpu.vector_store %arg11[%c0_78, %c0_79], %71 {strides = array<i32>} : memref<104x128xbf16, #tpu.memory_space<vmem>>, vector<11x128xbf16>,
    %cst_80 = arith.constant 0.000000e+00 : bf16
    %73 = vector.broadcast %cst_80 : bf16 to vector<13x128xbf16>
    %c91 = arith.constant 91 : index
    %c0_81 = arith.constant 0 : index
    %74 = vector.load %arg11[%c91, %c0_81] : memref<104x128xbf16, #tpu.memory_space<vmem>>, vector<13x128xbf16>
    tpu.vector_store %arg11[%c91, %c0_81], %73 {strides = array<i32>} : memref<104x128xbf16, #tpu.memory_space<vmem>>, vector<13x128xbf16>,
    %c11_82 = arith.constant 11 : index
    %c0_83 = arith.constant 0 : index
    %75 = vector.load %arg11[%c11_82, %c0_83] : memref<104x128xbf16, #tpu.memory_space<vmem>>, vector<80x128xbf16>
    tpu.vector_store %arg11[%c11_82, %c0_83], %70 {strides = array<i32>} : memref<104x128xbf16, #tpu.memory_space<vmem>>, vector<80x128xbf16>,
    %c0_84 = arith.constant 0 : index
    %c270_85 = arith.constant 270 : index
    %c0_86 = arith.constant 0 : index
    %76 = vector.load %arg1[%c0_84, %c270_85, %c0_86] : memref<1x368x128xbf16, #tpu.memory_space<vmem>>, vector<1x80x128xbf16>
    %77 = vector.shape_cast %76 : vector<1x80x128xbf16> to vector<80x128xbf16>
    %c0_87 = arith.constant 0 : index
    %c0_88 = arith.constant 0 : index
    %78 = vector.load %arg7[%c0_87, %c0_88] : memref<128x128xbf16, #tpu.memory_space<vmem>>, vector<128x128xbf16>
    %cst_89 = arith.constant dense<0.000000e+00> : vector<80x128xf32>
    %79 = tpu.matmul %77, %78, %cst_89 {dimension_numbers = #tpu.dot_dimension_numbers<[1], [0], [0], [1], [0, 0, 1, 1], [], []>} : vector<80x128xbf16>, vector<128x128xbf16>, vector<80x128xf32> -> vector<80x128xf32>
    %c0_90 = arith.constant 0 : index
    %c0_91 = arith.constant 0 : index
    %80 = vector.load %arg8[%c0_90, %c0_91] : memref<1x128xf32, #tpu.memory_space<vmem>>, vector<1x128xf32>
    %81 = vector.broadcast %80 : vector<1x128xf32> to vector<80x128xf32>
    %82 = arith.addf %79, %81 : vector<80x128xf32>
    %c0_92 = arith.constant 0 : index
    %c0_93 = arith.constant 0 : index
    %83 = vector.load %arg10[%c0_92, %c0_93] : memref<80x128xf32, #tpu.memory_space<vmem>>, vector<80x128xf32>
    tpu.vector_store %arg10[%c0_92, %c0_93], %82 {strides = array<i32>} : memref<80x128xf32, #tpu.memory_space<vmem>>, vector<80x128xf32>,
    %c0_94 = arith.constant 0 : index
    %c0_95 = arith.constant 0 : index
    %84 = vector.load %arg11[%c0_94, %c0_95] : memref<104x128xbf16, #tpu.memory_space<vmem>>, vector<80x128xbf16>
    %c0_96 = arith.constant 0 : index
    %c0_97 = arith.constant 0 : index
    %85 = vector.load %arg4[%c0_96, %c0_97] : memref<1152x128xbf16, #tpu.memory_space<vmem>>, vector<128x128xbf16>
    %c0_98 = arith.constant 0 : index
    %c0_99 = arith.constant 0 : index
    %86 = vector.load %arg10[%c0_98, %c0_99] : memref<80x128xf32, #tpu.memory_space<vmem>>, vector<80x128xf32>
    %cst_100 = arith.constant dense<0.000000e+00> : vector<80x128xf32>
    %87 = tpu.matmul %84, %85, %cst_100 {dimension_numbers = #tpu.dot_dimension_numbers<[1], [0], [0], [1], [0, 0, 1, 1], [], []>} : vector<80x128xbf16>, vector<128x128xbf16>, vector<80x128xf32> -> vector<80x128xf32>
    %88 = arith.addf %86, %87 : vector<80x128xf32>
    %c0_101 = arith.constant 0 : index
    %c0_102 = arith.constant 0 : index
    %89 = vector.load %arg10[%c0_101, %c0_102] : memref<80x128xf32, #tpu.memory_space<vmem>>, vector<80x128xf32>
    tpu.vector_store %arg10[%c0_101, %c0_102], %88 {strides = array<i32>} : memref<80x128xf32, #tpu.memory_space<vmem>>, vector<80x128xf32>,
    %c1_103 = arith.constant 1 : index
    %c0_104 = arith.constant 0 : index
    %90 = vector.load %arg11[%c1_103, %c0_104] : memref<104x128xbf16, #tpu.memory_space<vmem>>, vector<80x128xbf16>
    %c128_105 = arith.constant 128 : index
    %c0_106 = arith.constant 0 : index
    %91 = vector.load %arg4[%c128_105, %c0_106] : memref<1152x128xbf16, #tpu.memory_space<vmem>>, vector<128x128xbf16>
    %c0_107 = arith.constant 0 : index
    %c0_108 = arith.constant 0 : index
    %92 = vector.load %arg10[%c0_107, %c0_108] : memref<80x128xf32, #tpu.memory_space<vmem>>, vector<80x128xf32>
    %cst_109 = arith.constant dense<0.000000e+00> : vector<80x128xf32>
    %93 = tpu.matmul %90, %91, %cst_109 {dimension_numbers = #tpu.dot_dimension_numbers<[1], [0], [0], [1], [0, 0, 1, 1], [], []>} : vector<80x128xbf16>, vector<128x128xbf16>, vector<80x128xf32> -> vector<80x128xf32>
    %94 = arith.addf %92, %93 : vector<80x128xf32>
    %c0_110 = arith.constant 0 : index
    %c0_111 = arith.constant 0 : index
    %95 = vector.load %arg10[%c0_110, %c0_111] : memref<80x128xf32, #tpu.memory_space<vmem>>, vector<80x128xf32>
    tpu.vector_store %arg10[%c0_110, %c0_111], %94 {strides = array<i32>} : memref<80x128xf32, #tpu.memory_space<vmem>>, vector<80x128xf32>,
    %c2 = arith.constant 2 : index
    %c0_112 = arith.constant 0 : index
    %96 = vector.load %arg11[%c2, %c0_112] : memref<104x128xbf16, #tpu.memory_space<vmem>>, vector<80x128xbf16>
    %c256_113 = arith.constant 256 : index
    %c0_114 = arith.constant 0 : index
    %97 = vector.load %arg4[%c256_113, %c0_114] : memref<1152x128xbf16, #tpu.memory_space<vmem>>, vector<128x128xbf16>
    %c0_115 = arith.constant 0 : index
    %c0_116 = arith.constant 0 : index
    %98 = vector.load %arg10[%c0_115, %c0_116] : memref<80x128xf32, #tpu.memory_space<vmem>>, vector<80x128xf32>
    %cst_117 = arith.constant dense<0.000000e+00> : vector<80x128xf32>
    %99 = tpu.matmul %96, %97, %cst_117 {dimension_numbers = #tpu.dot_dimension_numbers<[1], [0], [0], [1], [0, 0, 1, 1], [], []>} : vector<80x128xbf16>, vector<128x128xbf16>, vector<80x128xf32> -> vector<80x128xf32>
    %100 = arith.addf %98, %99 : vector<80x128xf32>
    %c0_118 = arith.constant 0 : index
    %c0_119 = arith.constant 0 : index
    %101 = vector.load %arg10[%c0_118, %c0_119] : memref<80x128xf32, #tpu.memory_space<vmem>>, vector<80x128xf32>
    tpu.vector_store %arg10[%c0_118, %c0_119], %100 {strides = array<i32>} : memref<80x128xf32, #tpu.memory_space<vmem>>, vector<80x128xf32>,
    %c10_120 = arith.constant 10 : index
    %c0_121 = arith.constant 0 : index
    %102 = vector.load %arg11[%c10_120, %c0_121] : memref<104x128xbf16, #tpu.memory_space<vmem>>, vector<80x128xbf16>
    %c384_122 = arith.constant 384 : index
    %c0_123 = arith.constant 0 : index
    %103 = vector.load %arg4[%c384_122, %c0_123] : memref<1152x128xbf16, #tpu.memory_space<vmem>>, vector<128x128xbf16>
    %c0_124 = arith.constant 0 : index
    %c0_125 = arith.constant 0 : index
    %104 = vector.load %arg10[%c0_124, %c0_125] : memref<80x128xf32, #tpu.memory_space<vmem>>, vector<80x128xf32>
    %cst_126 = arith.constant dense<0.000000e+00> : vector<80x128xf32>
    %105 = tpu.matmul %102, %103, %cst_126 {dimension_numbers = #tpu.dot_dimension_numbers<[1], [0], [0], [1], [0, 0, 1, 1], [], []>} : vector<80x128xbf16>, vector<128x128xbf16>, vector<80x128xf32> -> vector<80x128xf32>
    %106 = arith.addf %104, %105 : vector<80x128xf32>
    %c0_127 = arith.constant 0 : index
    %c0_128 = arith.constant 0 : index
    %107 = vector.load %arg10[%c0_127, %c0_128] : memref<80x128xf32, #tpu.memory_space<vmem>>, vector<80x128xf32>
    tpu.vector_store %arg10[%c0_127, %c0_128], %106 {strides = array<i32>} : memref<80x128xf32, #tpu.memory_space<vmem>>, vector<80x128xf32>,
    %c11_129 = arith.constant 11 : index
    %c0_130 = arith.constant 0 : index
    %108 = vector.load %arg11[%c11_129, %c0_130] : memref<104x128xbf16, #tpu.memory_space<vmem>>, vector<80x128xbf16>
    %c512_131 = arith.constant 512 : index
    %c0_132 = arith.constant 0 : index
    %109 = vector.load %arg4[%c512_131, %c0_132] : memref<1152x128xbf16, #tpu.memory_space<vmem>>, vector<128x128xbf16>
    %c0_133 = arith.constant 0 : index
    %c0_134 = arith.constant 0 : index
    %110 = vector.load %arg10[%c0_133, %c0_134] : memref<80x128xf32, #tpu.memory_space<vmem>>, vector<80x128xf32>
    %cst_135 = arith.constant dense<0.000000e+00> : vector<80x128xf32>
    %111 = tpu.matmul %108, %109, %cst_135 {dimension_numbers = #tpu.dot_dimension_numbers<[1], [0], [0], [1], [0, 0, 1, 1], [], []>} : vector<80x128xbf16>, vector<128x128xbf16>, vector<80x128xf32> -> vector<80x128xf32>
    %112 = arith.addf %110, %111 : vector<80x128xf32>
    %c0_136 = arith.constant 0 : index
    %c0_137 = arith.constant 0 : index
    %113 = vector.load %arg10[%c0_136, %c0_137] : memref<80x128xf32, #tpu.memory_space<vmem>>, vector<80x128xf32>
    tpu.vector_store %arg10[%c0_136, %c0_137], %112 {strides = array<i32>} : memref<80x128xf32, #tpu.memory_space<vmem>>, vector<80x128xf32>,
    %c12 = arith.constant 12 : index
    %c0_138 = arith.constant 0 : index
    %114 = vector.load %arg11[%c12, %c0_138] : memref<104x128xbf16, #tpu.memory_space<vmem>>, vector<80x128xbf16>
    %c640_139 = arith.constant 640 : index
    %c0_140 = arith.constant 0 : index
    %115 = vector.load %arg4[%c640_139, %c0_140] : memref<1152x128xbf16, #tpu.memory_space<vmem>>, vector<128x128xbf16>
    %c0_141 = arith.constant 0 : index
    %c0_142 = arith.constant 0 : index
    %116 = vector.load %arg10[%c0_141, %c0_142] : memref<80x128xf32, #tpu.memory_space<vmem>>, vector<80x128xf32>
    %cst_143 = arith.constant dense<0.000000e+00> : vector<80x128xf32>
    %117 = tpu.matmul %114, %115, %cst_143 {dimension_numbers = #tpu.dot_dimension_numbers<[1], [0], [0], [1], [0, 0, 1, 1], [], []>} : vector<80x128xbf16>, vector<128x128xbf16>, vector<80x128xf32> -> vector<80x128xf32>
    %118 = arith.addf %116, %117 : vector<80x128xf32>
    %c0_144 = arith.constant 0 : index
    %c0_145 = arith.constant 0 : index
    %119 = vector.load %arg10[%c0_144, %c0_145] : memref<80x128xf32, #tpu.memory_space<vmem>>, vector<80x128xf32>
    tpu.vector_store %arg10[%c0_144, %c0_145], %118 {strides = array<i32>} : memref<80x128xf32, #tpu.memory_space<vmem>>, vector<80x128xf32>,
    %c20 = arith.constant 20 : index
    %c0_146 = arith.constant 0 : index
    %120 = vector.load %arg11[%c20, %c0_146] : memref<104x128xbf16, #tpu.memory_space<vmem>>, vector<80x128xbf16>
    %c768_147 = arith.constant 768 : index
    %c0_148 = arith.constant 0 : index
    %121 = vector.load %arg4[%c768_147, %c0_148] : memref<1152x128xbf16, #tpu.memory_space<vmem>>, vector<128x128xbf16>
    %c0_149 = arith.constant 0 : index
    %c0_150 = arith.constant 0 : index
    %122 = vector.load %arg10[%c0_149, %c0_150] : memref<80x128xf32, #tpu.memory_space<vmem>>, vector<80x128xf32>
    %cst_151 = arith.constant dense<0.000000e+00> : vector<80x128xf32>
    %123 = tpu.matmul %120, %121, %cst_151 {dimension_numbers = #tpu.dot_dimension_numbers<[1], [0], [0], [1], [0, 0, 1, 1], [], []>} : vector<80x128xbf16>, vector<128x128xbf16>, vector<80x128xf32> -> vector<80x128xf32>
    %124 = arith.addf %122, %123 : vector<80x128xf32>
    %c0_152 = arith.constant 0 : index
    %c0_153 = arith.constant 0 : index
    %125 = vector.load %arg10[%c0_152, %c0_153] : memref<80x128xf32, #tpu.memory_space<vmem>>, vector<80x128xf32>
    tpu.vector_store %arg10[%c0_152, %c0_153], %124 {strides = array<i32>} : memref<80x128xf32, #tpu.memory_space<vmem>>, vector<80x128xf32>,
    %c21 = arith.constant 21 : index
    %c0_154 = arith.constant 0 : index
    %126 = vector.load %arg11[%c21, %c0_154] : memref<104x128xbf16, #tpu.memory_space<vmem>>, vector<80x128xbf16>
    %c896_155 = arith.constant 896 : index
    %c0_156 = arith.constant 0 : index
    %127 = vector.load %arg4[%c896_155, %c0_156] : memref<1152x128xbf16, #tpu.memory_space<vmem>>, vector<128x128xbf16>
    %c0_157 = arith.constant 0 : index
    %c0_158 = arith.constant 0 : index
    %128 = vector.load %arg10[%c0_157, %c0_158] : memref<80x128xf32, #tpu.memory_space<vmem>>, vector<80x128xf32>
    %cst_159 = arith.constant dense<0.000000e+00> : vector<80x128xf32>
    %129 = tpu.matmul %126, %127, %cst_159 {dimension_numbers = #tpu.dot_dimension_numbers<[1], [0], [0], [1], [0, 0, 1, 1], [], []>} : vector<80x128xbf16>, vector<128x128xbf16>, vector<80x128xf32> -> vector<80x128xf32>
    %130 = arith.addf %128, %129 : vector<80x128xf32>
    %c0_160 = arith.constant 0 : index
    %c0_161 = arith.constant 0 : index
    %131 = vector.load %arg10[%c0_160, %c0_161] : memref<80x128xf32, #tpu.memory_space<vmem>>, vector<80x128xf32>
    tpu.vector_store %arg10[%c0_160, %c0_161], %130 {strides = array<i32>} : memref<80x128xf32, #tpu.memory_space<vmem>>, vector<80x128xf32>,
    %c22 = arith.constant 22 : index
    %c0_162 = arith.constant 0 : index
    %132 = vector.load %arg11[%c22, %c0_162] : memref<104x128xbf16, #tpu.memory_space<vmem>>, vector<80x128xbf16>
    %c1024_163 = arith.constant 1024 : index
    %c0_164 = arith.constant 0 : index
    %133 = vector.load %arg4[%c1024_163, %c0_164] : memref<1152x128xbf16, #tpu.memory_space<vmem>>, vector<128x128xbf16>
    %c0_165 = arith.constant 0 : index
    %c0_166 = arith.constant 0 : index
    %134 = vector.load %arg10[%c0_165, %c0_166] : memref<80x128xf32, #tpu.memory_space<vmem>>, vector<80x128xf32>
    %cst_167 = arith.constant dense<0.000000e+00> : vector<80x128xf32>
    %135 = tpu.matmul %132, %133, %cst_167 {dimension_numbers = #tpu.dot_dimension_numbers<[1], [0], [0], [1], [0, 0, 1, 1], [], []>} : vector<80x128xbf16>, vector<128x128xbf16>, vector<80x128xf32> -> vector<80x128xf32>
    %136 = arith.addf %134, %135 : vector<80x128xf32>
    %c0_168 = arith.constant 0 : index
    %c0_169 = arith.constant 0 : index
    %137 = vector.load %arg10[%c0_168, %c0_169] : memref<80x128xf32, #tpu.memory_space<vmem>>, vector<80x128xf32>
    tpu.vector_store %arg10[%c0_168, %c0_169], %136 {strides = array<i32>} : memref<80x128xf32, #tpu.memory_space<vmem>>, vector<80x128xf32>,
    %c0_170 = arith.constant 0 : index
    %c0_171 = arith.constant 0 : index
    %138 = vector.load %arg10[%c0_170, %c0_171] : memref<80x128xf32, #tpu.memory_space<vmem>>, vector<80x128xf32>
    %c0_172 = arith.constant 0 : index
    %c0_173 = arith.constant 0 : index
    %139 = vector.load %arg5[%c0_172, %c0_173] : memref<1x128xf32, #tpu.memory_space<vmem>>, vector<1x128xf32>
    %140 = vector.broadcast %139 : vector<1x128xf32> to vector<80x128xf32>
    %141 = arith.addf %138, %140 : vector<80x128xf32>
    %cst_174 = arith.constant 0.000000e+00 : f32
    %142 = vector.broadcast %cst_174 : f32 to vector<80x128xf32>
    %143 = arith.maximumf %141, %142 : vector<80x128xf32>
    %144 = arith.truncf %143 : vector<80x128xf32> to vector<80x128xbf16>
    %c0_175 = arith.constant 0 : index
    %c0_176 = arith.constant 0 : index
    %c0_177 = arith.constant 0 : index
    %145 = vector.load %arg9[%c0_175, %c0_176, %c0_177] : memref<1x80x128xbf16, #tpu.memory_space<vmem>>, vector<1x80x128xbf16>
    %146 = vector.shape_cast %145 : vector<1x80x128xbf16> to vector<80x128xbf16>
    %147 = vector.shape_cast %144 : vector<80x128xbf16> to vector<1x80x128xbf16>
    tpu.vector_store %arg9[%c0_175, %c0_176, %c0_177], %147 {strides = array<i32>} : memref<1x80x128xbf16, #tpu.memory_space<vmem>>, vector<1x80x128xbf16>,
    return
  }
  func.func @transform_0(%arg0: i32) -> (i32, i32, i32) {
    %c0_i32 = arith.constant 0 : i32
    %c0_i32_0 = arith.constant 0 : i32
    %c0_i32_1 = arith.constant 0 : i32
    return %arg0, %c0_i32, %c0_i32_0 : i32, i32, i32
  }
  func.func @transform_1(%arg0: i32) -> (i32, i32) {
    %c0_i32 = arith.constant 0 : i32
    %c0_i32_0 = arith.constant 0 : i32
    %c0_i32_1 = arith.constant 0 : i32
    return %c0_i32, %c0_i32_0 : i32, i32
  }
  func.func @transform_2(%arg0: i32) -> (i32, i32) {
    %c0_i32 = arith.constant 0 : i32
    %c0_i32_0 = arith.constant 0 : i32
    %c0_i32_1 = arith.constant 0 : i32
    return %c0_i32, %c0_i32_0 : i32, i32
  }
  func.func @transform_3(%arg0: i32) -> (i32, i32) {
    %c0_i32 = arith.constant 0 : i32
    %c0_i32_0 = arith.constant 0 : i32
    %c0_i32_1 = arith.constant 0 : i32
    return %c0_i32, %c0_i32_0 : i32, i32
  }
  func.func @transform_4(%arg0: i32) -> (i32, i32) {
    %c0_i32 = arith.constant 0 : i32
    %c0_i32_0 = arith.constant 0 : i32
    %c0_i32_1 = arith.constant 0 : i32
    return %c0_i32, %c0_i32_0 : i32, i32
  }
  func.func @transform_5(%arg0: i32) -> (i32, i32) {
    %c0_i32 = arith.constant 0 : i32
    %c0_i32_0 = arith.constant 0 : i32
    %c0_i32_1 = arith.constant 0 : i32
    return %c0_i32, %c0_i32_0 : i32, i32
  }
  func.func @transform_6(%arg0: i32) -> (i32, i32) {
    %c0_i32 = arith.constant 0 : i32
    %c0_i32_0 = arith.constant 0 : i32
    %c0_i32_1 = arith.constant 0 : i32
    return %c0_i32, %c0_i32_0 : i32, i32
  }
  func.func @transform_7(%arg0: i32) -> (i32, i32) {
    %c0_i32 = arith.constant 0 : i32
    %c0_i32_0 = arith.constant 0 : i32
    %c0_i32_1 = arith.constant 0 : i32
    return %c0_i32, %c0_i32_0 : i32, i32
  }
  func.func @transform_8(%arg0: i32) -> (i32, i32, i32) {
    %c0_i32 = arith.constant 0 : i32
    %c0_i32_0 = arith.constant 0 : i32
    %c0_i32_1 = arith.constant 0 : i32
    return %arg0, %c0_i32, %c0_i32_0 : i32, i32, i32
  }
}

</mosaic_0001>

<llo_original>
// kernel: tpu_custom_call.1
$region0: #{tpu_custom_call.1}
  #allocation0 [shape = 'u32[]', space=smem, size = 0x4, offset = 0x4, fixed_abs, tag = 'smem constant byte address 0x4 - core index']
  #allocation1 [shape = 'u32[144,128]{1,0:T(1,128)}', space=vmem, size = 0x12000, scoped, tag = 'internal scratch']
  #allocation2 [shape = 'f32[80,128]{1,0:T(8,128)}', space=vmem, size = 0xa000, scoped, tag = 'scratch operand']
  #allocation3 [shape = 'bf16[104,128]{1,0:T(8,128)(2,1)}', space=vmem, size = 0x6800, scoped, tag = 'scratch operand']
  %s0 = inlined_call_operand.hbm [shape: bf16[2,368,128], index: 0, kind: input, shape index: {}]
  %s1 = inlined_call_operand.hbm [shape: bf16[1152,128], index: 1, kind: input, shape index: {}]
  %s2 = inlined_call_operand.vmem [shape: f32[1,128], index: 2, kind: input, shape index: {}]
  %s3 = inlined_call_operand.hbm [shape: bf16[1152,128], index: 3, kind: input, shape index: {}]
  %s4 = inlined_call_operand.vmem [shape: f32[1,128], index: 4, kind: input, shape index: {}]
  %s5 = inlined_call_operand.vmem [shape: f32[80,1], index: 5, kind: input, shape index: {}]
  %s6 = inlined_call_operand.vmem [shape: bf16[128,128], index: 6, kind: input, shape index: {}]
  %s7 = inlined_call_operand.vmem [shape: f32[1,128], index: 7, kind: input, shape index: {}]
  %s8 = inlined_call_operand.hbm [shape: bf16[2,80,128], index: 8, kind: output, shape index: {}]
  %s9 = sld [smem:[#allocation0]]
  $region77: #{tpu_custom_call.1} parent=0
    _
  %s11 = ssub.s32 1, %s9
  %s12 = scalar_select 0, %s11, %s9
  $region1: #{tpu_custom_call.1} parent=0
    #allocation4 [shape = 'u8[188416]{0}', space=vmem, size = 0x2e000, scoped, tag = 'input window, operand 0']
    #allocation5 [shape = 's32[2]{0}', space=sflag, size = 0x8, scoped, tag = 'scoped memory for tpu_custom_call.1']
    #allocation6 [shape = 's32[2]{0}', space=sflag, size = 0x8, scoped, tag = 'scoped memory for tpu_custom_call.1']
    #allocation7 [shape = 'u8[294912]{0}', space=vmem, size = 0x48000, scoped, tag = 'input window, operand 1, single buffered']
    #allocation8 [shape = 's32[1]{0}', space=sflag, size = 0x4, scoped, tag = 'scoped memory for tpu_custom_call.1']
    #allocation9 [shape = 'u8[294912]{0}', space=vmem, size = 0x48000, scoped, tag = 'input window, operand 3, single buffered']
    #allocation10 [shape = 'u8[40960]{0}', space=vmem, size = 0xa000, scoped, tag = 'output window, operand 0']
    %13 = vsyncpa [#allocation5], 0
    %s14 = scalar_lea.sflag [#allocation5], 1
    %15 = vsyncpa %s14, 0
    %16 = vsyncpa [#allocation8], 0
    %17 = vsyncpa [#allocation6], 0
    %s18 = scalar_lea.sflag [#allocation6], 1
    %19 = vsyncpa %s18, 0
    loop: start=0, step=1, limit=4
    $region2: #{tpu_custom_call.1} parent=1 // loop_pre_header
      _
    $region3: #{tpu_custom_call.1} parent=1 // loop_header
      %s21 = sphi 0, %s25
      %p22 = scmp.ge.s32.totalorder %s21, 4
      %s31 = sphi 0, %s33
      %s34 = sphi 0, %s31
      %s35 = sphi 0, %s34
      %s51 = sphi 0, %s35
      %s55 = sphi 0, %s55
      %s57 = sphi 0, %s55
      %s58 = sphi 0, %s57
      %s72 = sphi 0, %s58
      %s76 = sphi 0, %s76
      %s78 = sphi 0, %s76
      %s79 = sphi 0, %s78
      %s93 = sphi 0, %s79
      %s97 = sphi 0, %s97
      %s99 = sphi 0, %s97
      %s100 = sphi 0, %s99
      %s114 = sphi 0, %s100
      %s118 = sphi 0, %s118
      %s120 = sphi 0, %s118
      %s121 = sphi 0, %s120
      %s135 = sphi 0, %s121
      %s139 = sphi 0, %s139
      %s141 = sphi 0, %s139
      %s142 = sphi 0, %s141
      %s156 = sphi 0, %s142
      %s160 = sphi 0, %s160
      %s162 = sphi 0, %s160
      %s163 = sphi 0, %s162
      %s177 = sphi 0, %s163
      %s181 = sphi 0, %s181
      %s183 = sphi 0, %s181
      %s184 = sphi 0, %s183
      %s198 = sphi 0, %s184
      %s204 = sphi 0, %s206
      %s207 = sphi 0, %s204
      %s208 = sphi 0, %s207
      %s224 = sphi 0, %s208
    $region4: #{tpu_custom_call.1} parent=1 // loop_header_branch
      %24 = sbr.rel (%p22) target = $region8
    $region5: #{tpu_custom_call.1} parent=1 // loop_body
      %s26 = ssub.s32 %s21, 1
      %s27 = ssub.s32 %s21, 2
      %s28 = sadd.s32 %s21, 1
      %s29 = ssub.s32 %s21, %s28
      %p30 = scmp.eq.s32.totalorder %s29, 0
      %s32 = sadd.s32 %s31, 1
      %s33 = scalar_select %p30, %s31, %s32
      %p36 = pneg %p30
      %p37 = scmp.eq.s32.totalorder %s21, 1
      %p38 = por %p36, %p37
      %p39 = scmp.ne.s32.totalorder %s31, %s34
      %p40 = scmp.eq.s32.totalorder %s21, 0
      %p41 = por %p39, %p40
      %p42 = scmp.ne.s32.totalorder %s31, %s34
      %p43 = scmp.eq.s32.totalorder %s26, 1
      %p44 = por %p42, %p43
      %p45 = scmp.ne.s32.totalorder %s34, %s35
      %p46 = scmp.eq.s32.totalorder %s26, 0
      %p47 = por %p45, %p46
      %p48 = scmp.ne.s32.totalorder %s34, %s35
      %p49 = scmp.eq.s32.totalorder %s27, 1
      %p50 = por %p48, %p49
      %p52 = scmp.ne.s32.totalorder %s35, %s51
      %p53 = scmp.eq.s32.totalorder %s27, 0
      %p54 = por %p52, %p53
      %s56 = sadd.s32 %s55, 1
      %p59 = scmp.eq.s32.totalorder %s21, 1
      %p60 = scmp.ne.s32.totalorder %s55, %s57
      %p61 = scmp.eq.s32.totalorder %s21, 0
      %p62 = por %p60, %p61
      %p63 = scmp.ne.s32.totalorder %s55, %s57
      %p64 = scmp.eq.s32.totalorder %s26, 1
      %p65 = por %p63, %p64
      %p66 = scmp.ne.s32.totalorder %s57, %s58
      %p67 = scmp.eq.s32.totalorder %s26, 0
      %p68 = por %p66, %p67
      %p69 = scmp.ne.s32.totalorder %s57, %s58
      %p70 = scmp.eq.s32.totalorder %s27, 1
      %p71 = por %p69, %p70
      %p73 = scmp.ne.s32.totalorder %s58, %s72
      %p74 = scmp.eq.s32.totalorder %s27, 0
      %p75 = por %p73, %p74
      %s77 = sadd.s32 %s76, 1
      %p80 = scmp.eq.s32.totalorder %s21, 1
      %p81 = scmp.ne.s32.totalorder %s76, %s78
      %p82 = scmp.eq.s32.totalorder %s21, 0
      %p83 = por %p81, %p82
      %p84 = scmp.ne.s32.totalorder %s76, %s78
      %p85 = scmp.eq.s32.totalorder %s26, 1
      %p86 = por %p84, %p85
      %p87 = scmp.ne.s32.totalorder %s78, %s79
      %p88 = scmp.eq.s32.totalorder %s26, 0
      %p89 = por %p87, %p88
      %p90 = scmp.ne.s32.totalorder %s78, %s79
      %p91 = scmp.eq.s32.totalorder %s27, 1
      %p92 = por %p90, %p91
      %p94 = scmp.ne.s32.totalorder %s79, %s93
      %p95 = scmp.eq.s32.totalorder %s27, 0
      %p96 = por %p94, %p95
      %s98 = sadd.s32 %s97, 1
      %p101 = scmp.eq.s32.totalorder %s21, 1
      %p102 = scmp.ne.s32.totalorder %s97, %s99
      %p103 = scmp.eq.s32.totalorder %s21, 0
      %p104 = por %p102, %p103
      %p105 = scmp.ne.s32.totalorder %s97, %s99
      %p106 = scmp.eq.s32.totalorder %s26, 1
      %p107 = por %p105, %p106
      %p108 = scmp.ne.s32.totalorder %s99, %s100
      %p109 = scmp.eq.s32.totalorder %s26, 0
      %p110 = por %p108, %p109
      %p111 = scmp.ne.s32.totalorder %s99, %s100
      %p112 = scmp.eq.s32.totalorder %s27, 1
      %p113 = por %p111, %p112
      %p115 = scmp.ne.s32.totalorder %s100, %s114
      %p116 = scmp.eq.s32.totalorder %s27, 0
      %p117 = por %p115, %p116
      %s119 = sadd.s32 %s118, 1
      %p122 = scmp.eq.s32.totalorder %s21, 1
      %p123 = scmp.ne.s32.totalorder %s118, %s120
      %p124 = scmp.eq.s32.totalorder %s21, 0
      %p125 = por %p123, %p124
      %p126 = scmp.ne.s32.totalorder %s118, %s120
      %p127 = scmp.eq.s32.totalorder %s26, 1
      %p128 = por %p126, %p127
      %p129 = scmp.ne.s32.totalorder %s120, %s121
      %p130 = scmp.eq.s32.totalorder %s26, 0
      %p131 = por %p129, %p130
      %p132 = scmp.ne.s32.totalorder %s120, %s121
      %p133 = scmp.eq.s32.totalorder %s27, 1
      %p134 = por %p132, %p133
      %p136 = scmp.ne.s32.totalorder %s121, %s135
      %p137 = scmp.eq.s32.totalorder %s27, 0
      %p138 = por %p136, %p137
      %s140 = sadd.s32 %s139, 1
      %p143 = scmp.eq.s32.totalorder %s21, 1
      %p144 = scmp.ne.s32.totalorder %s139, %s141
      %p145 = scmp.eq.s32.totalorder %s21, 0
      %p146 = por %p144, %p145
      %p147 = scmp.ne.s32.totalorder %s139, %s141
      %p148 = scmp.eq.s32.totalorder %s26, 1
      %p149 = por %p147, %p148
      %p150 = scmp.ne.s32.totalorder %s141, %s142
      %p151 = scmp.eq.s32.totalorder %s26, 0
      %p152 = por %p150, %p151
      %p153 = scmp.ne.s32.totalorder %s141, %s142
      %p154 = scmp.eq.s32.totalorder %s27, 1
      %p155 = por %p153, %p154
      %p157 = scmp.ne.s32.totalorder %s142, %s156
      %p158 = scmp.eq.s32.totalorder %s27, 0
      %p159 = por %p157, %p158
      %s161 = sadd.s32 %s160, 1
      %p164 = scmp.eq.s32.totalorder %s21, 1
      %p165 = scmp.ne.s32.totalorder %s160, %s162
      %p166 = scmp.eq.s32.totalorder %s21, 0
      %p167 = por %p165, %p166
      %p168 = scmp.ne.s32.totalorder %s160, %s162
      %p169 = scmp.eq.s32.totalorder %s26, 1
      %p170 = por %p168, %p169
      %p171 = scmp.ne.s32.totalorder %s162, %s163
      %p172 = scmp.eq.s32.totalorder %s26, 0
      %p173 = por %p171, %p172
      %p174 = scmp.ne.s32.totalorder %s162, %s163
      %p175 = scmp.eq.s32.totalorder %s27, 1
      %p176 = por %p174, %p175
      %p178 = scmp.ne.s32.totalorder %s163, %s177
      %p179 = scmp.eq.s32.totalorder %s27, 0
      %p180 = por %p178, %p179
      %s182 = sadd.s32 %s181, 1
      %p185 = scmp.eq.s32.totalorder %s21, 1
      %p186 = scmp.ne.s32.totalorder %s181, %s183
      %p187 = scmp.eq.s32.totalorder %s21, 0
      %p188 = por %p186, %p187
      %p189 = scmp.ne.s32.totalorder %s181, %s183
      %p190 = scmp.eq.s32.totalorder %s26, 1
      %p191 = por %p189, %p190
      %p192 = scmp.ne.s32.totalorder %s183, %s184
      %p193 = scmp.eq.s32.totalorder %s26, 0
      %p194 = por %p192, %p193
      %p195 = scmp.ne.s32.totalorder %s183, %s184
      %p196 = scmp.eq.s32.totalorder %s27, 1
      %p197 = por %p195, %p196
      %p199 = scmp.ne.s32.totalorder %s184, %s198
      %p200 = scmp.eq.s32.totalorder %s27, 0
      %p201 = por %p199, %p200
      %s202 = ssub.s32 %s21, %s28
      %p203 = scmp.eq.s32.totalorder %s202, 0
      %s205 = sadd.s32 %s204, 1
      %s206 = scalar_select %p203, %s204, %s205
      %p209 = pneg %p203
      %p210 = scmp.eq.s32.totalorder %s21, 1
      %p211 = por %p209, %p210
      %p212 = scmp.ne.s32.totalorder %s204, %s207
      %p213 = scmp.eq.s32.totalorder %s21, 0
      %p214 = por %p212, %p213
      %p215 = scmp.ne.s32.totalorder %s204, %s207
      %p216 = scmp.eq.s32.totalorder %s26, 1
      %p217 = por %p215, %p216
      %p218 = scmp.ne.s32.totalorder %s207, %s208
      %p219 = scmp.eq.s32.totalorder %s26, 0
      %p220 = por %p218, %p219
      %p221 = scmp.ne.s32.totalorder %s207, %s208
      %p222 = scmp.eq.s32.totalorder %s27, 1
      %p223 = por %p221, %p222
      %p225 = scmp.ne.s32.totalorder %s208, %s224
      %p226 = scmp.eq.s32.totalorder %s27, 0
      %p227 = por %p225, %p226
      %p228 = scmp.le.s32.totalorder 1, %s21
      %p229 = scmp.lt.s32.totalorder %s21, 3
      %p230 = pnand %p228, %p229
      %p231 = pneg %p230
      // Predicated region
      $region9: #{tpu_custom_call.1} parent=5 // pred_check
        _
      $region10: #{tpu_custom_call.1} parent=5 // pred_check_branch
        %233 = sbr.rel (%p230) target = $region12
      $region11: #{tpu_custom_call.1} parent=5 // pred_region
        %s234 = ssub.s32 %s21, 1
        // Predicated region
        $region13: #{tpu_custom_call.1} parent=11 // pred_check
          %p235 = pneg %p68
        $region14: #{tpu_custom_call.1} parent=11 // pred_check_branch
          %237 = sbr.rel (%p235) target = $region16
        $region15: #{tpu_custom_call.1} parent=11 // pred_region
          %s239 = ssub.s32 9216, 9216
          %240 = vsyncadd [#allocation8], %s239
          %s241 = sshll.u32 [#allocation7], 4
          %s242 = int_to_ptr.vmem [resolvable:$true] %s241
          %247 = dma.hbm_to_vmem [thread:$0]  %s1, 9216, %s242, [#allocation8], 64, 64, 4
        $region16: #{tpu_custom_call.1} parent=11 // pred_fallthru
          _
        // Predicated region
        $region17: #{tpu_custom_call.1} parent=11 // pred_check
          %p248 = pneg %p89
        $region18: #{tpu_custom_call.1} parent=11 // pred_check_branch
          %250 = sbr.rel (%p248) target = $region20
        $region19: #{tpu_custom_call.1} parent=11 // pred_region
          _
        $region20: #{tpu_custom_call.1} parent=11 // pred_fallthru
          _
        // Predicated region
        $region21: #{tpu_custom_call.1} parent=11 // pred_check
          %p251 = pneg %p110
        $region22: #{tpu_custom_call.1} parent=11 // pred_check_branch
          %253 = sbr.rel (%p251) target = $region24
        $region23: #{tpu_custom_call.1} parent=11 // pred_region
          %s255 = ssub.s32 9216, 9216
          %256 = vsyncadd [#allocation8], %s255
          %s257 = sshll.u32 [#allocation9], 4
          %s258 = int_to_ptr.vmem [resolvable:$true] %s257
          %263 = dma.hbm_to_vmem [thread:$0]  %s3, 9216, %s258, [#allocation8], 64, 64, 4
        $region24: #{tpu_custom_call.1} parent=11 // pred_fallthru
          _
        // Predicated region
        $region25: #{tpu_custom_call.1} parent=11 // pred_check
          %p264 = pneg %p131
        $region26: #{tpu_custom_call.1} parent=11 // pred_check_branch
          %266 = sbr.rel (%p264) target = $region28
        $region27: #{tpu_custom_call.1} parent=11 // pred_region
          _
        $region28: #{tpu_custom_call.1} parent=11 // pred_fallthru
          _
        // Predicated region
        $region29: #{tpu_custom_call.1} parent=11 // pred_check
          %p267 = pneg %p152
        $region30: #{tpu_custom_call.1} parent=11 // pred_check_branch
          %269 = sbr.rel (%p267) target = $region32
        $region31: #{tpu_custom_call.1} parent=11 // pred_region
          _
        $region32: #{tpu_custom_call.1} parent=11 // pred_fallthru
          _
        // Predicated region
        $region33: #{tpu_custom_call.1} parent=11 // pred_check
          %p270 = pneg %p173
        $region34: #{tpu_custom_call.1} parent=11 // pred_check_branch
          %272 = sbr.rel (%p270) target = $region36
        $region35: #{tpu_custom_call.1} parent=11 // pred_region
          _
        $region36: #{tpu_custom_call.1} parent=11 // pred_fallthru
          _
        // Predicated region
        $region37: #{tpu_custom_call.1} parent=11 // pred_check
          %p273 = pneg %p194
        $region38: #{tpu_custom_call.1} parent=11 // pred_check_branch
          %275 = sbr.rel (%p273) target = $region40
        $region39: #{tpu_custom_call.1} parent=11 // pred_region
          _
        $region40: #{tpu_custom_call.1} parent=11 // pred_fallthru
          _
      $region12: #{tpu_custom_call.1} parent=5 // pred_fallthru
        _
      %p276 = scmp.lt.s32.totalorder %s21, 2
      // Predicated region
      $region41: #{tpu_custom_call.1} parent=5 // pred_check
        %p277 = pneg %p276
      $region42: #{tpu_custom_call.1} parent=5 // pred_check_branch
        %279 = sbr.rel (%p277) target = $region44
      $region43: #{tpu_custom_call.1} parent=5 // pred_region
        // Predicated region
        $region45: #{tpu_custom_call.1} parent=43 // pred_check
          %p280 = pneg %p41
        $region46: #{tpu_custom_call.1} parent=43 // pred_check_branch
          %282 = sbr.rel (%p280) target = $region48
        $region47: #{tpu_custom_call.1} parent=43 // pred_region
          %s283 = sand.u32 %s31, 1
          %s284 = scalar_lea.sflag [#allocation5], %s283
          %s285 = sand.u32 %s31, 1
          %s286 = smul.addr %s285, 184
          %s287 = scalar_lea.vmem [#allocation4], %s286
          %s289 = ssub.s32 2944, 2944
          %290 = vsyncadd %s284, %s289
          %s291 = smul.addr %s21, 46
          %s292 = smul.addr %s291, 64
          %s293 = scalar_lea.hbm %s0, %s292
          %s294 = sshll.u32 %s287, 4
          %s295 = int_to_ptr.vmem [resolvable:$true] %s294
          %300 = dma.hbm_to_vmem [thread:$0]  %s293, 2944, %s295, %s284, 64, 64, 4
        $region48: #{tpu_custom_call.1} parent=43 // pred_fallthru
          _
      $region44: #{tpu_custom_call.1} parent=5 // pred_fallthru
        _
      %p301 = scmp.le.s32.totalorder 1, %s21
      %p302 = scmp.lt.s32.totalorder %s21, 3
      %p303 = pnand %p301, %p302
      %p304 = pneg %p303
      // Predicated region
      $region49: #{tpu_custom_call.1} parent=5 // pred_check
        _
      $region50: #{tpu_custom_call.1} parent=5 // pred_check_branch
        %306 = sbr.rel (%p303) target = $region52
      $region51: #{tpu_custom_call.1} parent=5 // pred_region
        %s307 = ssub.s32 %s21, 1
        %s308 = sand.u32 %s34, 1
        %s309 = scalar_lea.sflag [#allocation5], %s308
        %s310 = sand.u32 %s34, 1
        %s311 = smul.addr %s310, 184
        %s312 = scalar_lea.vmem [#allocation4], %s311
        // Predicated region
        $region53: #{tpu_custom_call.1} parent=51 // pred_check
          %p313 = pneg %p47
        $region54: #{tpu_custom_call.1} parent=51 // pred_check_branch
          %315 = sbr.rel (%p313) target = $region56
        $region55: #{tpu_custom_call.1} parent=51 // pred_region
          %316 = dma.done %s309, 2944
        $region56: #{tpu_custom_call.1} parent=51 // pred_fallthru
          _
        // Predicated region
        $region57: #{tpu_custom_call.1} parent=51 // pred_check
          %p317 = pneg %p68
        $region58: #{tpu_custom_call.1} parent=51 // pred_check_branch
          %319 = sbr.rel (%p317) target = $region60
        $region59: #{tpu_custom_call.1} parent=51 // pred_region
          %320 = dma.done [#allocation8], 9216
        $region60: #{tpu_custom_call.1} parent=51 // pred_fallthru
          _
        // Predicated region
        $region61: #{tpu_custom_call.1} parent=51 // pred_check
          %p321 = pneg %p110
        $region62: #{tpu_custom_call.1} parent=51 // pred_check_branch
          %323 = sbr.rel (%p321) target = $region64
        $region63: #{tpu_custom_call.1} parent=51 // pred_region
          %324 = dma.done [#allocation8], 9216
        $region64: #{tpu_custom_call.1} parent=51 // pred_fallthru
          _
        %s325 = sand.u32 %s34, 1
        %s326 = scalar_lea.sflag [#allocation5], %s325
        %s327 = sand.u32 %s34, 1
        %s328 = smul.addr %s327, 184
        %s329 = scalar_lea.vmem [#allocation4], %s328
        %p330 = pneg %p47
        %p331 = pneg %p44
        %p332 = pneg %p68
        %p333 = pneg %p65
        %p334 = pneg %p89
        %p335 = pneg %p86
        %p336 = pneg %p110
        %p337 = pneg %p107
        %p338 = pneg %p131
        %p339 = pneg %p128
        %p340 = pneg %p152
        %p341 = pneg %p149
        %p342 = pneg %p173
        %p343 = pneg %p170
        %p344 = pneg %p194
        %p345 = pneg %p191
        %p346 = pneg %p220
        %p347 = pneg %p217
        %s348 = sand.u32 %s207, 1
        %s349 = scalar_lea.sflag [#allocation6], %s348
        %s350 = sand.u32 %s207, 1
        %s351 = smul.addr %s350, 40
        %s352 = scalar_lea.vmem [#allocation10], %s351
        %v354 = vld [vmem:[%s312] sm:$0xf]
        %v355 = vld [vmem:[%s312 + $0x4] sm:$0xf]
        %v356 = vld [vmem:[%s312 + $0x8] sm:$0xf]
        %v357 = vld [vmem:[%s312 + $0xc] sm:$0xf]
        %v358 = vld [vmem:[%s312 + $0x10] sm:$0xf]
        %v359 = vld [vmem:[%s312 + $0x14] sm:$0xf]
        %v360 = vld [vmem:[%s312 + $0x18] sm:$0xf]
        %v361 = vld [vmem:[%s312 + $0x1c] sm:$0xf]
        %v362 = vld [vmem:[%s312 + $0x20] sm:$0xf]
        %v363 = vld [vmem:[%s312 + $0x24] sm:$0xf]
        %v364 = vld [vmem:[#allocation7] sm:$0xf]
        %v365 = vld [vmem:[#allocation7 + $0x4] sm:$0xf]
        %v366 = vld [vmem:[#allocation7 + $0x8] sm:$0xf]
        %v367 = vld [vmem:[#allocation7 + $0xc] sm:$0xf]
        %v368 = vld [vmem:[#allocation7 + $0x10] sm:$0xf]
        %v369 = vld [vmem:[#allocation7 + $0x14] sm:$0xf]
        %v370 = vld [vmem:[#allocation7 + $0x18] sm:$0xf]
        %v371 = vld [vmem:[#allocation7 + $0x1c] sm:$0xf]
        %v372 = vld [vmem:[#allocation7 + $0x20] sm:$0xf]
        %v373 = vld [vmem:[#allocation7 + $0x24] sm:$0xf]
        %v374 = vld [vmem:[#allocation7 + $0x28] sm:$0xf]
        %v375 = vld [vmem:[#allocation7 + $0x2c] sm:$0xf]
        %v376 = vld [vmem:[#allocation7 + $0x30] sm:$0xf]
        %v377 = vld [vmem:[#allocation7 + $0x34] sm:$0xf]
        %v378 = vld [vmem:[#allocation7 + $0x38] sm:$0xf]
        %v379 = vld [vmem:[#allocation7 + $0x3c] sm:$0xf]
        %v390 = vunpack.c.l.b16 %v354
        %v391 = vunpack.c.l.b16 %v355
        %v392 = vunpack.c.l.b16 %v356
        %v393 = vunpack.c.l.b16 %v357
        %v394 = vunpack.c.l.b16 %v358
        %v395 = vunpack.c.l.b16 %v359
        %v396 = vunpack.c.l.b16 %v360
        %v397 = vunpack.c.l.b16 %v361
        %v398 = vunpack.c.l.b16 %v362
        %v399 = vunpack.c.l.b16 %v363
        %v400 = vpack.c.b16 %v391, %v390
        %v401 = vpack.c.b16 %v393, %v392
        %v402 = vpack.c.b16 %v395, %v394
        %v403 = vpack.c.b16 %v397, %v396
        %v404 = vpack.c.b16 %v399, %v398
        %v426 = vunpack.c.l.b16 %v364
        %v427 = vunpack.c.l.b16 %v365
        %v428 = vunpack.c.l.b16 %v366
        %v429 = vunpack.c.l.b16 %v367
        %v430 = vunpack.c.l.b16 %v368
        %v431 = vunpack.c.l.b16 %v369
        %v432 = vunpack.c.l.b16 %v370
        %v433 = vunpack.c.l.b16 %v371
        %v434 = vunpack.c.l.b16 %v372
        %v435 = vunpack.c.l.b16 %v373
        %v436 = vunpack.c.l.b16 %v374
        %v437 = vunpack.c.l.b16 %v375
        %v438 = vunpack.c.l.b16 %v376
        %v439 = vunpack.c.l.b16 %v377
        %v440 = vunpack.c.l.b16 %v378
        %v441 = vunpack.c.l.b16 %v379
        %v442 = vpack.c.b16 %v427, %v426
        %v443 = vpack.c.b16 %v429, %v428
        %v444 = vpack.c.b16 %v431, %v430
        %v445 = vpack.c.b16 %v433, %v432
        %v446 = vpack.c.b16 %v435, %v434
        %v447 = vpack.c.b16 %v437, %v436
        %v448 = vpack.c.b16 %v439, %v438
        %v449 = vpack.c.b16 %v441, %v440
        %458 = vmatprep.subr.bf16.mxu0 0
        %459 = vmatpush1.bf16.msra.mxu0 %v442
        %460 = vmatprep.subr.bf16.mxu0 0
        %461 = vmatpush1.bf16.msra.mxu0 %v443
        %462 = vmatprep.subr.bf16.mxu0 0
        %463 = vmatpush1.bf16.msra.mxu0 %v444
        %464 = vmatprep.subr.bf16.mxu0 0
        %465 = vmatpush1.bf16.msra.mxu0 %v445
        %466 = vmatprep.subr.bf16.mxu0 0
        %467 = vmatpush1.bf16.msra.mxu0 %v446
        %468 = vmatprep.subr.bf16.mxu0 0
        %469 = vmatpush1.bf16.msra.mxu0 %v447
        %470 = vmatprep.subr.bf16.mxu0 0
        %471 = vmatpush1.bf16.msra.mxu0 %v448
        %472 = vmatprep.subr.bf16.mxu0 0
        %473 = vmatpush1.bf16.msra.mxu0 %v449
        %474 = vmatprep.subr.bf16.mxu0 0
        %475 = vmatpush1.bf16.msra.mxu0 0
        %476 = vmatprep.subr.bf16.mxu0 0
        %477 = vmatpush1.bf16.msra.mxu0 0
        %478 = vmatprep.subr.bf16.mxu0 0
        %479 = vmatpush1.bf16.msra.mxu0 0
        %480 = vmatprep.subr.bf16.mxu0 0
        %481 = vmatpush1.bf16.msra.mxu0 0
        %482 = vmatprep.subr.bf16.mxu0 0
        %483 = vmatpush1.bf16.msra.mxu0 0
        %484 = vmatprep.subr.bf16.mxu0 0
        %485 = vmatpush1.bf16.msra.mxu0 0
        %486 = vmatprep.subr.bf16.mxu0 0
        %487 = vmatpush1.bf16.msra.mxu0 0
        %488 = vmatprep.subr.bf16.mxu0 0
        %489 = vmatpush1.bf16.msra.mxu0 0
        %490 = vmatprep.mubr.bf16.mxu0 0
        %491 = vmatmul.mubr.bf16.gmra.mrb[0].mxu0 %v400
        %v492 = vpop.f32.mrb[0].mxu0
        %v493 = vadd.f32 0.0, %v492
        %v494 = vpop.f32.mrb[0].mxu0
        %v495 = vpop.f32.mrb[0].mxu0
        %v496 = vadd.f32 0.0, %v495
        %v497 = vpop.f32.mrb[0].mxu0
        %498 = vmatprep.mubr.bf16.mxu0 0
        %499 = vmatmul.mubr.bf16.gmra.mrb[0].mxu0 %v401
        %v500 = vpop.f32.mrb[0].mxu0
        %v501 = vadd.f32 0.0, %v500
        %v502 = vpop.f32.mrb[0].mxu0
        %v503 = vpop.f32.mrb[0].mxu0
        %v504 = vadd.f32 0.0, %v503
        %v505 = vpop.f32.mrb[0].mxu0
        %506 = vmatprep.mubr.bf16.mxu0 0
        %507 = vmatmul.mubr.bf16.gmra.mrb[0].mxu0 %v402
        %v508 = vpop.f32.mrb[0].mxu0
        %v509 = vadd.f32 0.0, %v508
        %v510 = vpop.f32.mrb[0].mxu0
        %v511 = vpop.f32.mrb[0].mxu0
        %v512 = vadd.f32 0.0, %v511
        %v513 = vpop.f32.mrb[0].mxu0
        %514 = vmatprep.mubr.bf16.mxu0 0
        %515 = vmatmul.mubr.bf16.gmra.mrb[0].mxu0 %v403
        %v516 = vpop.f32.mrb[0].mxu0
        %v517 = vadd.f32 0.0, %v516
        %v518 = vpop.f32.mrb[0].mxu0
        %v519 = vpop.f32.mrb[0].mxu0
        %v520 = vadd.f32 0.0, %v519
        %v521 = vpop.f32.mrb[0].mxu0
        %522 = vmatprep.mubr.bf16.mxu0 0
        %523 = vmatmul.mubr.bf16.gmra.mrb[0].mxu0 %v404
        %v524 = vpop.f32.mrb[0].mxu0
        %v525 = vadd.f32 0.0, %v524
        %v526 = vpop.f32.mrb[0].mxu0
        %v527 = vpop.f32.mrb[0].mxu0
        %v528 = vadd.f32 0.0, %v527
        %v529 = vpop.f32.mrb[0].mxu0
        %530 = vdwg.mxu0
        %531 = vst [vmem:[#allocation2] sm:$0xff] %v493
        %532 = vst [vmem:[#allocation2 + $0x8] sm:$0xff] %v496
        %533 = vst [vmem:[#allocation2 + $0x10] sm:$0xff] %v501
        %534 = vst [vmem:[#allocation2 + $0x18] sm:$0xff] %v504
        %535 = vst [vmem:[#allocation2 + $0x20] sm:$0xff] %v509
        %536 = vst [vmem:[#allocation2 + $0x28] sm:$0xff] %v512
        %537 = vst [vmem:[#allocation2 + $0x30] sm:$0xff] %v517
        %538 = vst [vmem:[#allocation2 + $0x38] sm:$0xff] %v520
        %539 = vst [vmem:[#allocation2 + $0x40] sm:$0xff] %v525
        %540 = vst [vmem:[#allocation2 + $0x48] sm:$0xff] %v528
        %v541 = vld [vmem:[%s312 + $0x2c] sm:$0xe]
        %v542 = vld [vmem:[%s312 + $0x30] sm:$0xf]
        %v543 = vld [vmem:[%s312 + $0x34] sm:$0xf]
        %v544 = vld [vmem:[%s312 + $0x38] sm:$0xf]
        %v545 = vld [vmem:[%s312 + $0x3c] sm:$0xf]
        %v546 = vld [vmem:[%s312 + $0x40] sm:$0xf]
        %v547 = vld [vmem:[%s312 + $0x44] sm:$0xf]
        %v548 = vld [vmem:[%s312 + $0x48] sm:$0xf]
        %v549 = vld [vmem:[%s312 + $0x4c] sm:$0xf]
        %v550 = vld [vmem:[%s312 + $0x50] sm:$0xf]
        %v551 = vld [vmem:[%s312 + $0x54] sm:$0x1]
        %v552 = vld [vmem:[#allocation7 + $0x40] sm:$0xf]
        %v553 = vld [vmem:[#allocation7 + $0x44] sm:$0xf]
        %v554 = vld [vmem:[#allocation7 + $0x48] sm:$0xf]
        %v555 = vld [vmem:[#allocation7 + $0x4c] sm:$0xf]
        %v556 = vld [vmem:[#allocation7 + $0x50] sm:$0xf]
        %v557 = vld [vmem:[#allocation7 + $0x54] sm:$0xf]
        %v558 = vld [vmem:[#allocation7 + $0x58] sm:$0xf]
        %v559 = vld [vmem:[#allocation7 + $0x5c] sm:$0xf]
        %v560 = vld [vmem:[#allocation7 + $0x60] sm:$0xf]
        %v561 = vld [vmem:[#allocation7 + $0x64] sm:$0xf]
        %v562 = vld [vmem:[#allocation7 + $0x68] sm:$0xf]
        %v563 = vld [vmem:[#allocation7 + $0x6c] sm:$0xf]
        %v564 = vld [vmem:[#allocation7 + $0x70] sm:$0xf]
        %v565 = vld [vmem:[#allocation7 + $0x74] sm:$0xf]
        %v566 = vld [vmem:[#allocation7 + $0x78] sm:$0xf]
        %v567 = vld [vmem:[#allocation7 + $0x7c] sm:$0xf]
        %v579 = vunpack.c.l.b16 %v541
        %v580 = vunpack.c.l.b16 %v542
        %v581 = vunpack.c.l.b16 %v543
        %v582 = vunpack.c.l.b16 %v544
        %v583 = vunpack.c.l.b16 %v545
        %v584 = vunpack.c.l.b16 %v546
        %v585 = vunpack.c.l.b16 %v547
        %v586 = vunpack.c.l.b16 %v548
        %v587 = vunpack.c.l.b16 %v549
        %v588 = vunpack.c.l.b16 %v550
        %v589 = vunpack.c.l.b16 %v551
        %v590 = vpack.c.b16 %v580, %v579
        %v591 = vpack.c.b16 %v582, %v581
        %v592 = vpack.c.b16 %v584, %v583
        %v593 = vpack.c.b16 %v586, %v585
        %v594 = vpack.c.b16 %v588, %v587
        %v595 = vpack.c.b16 %v589, %v589
        %vm596 = vcmask 1046528
        %v597 = vrot.slane %v590, 1
        %v598 = vrot.slane %v591, 1
        %v599 = vsel %vm596, %v597, %v598
        %v600 = vrot.slane %v592, 1
        %v601 = vsel %vm596, %v598, %v600
        %v602 = vrot.slane %v593, 1
        %v603 = vsel %vm596, %v600, %v602
        %v604 = vrot.slane %v594, 1
        %v605 = vsel %vm596, %v602, %v604
        %v606 = vrot.slane %v595, 1
        %v607 = vsel %vm596, %v604, %v606
        %v629 = vunpack.c.l.b16 %v552
        %v630 = vunpack.c.l.b16 %v553
        %v631 = vunpack.c.l.b16 %v554
        %v632 = vunpack.c.l.b16 %v555
        %v633 = vunpack.c.l.b16 %v556
        %v634 = vunpack.c.l.b16 %v557
        %v635 = vunpack.c.l.b16 %v558
        %v636 = vunpack.c.l.b16 %v559
        %v637 = vunpack.c.l.b16 %v560
        %v638 = vunpack.c.l.b16 %v561
        %v639 = vunpack.c.l.b16 %v562
        %v640 = vunpack.c.l.b16 %v563
        %v641 = vunpack.c.l.b16 %v564
        %v642 = vunpack.c.l.b16 %v565
        %v643 = vunpack.c.l.b16 %v566
        %v644 = vunpack.c.l.b16 %v567
        %v645 = vpack.c.b16 %v630, %v629
        %v646 = vpack.c.b16 %v632, %v631
        %v647 = vpack.c.b16 %v634, %v633
        %v648 = vpack.c.b16 %v636, %v635
        %v649 = vpack.c.b16 %v638, %v637
        %v650 = vpack.c.b16 %v640, %v639
        %v651 = vpack.c.b16 %v642, %v641
        %v652 = vpack.c.b16 %v644, %v643
        %661 = vmatprep.subr.bf16.mxu0 0
        %662 = vmatpush1.bf16.msra.mxu0 %v645
        %663 = vmatprep.subr.bf16.mxu0 0
        %664 = vmatpush1.bf16.msra.mxu0 %v646
        %665 = vmatprep.subr.bf16.mxu0 0
        %666 = vmatpush1.bf16.msra.mxu0 %v647
        %667 = vmatprep.subr.bf16.mxu0 0
        %668 = vmatpush1.bf16.msra.mxu0 %v648
        %669 = vmatprep.subr.bf16.mxu0 0
        %670 = vmatpush1.bf16.msra.mxu0 %v649
        %671 = vmatprep.subr.bf16.mxu0 0
        %672 = vmatpush1.bf16.msra.mxu0 %v650
        %673 = vmatprep.subr.bf16.mxu0 0
        %674 = vmatpush1.bf16.msra.mxu0 %v651
        %675 = vmatprep.subr.bf16.mxu0 0
        %676 = vmatpush1.bf16.msra.mxu0 %v652
        %677 = vmatprep.subr.bf16.mxu0 0
        %678 = vmatpush1.bf16.msra.mxu0 0
        %679 = vmatprep.subr.bf16.mxu0 0
        %680 = vmatpush1.bf16.msra.mxu0 0
        %681 = vmatprep.subr.bf16.mxu0 0
        %682 = vmatpush1.bf16.msra.mxu0 0
        %683 = vmatprep.subr.bf16.mxu0 0
        %684 = vmatpush1.bf16.msra.mxu0 0
        %685 = vmatprep.subr.bf16.mxu0 0
        %686 = vmatpush1.bf16.msra.mxu0 0
        %687 = vmatprep.subr.bf16.mxu0 0
        %688 = vmatpush1.bf16.msra.mxu0 0
        %689 = vmatprep.subr.bf16.mxu0 0
        %690 = vmatpush1.bf16.msra.mxu0 0
        %691 = vmatprep.subr.bf16.mxu0 0
        %692 = vmatpush1.bf16.msra.mxu0 0
        %693 = vmatprep.mubr.bf16.mxu0 0
        %694 = vmatmul.mubr.bf16.gmra.mrb[0].mxu0 %v599
        %v695 = vpop.f32.mrb[0].mxu0
        %v696 = vadd.f32 0.0, %v695
        %v697 = vpop.f32.mrb[0].mxu0
        %v698 = vpop.f32.mrb[0].mxu0
        %v699 = vadd.f32 0.0, %v698
        %v700 = vpop.f32.mrb[0].mxu0
        %701 = vmatprep.mubr.bf16.mxu0 0
        %702 = vmatmul.mubr.bf16.gmra.mrb[0].mxu0 %v601
        %v703 = vpop.f32.mrb[0].mxu0
        %v704 = vadd.f32 0.0, %v703
        %v705 = vpop.f32.mrb[0].mxu0
        %v706 = vpop.f32.mrb[0].mxu0
        %v707 = vadd.f32 0.0, %v706
        %v708 = vpop.f32.mrb[0].mxu0
        %709 = vmatprep.mubr.bf16.mxu0 0
        %710 = vmatmul.mubr.bf16.gmra.mrb[0].mxu0 %v603
        %v711 = vpop.f32.mrb[0].mxu0
        %v712 = vadd.f32 0.0, %v711
        %v713 = vpop.f32.mrb[0].mxu0
        %v714 = vpop.f32.mrb[0].mxu0
        %v715 = vadd.f32 0.0, %v714
        %v716 = vpop.f32.mrb[0].mxu0
        %717 = vmatprep.mubr.bf16.mxu0 0
        %718 = vmatmul.mubr.bf16.gmra.mrb[0].mxu0 %v605
        %v719 = vpop.f32.mrb[0].mxu0
        %v720 = vadd.f32 0.0, %v719
        %v721 = vpop.f32.mrb[0].mxu0
        %v722 = vpop.f32.mrb[0].mxu0
        %v723 = vadd.f32 0.0, %v722
        %v724 = vpop.f32.mrb[0].mxu0
        %725 = vmatprep.mubr.bf16.mxu0 0
        %726 = vmatmul.mubr.bf16.gmra.mrb[0].mxu0 %v607
        %v727 = vpop.f32.mrb[0].mxu0
        %v728 = vadd.f32 0.0, %v727
        %v729 = vpop.f32.mrb[0].mxu0
        %v730 = vpop.f32.mrb[0].mxu0
        %v731 = vadd.f32 0.0, %v730
        %v732 = vpop.f32.mrb[0].mxu0
        %733 = vdwg.mxu0
        %v734 = vld [vmem:[#allocation2] sm:$0xff]
        %v735 = vld [vmem:[#allocation2 + $0x8] sm:$0xff]
        %v736 = vld [vmem:[#allocation2 + $0x10] sm:$0xff]
        %v737 = vld [vmem:[#allocation2 + $0x18] sm:$0xff]
        %v738 = vld [vmem:[#allocation2 + $0x20] sm:$0xff]
        %v739 = vld [vmem:[#allocation2 + $0x28] sm:$0xff]
        %v740 = vld [vmem:[#allocation2 + $0x30] sm:$0xff]
        %v741 = vld [vmem:[#allocation2 + $0x38] sm:$0xff]
        %v742 = vld [vmem:[#allocation2 + $0x40] sm:$0xff]
        %v743 = vld [vmem:[#allocation2 + $0x48] sm:$0xff]
        %v744 = vadd.f32 %v734, %v696
        %v745 = vadd.f32 %v735, %v699
        %v746 = vadd.f32 %v736, %v704
        %v747 = vadd.f32 %v737, %v707
        %v748 = vadd.f32 %v738, %v712
        %v749 = vadd.f32 %v739, %v715
        %v750 = vadd.f32 %v740, %v720
        %v751 = vadd.f32 %v741, %v723
        %v752 = vadd.f32 %v742, %v728
        %v753 = vadd.f32 %v743, %v731
        %754 = vst [vmem:[#allocation2] sm:$0xff] %v744
        %755 = vst [vmem:[#allocation2 + $0x8] sm:$0xff] %v745
        %756 = vst [vmem:[#allocation2 + $0x10] sm:$0xff] %v746
        %757 = vst [vmem:[#allocation2 + $0x18] sm:$0xff] %v747
        %758 = vst [vmem:[#allocation2 + $0x20] sm:$0xff] %v748
        %759 = vst [vmem:[#allocation2 + $0x28] sm:$0xff] %v749
        %760 = vst [vmem:[#allocation2 + $0x30] sm:$0xff] %v750
        %761 = vst [vmem:[#allocation2 + $0x38] sm:$0xff] %v751
        %762 = vst [vmem:[#allocation2 + $0x40] sm:$0xff] %v752
        %763 = vst [vmem:[#allocation2 + $0x48] sm:$0xff] %v753
        %v764 = vld [vmem:[%s312] sm:$0xf]
        %v765 = vld [vmem:[%s312 + $0x4] sm:$0xf]
        %v766 = vld [vmem:[%s312 + $0x8] sm:$0xf]
        %v767 = vld [vmem:[%s312 + $0xc] sm:$0xf]
        %v768 = vld [vmem:[%s312 + $0x10] sm:$0xf]
        %v769 = vld [vmem:[%s312 + $0x14] sm:$0xf]
        %v770 = vld [vmem:[%s312 + $0x18] sm:$0xf]
        %v771 = vld [vmem:[%s312 + $0x1c] sm:$0xf]
        %v772 = vld [vmem:[%s312 + $0x20] sm:$0xf]
        %v773 = vld [vmem:[%s312 + $0x24] sm:$0xf]
        %v774 = vld [vmem:[%s312 + $0x28] sm:$0x1]
        %v775 = vld [vmem:[#allocation7 + $0x80] sm:$0xf]
        %v776 = vld [vmem:[#allocation7 + $0x84] sm:$0xf]
        %v777 = vld [vmem:[#allocation7 + $0x88] sm:$0xf]
        %v778 = vld [vmem:[#allocation7 + $0x8c] sm:$0xf]
        %v779 = vld [vmem:[#allocation7 + $0x90] sm:$0xf]
        %v780 = vld [vmem:[#allocation7 + $0x94] sm:$0xf]
        %v781 = vld [vmem:[#allocation7 + $0x98] sm:$0xf]
        %v782 = vld [vmem:[#allocation7 + $0x9c] sm:$0xf]
        %v783 = vld [vmem:[#allocation7 + $0xa0] sm:$0xf]
        %v784 = vld [vmem:[#allocation7 + $0xa4] sm:$0xf]
        %v785 = vld [vmem:[#allocation7 + $0xa8] sm:$0xf]
        %v786 = vld [vmem:[#allocation7 + $0xac] sm:$0xf]
        %v787 = vld [vmem:[#allocation7 + $0xb0] sm:$0xf]
        %v788 = vld [vmem:[#allocation7 + $0xb4] sm:$0xf]
        %v789 = vld [vmem:[#allocation7 + $0xb8] sm:$0xf]
        %v790 = vld [vmem:[#allocation7 + $0xbc] sm:$0xf]
        %v802 = vunpack.c.l.b16 %v764
        %v803 = vunpack.c.l.b16 %v765
        %v804 = vunpack.c.l.b16 %v766
        %v805 = vunpack.c.l.b16 %v767
        %v806 = vunpack.c.l.b16 %v768
        %v807 = vunpack.c.l.b16 %v769
        %v808 = vunpack.c.l.b16 %v770
        %v809 = vunpack.c.l.b16 %v771
        %v810 = vunpack.c.l.b16 %v772
        %v811 = vunpack.c.l.b16 %v773
        %v812 = vunpack.c.l.b16 %v774
        %v813 = vpack.c.b16 %v803, %v802
        %v814 = vpack.c.b16 %v805, %v804
        %v815 = vpack.c.b16 %v807, %v806
        %v816 = vpack.c.b16 %v809, %v808
        %v817 = vpack.c.b16 %v811, %v810
        %v818 = vpack.c.b16 %v812, %v812
        %vm819 = vsmask.f32 7424
        %v821 = vshrl.u32 %v813, 16
        %v823 = vshll.u32 %v813, 16
        %v825 = vrot.slane %v823, 1
        %v826 = vor.u32 %v821, %v825
        %v828 = vshll.u32 %v814, 16
        %v830 = vrot.slane %v828, 1
        %v831 = vsel %vm819, %v826, %v830
        %v832 = vshrl.u32 %v814, 16
        %v834 = vor.u32 %v832, %v830
        %v836 = vshll.u32 %v815, 16
        %v838 = vrot.slane %v836, 1
        %v839 = vsel %vm819, %v834, %v838
        %v840 = vshrl.u32 %v815, 16
        %v842 = vor.u32 %v840, %v838
        %v844 = vshll.u32 %v816, 16
        %v846 = vrot.slane %v844, 1
        %v847 = vsel %vm819, %v842, %v846
        %v848 = vshrl.u32 %v816, 16
        %v850 = vor.u32 %v848, %v846
        %v852 = vshll.u32 %v817, 16
        %v854 = vrot.slane %v852, 1
        %v855 = vsel %vm819, %v850, %v854
        %v856 = vshrl.u32 %v817, 16
        %v858 = vor.u32 %v856, %v854
        %v860 = vshll.u32 %v818, 16
        %v862 = vrot.slane %v860, 1
        %v863 = vsel %vm819, %v858, %v862
        %v885 = vunpack.c.l.b16 %v775
        %v886 = vunpack.c.l.b16 %v776
        %v887 = vunpack.c.l.b16 %v777
        %v888 = vunpack.c.l.b16 %v778
        %v889 = vunpack.c.l.b16 %v779
        %v890 = vunpack.c.l.b16 %v780
        %v891 = vunpack.c.l.b16 %v781
        %v892 = vunpack.c.l.b16 %v782
        %v893 = vunpack.c.l.b16 %v783
        %v894 = vunpack.c.l.b16 %v784
        %v895 = vunpack.c.l.b16 %v785
        %v896 = vunpack.c.l.b16 %v786
        %v897 = vunpack.c.l.b16 %v787
        %v898 = vunpack.c.l.b16 %v788
        %v899 = vunpack.c.l.b16 %v789
        %v900 = vunpack.c.l.b16 %v790
        %v901 = vpack.c.b16 %v886, %v885
        %v902 = vpack.c.b16 %v888, %v887
        %v903 = vpack.c.b16 %v890, %v889
        %v904 = vpack.c.b16 %v892, %v891
        %v905 = vpack.c.b16 %v894, %v893
        %v906 = vpack.c.b16 %v896, %v895
        %v907 = vpack.c.b16 %v898, %v897
        %v908 = vpack.c.b16 %v900, %v899
        %917 = vmatprep.subr.bf16.mxu0 0
        %918 = vmatpush1.bf16.msra.mxu0 %v901
        %919 = vmatprep.subr.bf16.mxu0 0
        %920 = vmatpush1.bf16.msra.mxu0 %v902
        %921 = vmatprep.subr.bf16.mxu0 0
        %922 = vmatpush1.bf16.msra.mxu0 %v903
        %923 = vmatprep.subr.bf16.mxu0 0
        %924 = vmatpush1.bf16.msra.mxu0 %v904
        %925 = vmatprep.subr.bf16.mxu0 0
        %926 = vmatpush1.bf16.msra.mxu0 %v905
        %927 = vmatprep.subr.bf16.mxu0 0
        %928 = vmatpush1.bf16.msra.mxu0 %v906
        %929 = vmatprep.subr.bf16.mxu0 0
        %930 = vmatpush1.bf16.msra.mxu0 %v907
        %931 = vmatprep.subr.bf16.mxu0 0
        %932 = vmatpush1.bf16.msra.mxu0 %v908
        %933 = vmatprep.subr.bf16.mxu0 0
        %934 = vmatpush1.bf16.msra.mxu0 0
        %935 = vmatprep.subr.bf16.mxu0 0
        %936 = vmatpush1.bf16.msra.mxu0 0
        %937 = vmatprep.subr.bf16.mxu0 0
        %938 = vmatpush1.bf16.msra.mxu0 0
        %939 = vmatprep.subr.bf16.mxu0 0
        %940 = vmatpush1.bf16.msra.mxu0 0
        %941 = vmatprep.subr.bf16.mxu0 0
        %942 = vmatpush1.bf16.msra.mxu0 0
        %943 = vmatprep.subr.bf16.mxu0 0
        %944 = vmatpush1.bf16.msra.mxu0 0
        %945 = vmatprep.subr.bf16.mxu0 0
        %946 = vmatpush1.bf16.msra.mxu0 0
        %947 = vmatprep.subr.bf16.mxu0 0
        %948 = vmatpush1.bf16.msra.mxu0 0
        %949 = vmatprep.mubr.bf16.mxu0 0
        %950 = vmatmul.mubr.bf16.gmra.mrb[0].mxu0 %v831
        %v951 = vpop.f32.mrb[0].mxu0
        %v952 = vadd.f32 0.0, %v951
        %v953 = vpop.f32.mrb[0].mxu0
        %v954 = vpop.f32.mrb[0].mxu0
        %v955 = vadd.f32 0.0, %v954
        %v956 = vpop.f32.mrb[0].mxu0
        %957 = vmatprep.mubr.bf16.mxu0 0
        %958 = vmatmul.mubr.bf16.gmra.mrb[0].mxu0 %v839
        %v959 = vpop.f32.mrb[0].mxu0
        %v960 = vadd.f32 0.0, %v959
        %v961 = vpop.f32.mrb[0].mxu0
        %v962 = vpop.f32.mrb[0].mxu0
        %v963 = vadd.f32 0.0, %v962
        %v964 = vpop.f32.mrb[0].mxu0
        %965 = vmatprep.mubr.bf16.mxu0 0
        %966 = vmatmul.mubr.bf16.gmra.mrb[0].mxu0 %v847
        %v967 = vpop.f32.mrb[0].mxu0
        %v968 = vadd.f32 0.0, %v967
        %v969 = vpop.f32.mrb[0].mxu0
        %v970 = vpop.f32.mrb[0].mxu0
        %v971 = vadd.f32 0.0, %v970
        %v972 = vpop.f32.mrb[0].mxu0
        %973 = vmatprep.mubr.bf16.mxu0 0
        %974 = vmatmul.mubr.bf16.gmra.mrb[0].mxu0 %v855
        %v975 = vpop.f32.mrb[0].mxu0
        %v976 = vadd.f32 0.0, %v975
        %v977 = vpop.f32.mrb[0].mxu0
        %v978 = vpop.f32.mrb[0].mxu0
        %v979 = vadd.f32 0.0, %v978
        %v980 = vpop.f32.mrb[0].mxu0
        %981 = vmatprep.mubr.bf16.mxu0 0
        %982 = vmatmul.mubr.bf16.gmra.mrb[0].mxu0 %v863
        %v983 = vpop.f32.mrb[0].mxu0
        %v984 = vadd.f32 0.0, %v983
        %v985 = vpop.f32.mrb[0].mxu0
        %v986 = vpop.f32.mrb[0].mxu0
        %v987 = vadd.f32 0.0, %v986
        %v988 = vpop.f32.mrb[0].mxu0
        %989 = vdwg.mxu0
        %v990 = vld [vmem:[#allocation2] sm:$0xff]
        %v991 = vld [vmem:[#allocation2 + $0x8] sm:$0xff]
        %v992 = vld [vmem:[#allocation2 + $0x10] sm:$0xff]
        %v993 = vld [vmem:[#allocation2 + $0x18] sm:$0xff]
        %v994 = vld [vmem:[#allocation2 + $0x20] sm:$0xff]
        %v995 = vld [vmem:[#allocation2 + $0x28] sm:$0xff]
        %v996 = vld [vmem:[#allocation2 + $0x30] sm:$0xff]
        %v997 = vld [vmem:[#allocation2 + $0x38] sm:$0xff]
        %v998 = vld [vmem:[#allocation2 + $0x40] sm:$0xff]
        %v999 = vld [vmem:[#allocation2 + $0x48] sm:$0xff]
        %v1000 = vadd.f32 %v990, %v952
        %v1001 = vadd.f32 %v991, %v955
        %v1002 = vadd.f32 %v992, %v960
        %v1003 = vadd.f32 %v993, %v963
        %v1004 = vadd.f32 %v994, %v968
        %v1005 = vadd.f32 %v995, %v971
        %v1006 = vadd.f32 %v996, %v976
        %v1007 = vadd.f32 %v997, %v979
        %v1008 = vadd.f32 %v998, %v984
        %v1009 = vadd.f32 %v999, %v987
        %1010 = vst [vmem:[#allocation2] sm:$0xff] %v1000
        %1011 = vst [vmem:[#allocation2 + $0x8] sm:$0xff] %v1001
        %1012 = vst [vmem:[#allocation2 + $0x10] sm:$0xff] %v1002
        %1013 = vst [vmem:[#allocation2 + $0x18] sm:$0xff] %v1003
        %1014 = vst [vmem:[#allocation2 + $0x20] sm:$0xff] %v1004
        %1015 = vst [vmem:[#allocation2 + $0x28] sm:$0xff] %v1005
        %1016 = vst [vmem:[#allocation2 + $0x30] sm:$0xff] %v1006
        %1017 = vst [vmem:[#allocation2 + $0x38] sm:$0xff] %v1007
        %1018 = vst [vmem:[#allocation2 + $0x40] sm:$0xff] %v1008
        %1019 = vst [vmem:[#allocation2 + $0x48] sm:$0xff] %v1009
        %v1020 = vld [vmem:[%s312 + $0x58] sm:$0xc]
        %v1021 = vld [vmem:[%s312 + $0x5c] sm:$0xf]
        %v1022 = vld [vmem:[%s312 + $0x60] sm:$0xf]
        %v1023 = vld [vmem:[%s312 + $0x64] sm:$0xf]
        %v1024 = vld [vmem:[%s312 + $0x68] sm:$0xf]
        %v1025 = vld [vmem:[%s312 + $0x6c] sm:$0xf]
        %v1026 = vld [vmem:[%s312 + $0x70] sm:$0xf]
        %v1027 = vld [vmem:[%s312 + $0x74] sm:$0xf]
        %v1028 = vld [vmem:[%s312 + $0x78] sm:$0xf]
        %v1029 = vld [vmem:[%s312 + $0x7c] sm:$0xf]
        %v1030 = vld [vmem:[%s312 + $0x80] sm:$0x3]
        %v1031 = vld [vmem:[#allocation7 + $0xc0] sm:$0xf]
        %v1032 = vld [vmem:[#allocation7 + $0xc4] sm:$0xf]
        %v1033 = vld [vmem:[#allocation7 + $0xc8] sm:$0xf]
        %v1034 = vld [vmem:[#allocation7 + $0xcc] sm:$0xf]
        %v1035 = vld [vmem:[#allocation7 + $0xd0] sm:$0xf]
        %v1036 = vld [vmem:[#allocation7 + $0xd4] sm:$0xf]
        %v1037 = vld [vmem:[#allocation7 + $0xd8] sm:$0xf]
        %v1038 = vld [vmem:[#allocation7 + $0xdc] sm:$0xf]
        %v1039 = vld [vmem:[#allocation7 + $0xe0] sm:$0xf]
        %v1040 = vld [vmem:[#allocation7 + $0xe4] sm:$0xf]
        %v1041 = vld [vmem:[#allocation7 + $0xe8] sm:$0xf]
        %v1042 = vld [vmem:[#allocation7 + $0xec] sm:$0xf]
        %v1043 = vld [vmem:[#allocation7 + $0xf0] sm:$0xf]
        %v1044 = vld [vmem:[#allocation7 + $0xf4] sm:$0xf]
        %v1045 = vld [vmem:[#allocation7 + $0xf8] sm:$0xf]
        %v1046 = vld [vmem:[#allocation7 + $0xfc] sm:$0xf]
        %v1058 = vunpack.c.l.b16 %v1020
        %v1059 = vunpack.c.l.b16 %v1021
        %v1060 = vunpack.c.l.b16 %v1022
        %v1061 = vunpack.c.l.b16 %v1023
        %v1062 = vunpack.c.l.b16 %v1024
        %v1063 = vunpack.c.l.b16 %v1025
        %v1064 = vunpack.c.l.b16 %v1026
        %v1065 = vunpack.c.l.b16 %v1027
        %v1066 = vunpack.c.l.b16 %v1028
        %v1067 = vunpack.c.l.b16 %v1029
        %v1068 = vunpack.c.l.b16 %v1030
        %v1069 = vpack.c.b16 %v1059, %v1058
        %v1070 = vpack.c.b16 %v1061, %v1060
        %v1071 = vpack.c.b16 %v1063, %v1062
        %v1072 = vpack.c.b16 %v1065, %v1064
        %v1073 = vpack.c.b16 %v1067, %v1066
        %v1074 = vpack.c.b16 %v1068, %v1068
        %vm1075 = vcmask 1045504
        %v1076 = vrot.slane %v1069, 2
        %v1077 = vrot.slane %v1070, 2
        %v1078 = vsel %vm1075, %v1076, %v1077
        %v1079 = vrot.slane %v1071, 2
        %v1080 = vsel %vm1075, %v1077, %v1079
        %v1081 = vrot.slane %v1072, 2
        %v1082 = vsel %vm1075, %v1079, %v1081
        %v1083 = vrot.slane %v1073, 2
        %v1084 = vsel %vm1075, %v1081, %v1083
        %v1085 = vrot.slane %v1074, 2
        %v1086 = vsel %vm1075, %v1083, %v1085
        %v1108 = vunpack.c.l.b16 %v1031
        %v1109 = vunpack.c.l.b16 %v1032
        %v1110 = vunpack.c.l.b16 %v1033
        %v1111 = vunpack.c.l.b16 %v1034
        %v1112 = vunpack.c.l.b16 %v1035
        %v1113 = vunpack.c.l.b16 %v1036
        %v1114 = vunpack.c.l.b16 %v1037
        %v1115 = vunpack.c.l.b16 %v1038
        %v1116 = vunpack.c.l.b16 %v1039
        %v1117 = vunpack.c.l.b16 %v1040
        %v1118 = vunpack.c.l.b16 %v1041
        %v1119 = vunpack.c.l.b16 %v1042
        %v1120 = vunpack.c.l.b16 %v1043
        %v1121 = vunpack.c.l.b16 %v1044
        %v1122 = vunpack.c.l.b16 %v1045
        %v1123 = vunpack.c.l.b16 %v1046
        %v1124 = vpack.c.b16 %v1109, %v1108
        %v1125 = vpack.c.b16 %v1111, %v1110
        %v1126 = vpack.c.b16 %v1113, %v1112
        %v1127 = vpack.c.b16 %v1115, %v1114
        %v1128 = vpack.c.b16 %v1117, %v1116
        %v1129 = vpack.c.b16 %v1119, %v1118
        %v1130 = vpack.c.b16 %v1121, %v1120
        %v1131 = vpack.c.b16 %v1123, %v1122
        %1140 = vmatprep.subr.bf16.mxu0 0
        %1141 = vmatpush1.bf16.msra.mxu0 %v1124
        %1142 = vmatprep.subr.bf16.mxu0 0
        %1143 = vmatpush1.bf16.msra.mxu0 %v1125
        %1144 = vmatprep.subr.bf16.mxu0 0
        %1145 = vmatpush1.bf16.msra.mxu0 %v1126
        %1146 = vmatprep.subr.bf16.mxu0 0
        %1147 = vmatpush1.bf16.msra.mxu0 %v1127
        %1148 = vmatprep.subr.bf16.mxu0 0
        %1149 = vmatpush1.bf16.msra.mxu0 %v1128
        %1150 = vmatprep.subr.bf16.mxu0 0
        %1151 = vmatpush1.bf16.msra.mxu0 %v1129
        %1152 = vmatprep.subr.bf16.mxu0 0
        %1153 = vmatpush1.bf16.msra.mxu0 %v1130
        %1154 = vmatprep.subr.bf16.mxu0 0
        %1155 = vmatpush1.bf16.msra.mxu0 %v1131
        %1156 = vmatprep.subr.bf16.mxu0 0
        %1157 = vmatpush1.bf16.msra.mxu0 0
        %1158 = vmatprep.subr.bf16.mxu0 0
        %1159 = vmatpush1.bf16.msra.mxu0 0
        %1160 = vmatprep.subr.bf16.mxu0 0
        %1161 = vmatpush1.bf16.msra.mxu0 0
        %1162 = vmatprep.subr.bf16.mxu0 0
        %1163 = vmatpush1.bf16.msra.mxu0 0
        %1164 = vmatprep.subr.bf16.mxu0 0
        %1165 = vmatpush1.bf16.msra.mxu0 0
        %1166 = vmatprep.subr.bf16.mxu0 0
        %1167 = vmatpush1.bf16.msra.mxu0 0
        %1168 = vmatprep.subr.bf16.mxu0 0
        %1169 = vmatpush1.bf16.msra.mxu0 0
        %1170 = vmatprep.subr.bf16.mxu0 0
        %1171 = vmatpush1.bf16.msra.mxu0 0
        %1172 = vmatprep.mubr.bf16.mxu0 0
        %1173 = vmatmul.mubr.bf16.gmra.mrb[0].mxu0 %v1078
        %v1174 = vpop.f32.mrb[0].mxu0
        %v1175 = vadd.f32 0.0, %v1174
        %v1176 = vpop.f32.mrb[0].mxu0
        %v1177 = vpop.f32.mrb[0].mxu0
        %v1178 = vadd.f32 0.0, %v1177
        %v1179 = vpop.f32.mrb[0].mxu0
        %1180 = vmatprep.mubr.bf16.mxu0 0
        %1181 = vmatmul.mubr.bf16.gmra.mrb[0].mxu0 %v1080
        %v1182 = vpop.f32.mrb[0].mxu0
        %v1183 = vadd.f32 0.0, %v1182
        %v1184 = vpop.f32.mrb[0].mxu0
        %v1185 = vpop.f32.mrb[0].mxu0
        %v1186 = vadd.f32 0.0, %v1185
        %v1187 = vpop.f32.mrb[0].mxu0
        %1188 = vmatprep.mubr.bf16.mxu0 0
        %1189 = vmatmul.mubr.bf16.gmra.mrb[0].mxu0 %v1082
        %v1190 = vpop.f32.mrb[0].mxu0
        %v1191 = vadd.f32 0.0, %v1190
        %v1192 = vpop.f32.mrb[0].mxu0
        %v1193 = vpop.f32.mrb[0].mxu0
        %v1194 = vadd.f32 0.0, %v1193
        %v1195 = vpop.f32.mrb[0].mxu0
        %1196 = vmatprep.mubr.bf16.mxu0 0
        %1197 = vmatmul.mubr.bf16.gmra.mrb[0].mxu0 %v1084
        %v1198 = vpop.f32.mrb[0].mxu0
        %v1199 = vadd.f32 0.0, %v1198
        %v1200 = vpop.f32.mrb[0].mxu0
        %v1201 = vpop.f32.mrb[0].mxu0
        %v1202 = vadd.f32 0.0, %v1201
        %v1203 = vpop.f32.mrb[0].mxu0
        %1204 = vmatprep.mubr.bf16.mxu0 0
        %1205 = vmatmul.mubr.bf16.gmra.mrb[0].mxu0 %v1086
        %v1206 = vpop.f32.mrb[0].mxu0
        %v1207 = vadd.f32 0.0, %v1206
        %v1208 = vpop.f32.mrb[0].mxu0
        %v1209 = vpop.f32.mrb[0].mxu0
        %v1210 = vadd.f32 0.0, %v1209
        %v1211 = vpop.f32.mrb[0].mxu0
        %1212 = vdwg.mxu0
        %v1213 = vld [vmem:[#allocation2] sm:$0xff]
        %v1214 = vld [vmem:[#allocation2 + $0x8] sm:$0xff]
        %v1215 = vld [vmem:[#allocation2 + $0x10] sm:$0xff]
        %v1216 = vld [vmem:[#allocation2 + $0x18] sm:$0xff]
        %v1217 = vld [vmem:[#allocation2 + $0x20] sm:$0xff]
        %v1218 = vld [vmem:[#allocation2 + $0x28] sm:$0xff]
        %v1219 = vld [vmem:[#allocation2 + $0x30] sm:$0xff]
        %v1220 = vld [vmem:[#allocation2 + $0x38] sm:$0xff]
        %v1221 = vld [vmem:[#allocation2 + $0x40] sm:$0xff]
        %v1222 = vld [vmem:[#allocation2 + $0x48] sm:$0xff]
        %v1223 = vadd.f32 %v1213, %v1175
        %v1224 = vadd.f32 %v1214, %v1178
        %v1225 = vadd.f32 %v1215, %v1183
        %v1226 = vadd.f32 %v1216, %v1186
        %v1227 = vadd.f32 %v1217, %v1191
        %v1228 = vadd.f32 %v1218, %v1194
        %v1229 = vadd.f32 %v1219, %v1199
        %v1230 = vadd.f32 %v1220, %v1202
        %v1231 = vadd.f32 %v1221, %v1207
        %v1232 = vadd.f32 %v1222, %v1210
        %1233 = vst [vmem:[#allocation2] sm:$0xff] %v1223
        %1234 = vst [vmem:[#allocation2 + $0x8] sm:$0xff] %v1224
        %1235 = vst [vmem:[#allocation2 + $0x10] sm:$0xff] %v1225
        %1236 = vst [vmem:[#allocation2 + $0x18] sm:$0xff] %v1226
        %1237 = vst [vmem:[#allocation2 + $0x20] sm:$0xff] %v1227
        %1238 = vst [vmem:[#allocation2 + $0x28] sm:$0xff] %v1228
        %1239 = vst [vmem:[#allocation2 + $0x30] sm:$0xff] %v1229
        %1240 = vst [vmem:[#allocation2 + $0x38] sm:$0xff] %v1230
        %1241 = vst [vmem:[#allocation2 + $0x40] sm:$0xff] %v1231
        %1242 = vst [vmem:[#allocation2 + $0x48] sm:$0xff] %v1232
        %v1243 = vld [vmem:[%s312 + $0x84] sm:$0x8]
        %v1244 = vld [vmem:[%s312 + $0x88] sm:$0xf]
        %v1245 = vld [vmem:[%s312 + $0x8c] sm:$0xf]
        %v1246 = vld [vmem:[%s312 + $0x90] sm:$0xf]
        %v1247 = vld [vmem:[%s312 + $0x94] sm:$0xf]
        %v1248 = vld [vmem:[%s312 + $0x98] sm:$0xf]
        %v1249 = vld [vmem:[%s312 + $0x9c] sm:$0xf]
        %v1250 = vld [vmem:[%s312 + $0xa0] sm:$0xf]
        %v1251 = vld [vmem:[%s312 + $0xa4] sm:$0xf]
        %v1252 = vld [vmem:[%s312 + $0xa8] sm:$0xf]
        %v1253 = vld [vmem:[%s312 + $0xac] sm:$0x7]
        %v1254 = vld [vmem:[#allocation7 + $0x100] sm:$0xf]
        %v1255 = vld [vmem:[#allocation7 + $0x104] sm:$0xf]
        %v1256 = vld [vmem:[#allocation7 + $0x108] sm:$0xf]
        %v1257 = vld [vmem:[#allocation7 + $0x10c] sm:$0xf]
        %v1258 = vld [vmem:[#allocation7 + $0x110] sm:$0xf]
        %v1259 = vld [vmem:[#allocation7 + $0x114] sm:$0xf]
        %v1260 = vld [vmem:[#allocation7 + $0x118] sm:$0xf]
        %v1261 = vld [vmem:[#allocation7 + $0x11c] sm:$0xf]
        %v1262 = vld [vmem:[#allocation7 + $0x120] sm:$0xf]
        %v1263 = vld [vmem:[#allocation7 + $0x124] sm:$0xf]
        %v1264 = vld [vmem:[#allocation7 + $0x128] sm:$0xf]
        %v1265 = vld [vmem:[#allocation7 + $0x12c] sm:$0xf]
        %v1266 = vld [vmem:[#allocation7 + $0x130] sm:$0xf]
        %v1267 = vld [vmem:[#allocation7 + $0x134] sm:$0xf]
        %v1268 = vld [vmem:[#allocation7 + $0x138] sm:$0xf]
        %v1269 = vld [vmem:[#allocation7 + $0x13c] sm:$0xf]
        %v1281 = vunpack.c.l.b16 %v1243
        %v1282 = vunpack.c.l.b16 %v1244
        %v1283 = vunpack.c.l.b16 %v1245
        %v1284 = vunpack.c.l.b16 %v1246
        %v1285 = vunpack.c.l.b16 %v1247
        %v1286 = vunpack.c.l.b16 %v1248
        %v1287 = vunpack.c.l.b16 %v1249
        %v1288 = vunpack.c.l.b16 %v1250
        %v1289 = vunpack.c.l.b16 %v1251
        %v1290 = vunpack.c.l.b16 %v1252
        %v1291 = vunpack.c.l.b16 %v1253
        %v1292 = vpack.c.b16 %v1282, %v1281
        %v1293 = vpack.c.b16 %v1284, %v1283
        %v1294 = vpack.c.b16 %v1286, %v1285
        %v1295 = vpack.c.b16 %v1288, %v1287
        %v1296 = vpack.c.b16 %v1290, %v1289
        %v1297 = vpack.c.b16 %v1291, %v1291
        %vm1298 = vcmask 1044480
        %v1299 = vrot.slane %v1292, 3
        %v1300 = vrot.slane %v1293, 3
        %v1301 = vsel %vm1298, %v1299, %v1300
        %v1302 = vrot.slane %v1294, 3
        %v1303 = vsel %vm1298, %v1300, %v1302
        %v1304 = vrot.slane %v1295, 3
        %v1305 = vsel %vm1298, %v1302, %v1304
        %v1306 = vrot.slane %v1296, 3
        %v1307 = vsel %vm1298, %v1304, %v1306
        %v1308 = vrot.slane %v1297, 3
        %v1309 = vsel %vm1298, %v1306, %v1308
        %v1331 = vunpack.c.l.b16 %v1254
        %v1332 = vunpack.c.l.b16 %v1255
        %v1333 = vunpack.c.l.b16 %v1256
        %v1334 = vunpack.c.l.b16 %v1257
        %v1335 = vunpack.c.l.b16 %v1258
        %v1336 = vunpack.c.l.b16 %v1259
        %v1337 = vunpack.c.l.b16 %v1260
        %v1338 = vunpack.c.l.b16 %v1261
        %v1339 = vunpack.c.l.b16 %v1262
        %v1340 = vunpack.c.l.b16 %v1263
        %v1341 = vunpack.c.l.b16 %v1264
        %v1342 = vunpack.c.l.b16 %v1265
        %v1343 = vunpack.c.l.b16 %v1266
        %v1344 = vunpack.c.l.b16 %v1267
        %v1345 = vunpack.c.l.b16 %v1268
        %v1346 = vunpack.c.l.b16 %v1269
        %v1347 = vpack.c.b16 %v1332, %v1331
        %v1348 = vpack.c.b16 %v1334, %v1333
        %v1349 = vpack.c.b16 %v1336, %v1335
        %v1350 = vpack.c.b16 %v1338, %v1337
        %v1351 = vpack.c.b16 %v1340, %v1339
        %v1352 = vpack.c.b16 %v1342, %v1341
        %v1353 = vpack.c.b16 %v1344, %v1343
        %v1354 = vpack.c.b16 %v1346, %v1345
        %1363 = vmatprep.subr.bf16.mxu0 0
        %1364 = vmatpush1.bf16.msra.mxu0 %v1347
        %1365 = vmatprep.subr.bf16.mxu0 0
        %1366 = vmatpush1.bf16.msra.mxu0 %v1348
        %1367 = vmatprep.subr.bf16.mxu0 0
        %1368 = vmatpush1.bf16.msra.mxu0 %v1349
        %1369 = vmatprep.subr.bf16.mxu0 0
        %1370 = vmatpush1.bf16.msra.mxu0 %v1350
        %1371 = vmatprep.subr.bf16.mxu0 0
        %1372 = vmatpush1.bf16.msra.mxu0 %v1351
        %1373 = vmatprep.subr.bf16.mxu0 0
        %1374 = vmatpush1.bf16.msra.mxu0 %v1352
        %1375 = vmatprep.subr.bf16.mxu0 0
        %1376 = vmatpush1.bf16.msra.mxu0 %v1353
        %1377 = vmatprep.subr.bf16.mxu0 0
        %1378 = vmatpush1.bf16.msra.mxu0 %v1354
        %1379 = vmatprep.subr.bf16.mxu0 0
        %1380 = vmatpush1.bf16.msra.mxu0 0
        %1381 = vmatprep.subr.bf16.mxu0 0
        %1382 = vmatpush1.bf16.msra.mxu0 0
        %1383 = vmatprep.subr.bf16.mxu0 0
        %1384 = vmatpush1.bf16.msra.mxu0 0
        %1385 = vmatprep.subr.bf16.mxu0 0
        %1386 = vmatpush1.bf16.msra.mxu0 0
        %1387 = vmatprep.subr.bf16.mxu0 0
        %1388 = vmatpush1.bf16.msra.mxu0 0
        %1389 = vmatprep.subr.bf16.mxu0 0
        %1390 = vmatpush1.bf16.msra.mxu0 0
        %1391 = vmatprep.subr.bf16.mxu0 0
        %1392 = vmatpush1.bf16.msra.mxu0 0
        %1393 = vmatprep.subr.bf16.mxu0 0
        %1394 = vmatpush1.bf16.msra.mxu0 0
        %1395 = vmatprep.mubr.bf16.mxu0 0
        %1396 = vmatmul.mubr.bf16.gmra.mrb[0].mxu0 %v1301
        %v1397 = vpop.f32.mrb[0].mxu0
        %v1398 = vadd.f32 0.0, %v1397
        %v1399 = vpop.f32.mrb[0].mxu0
        %v1400 = vpop.f32.mrb[0].mxu0
        %v1401 = vadd.f32 0.0, %v1400
        %v1402 = vpop.f32.mrb[0].mxu0
        %1403 = vmatprep.mubr.bf16.mxu0 0
        %1404 = vmatmul.mubr.bf16.gmra.mrb[0].mxu0 %v1303
        %v1405 = vpop.f32.mrb[0].mxu0
        %v1406 = vadd.f32 0.0, %v1405
        %v1407 = vpop.f32.mrb[0].mxu0
        %v1408 = vpop.f32.mrb[0].mxu0
        %v1409 = vadd.f32 0.0, %v1408
        %v1410 = vpop.f32.mrb[0].mxu0
        %1411 = vmatprep.mubr.bf16.mxu0 0
        %1412 = vmatmul.mubr.bf16.gmra.mrb[0].mxu0 %v1305
        %v1413 = vpop.f32.mrb[0].mxu0
        %v1414 = vadd.f32 0.0, %v1413
        %v1415 = vpop.f32.mrb[0].mxu0
        %v1416 = vpop.f32.mrb[0].mxu0
        %v1417 = vadd.f32 0.0, %v1416
        %v1418 = vpop.f32.mrb[0].mxu0
        %1419 = vmatprep.mubr.bf16.mxu0 0
        %1420 = vmatmul.mubr.bf16.gmra.mrb[0].mxu0 %v1307
        %v1421 = vpop.f32.mrb[0].mxu0
        %v1422 = vadd.f32 0.0, %v1421
        %v1423 = vpop.f32.mrb[0].mxu0
        %v1424 = vpop.f32.mrb[0].mxu0
        %v1425 = vadd.f32 0.0, %v1424
        %v1426 = vpop.f32.mrb[0].mxu0
        %1427 = vmatprep.mubr.bf16.mxu0 0
        %1428 = vmatmul.mubr.bf16.gmra.mrb[0].mxu0 %v1309
        %v1429 = vpop.f32.mrb[0].mxu0
        %v1430 = vadd.f32 0.0, %v1429
        %v1431 = vpop.f32.mrb[0].mxu0
        %v1432 = vpop.f32.mrb[0].mxu0
        %v1433 = vadd.f32 0.0, %v1432
        %v1434 = vpop.f32.mrb[0].mxu0
        %1435 = vdwg.mxu0
        %v1436 = vld [vmem:[#allocation2] sm:$0xff]
        %v1437 = vld [vmem:[#allocation2 + $0x8] sm:$0xff]
        %v1438 = vld [vmem:[#allocation2 + $0x10] sm:$0xff]
        %v1439 = vld [vmem:[#allocation2 + $0x18] sm:$0xff]
        %v1440 = vld [vmem:[#allocation2 + $0x20] sm:$0xff]
        %v1441 = vld [vmem:[#allocation2 + $0x28] sm:$0xff]
        %v1442 = vld [vmem:[#allocation2 + $0x30] sm:$0xff]
        %v1443 = vld [vmem:[#allocation2 + $0x38] sm:$0xff]
        %v1444 = vld [vmem:[#allocation2 + $0x40] sm:$0xff]
        %v1445 = vld [vmem:[#allocation2 + $0x48] sm:$0xff]
        %v1446 = vadd.f32 %v1436, %v1398
        %v1447 = vadd.f32 %v1437, %v1401
        %v1448 = vadd.f32 %v1438, %v1406
        %v1449 = vadd.f32 %v1439, %v1409
        %v1450 = vadd.f32 %v1440, %v1414
        %v1451 = vadd.f32 %v1441, %v1417
        %v1452 = vadd.f32 %v1442, %v1422
        %v1453 = vadd.f32 %v1443, %v1425
        %v1454 = vadd.f32 %v1444, %v1430
        %v1455 = vadd.f32 %v1445, %v1433
        %1456 = vst [vmem:[#allocation2] sm:$0xff] %v1446
        %1457 = vst [vmem:[#allocation2 + $0x8] sm:$0xff] %v1447
        %1458 = vst [vmem:[#allocation2 + $0x10] sm:$0xff] %v1448
        %1459 = vst [vmem:[#allocation2 + $0x18] sm:$0xff] %v1449
        %1460 = vst [vmem:[#allocation2 + $0x20] sm:$0xff] %v1450
        %1461 = vst [vmem:[#allocation2 + $0x28] sm:$0xff] %v1451
        %1462 = vst [vmem:[#allocation2 + $0x30] sm:$0xff] %v1452
        %1463 = vst [vmem:[#allocation2 + $0x38] sm:$0xff] %v1453
        %1464 = vst [vmem:[#allocation2 + $0x40] sm:$0xff] %v1454
        %1465 = vst [vmem:[#allocation2 + $0x48] sm:$0xff] %v1455
        %v1466 = vld [vmem:[%s312 + $0x58] sm:$0xc]
        %v1467 = vld [vmem:[%s312 + $0x5c] sm:$0xf]
        %v1468 = vld [vmem:[%s312 + $0x60] sm:$0xf]
        %v1469 = vld [vmem:[%s312 + $0x64] sm:$0xf]
        %v1470 = vld [vmem:[%s312 + $0x68] sm:$0xf]
        %v1471 = vld [vmem:[%s312 + $0x6c] sm:$0xf]
        %v1472 = vld [vmem:[%s312 + $0x70] sm:$0xf]
        %v1473 = vld [vmem:[%s312 + $0x74] sm:$0xf]
        %v1474 = vld [vmem:[%s312 + $0x78] sm:$0xf]
        %v1475 = vld [vmem:[%s312 + $0x7c] sm:$0xf]
        %v1476 = vld [vmem:[%s312 + $0x80] sm:$0x7]
        %v1477 = vld [vmem:[#allocation7 + $0x140] sm:$0xf]
        %v1478 = vld [vmem:[#allocation7 + $0x144] sm:$0xf]
        %v1479 = vld [vmem:[#allocation7 + $0x148] sm:$0xf]
        %v1480 = vld [vmem:[#allocation7 + $0x14c] sm:$0xf]
        %v1481 = vld [vmem:[#allocation7 + $0x150] sm:$0xf]
        %v1482 = vld [vmem:[#allocation7 + $0x154] sm:$0xf]
        %v1483 = vld [vmem:[#allocation7 + $0x158] sm:$0xf]
        %v1484 = vld [vmem:[#allocation7 + $0x15c] sm:$0xf]
        %v1485 = vld [vmem:[#allocation7 + $0x160] sm:$0xf]
        %v1486 = vld [vmem:[#allocation7 + $0x164] sm:$0xf]
        %v1487 = vld [vmem:[#allocation7 + $0x168] sm:$0xf]
        %v1488 = vld [vmem:[#allocation7 + $0x16c] sm:$0xf]
        %v1489 = vld [vmem:[#allocation7 + $0x170] sm:$0xf]
        %v1490 = vld [vmem:[#allocation7 + $0x174] sm:$0xf]
        %v1491 = vld [vmem:[#allocation7 + $0x178] sm:$0xf]
        %v1492 = vld [vmem:[#allocation7 + $0x17c] sm:$0xf]
        %v1504 = vunpack.c.l.b16 %v1466
        %v1505 = vunpack.c.l.b16 %v1467
        %v1506 = vunpack.c.l.b16 %v1468
        %v1507 = vunpack.c.l.b16 %v1469
        %v1508 = vunpack.c.l.b16 %v1470
        %v1509 = vunpack.c.l.b16 %v1471
        %v1510 = vunpack.c.l.b16 %v1472
        %v1511 = vunpack.c.l.b16 %v1473
        %v1512 = vunpack.c.l.b16 %v1474
        %v1513 = vunpack.c.l.b16 %v1475
        %v1514 = vunpack.c.l.b16 %v1476
        %v1515 = vpack.c.b16 %v1505, %v1504
        %v1516 = vpack.c.b16 %v1507, %v1506
        %v1517 = vpack.c.b16 %v1509, %v1508
        %v1518 = vpack.c.b16 %v1511, %v1510
        %v1519 = vpack.c.b16 %v1513, %v1512
        %v1520 = vpack.c.b16 %v1514, %v1514
        %vm1521 = vsmask.f32 5376
        %v1523 = vshrl.u32 %v1515, 16
        %v1525 = vrot.slane %v1523, 2
        %v1526 = vshll.u32 %v1515, 16
        %v1528 = vrot.slane %v1526, 3
        %v1529 = vor.u32 %v1525, %v1528
        %v1531 = vshrl.u32 %v1516, 16
        %v1533 = vrot.slane %v1531, 2
        %v1534 = vshll.u32 %v1516, 16
        %v1536 = vrot.slane %v1534, 3
        %v1537 = vor.u32 %v1533, %v1536
        %v1538 = vsel %vm1521, %v1529, %v1537
        %v1540 = vshrl.u32 %v1517, 16
        %v1542 = vrot.slane %v1540, 2
        %v1543 = vshll.u32 %v1517, 16
        %v1545 = vrot.slane %v1543, 3
        %v1546 = vor.u32 %v1542, %v1545
        %v1547 = vsel %vm1521, %v1537, %v1546
        %v1549 = vshrl.u32 %v1518, 16
        %v1551 = vrot.slane %v1549, 2
        %v1552 = vshll.u32 %v1518, 16
        %v1554 = vrot.slane %v1552, 3
        %v1555 = vor.u32 %v1551, %v1554
        %v1556 = vsel %vm1521, %v1546, %v1555
        %v1558 = vshrl.u32 %v1519, 16
        %v1560 = vrot.slane %v1558, 2
        %v1561 = vshll.u32 %v1519, 16
        %v1563 = vrot.slane %v1561, 3
        %v1564 = vor.u32 %v1560, %v1563
        %v1565 = vsel %vm1521, %v1555, %v1564
        %v1567 = vshrl.u32 %v1520, 16
        %v1569 = vrot.slane %v1567, 2
        %v1570 = vshll.u32 %v1520, 16
        %v1572 = vrot.slane %v1570, 3
        %v1573 = vor.u32 %v1569, %v1572
        %v1574 = vsel %vm1521, %v1564, %v1573
        %v1596 = vunpack.c.l.b16 %v1477
        %v1597 = vunpack.c.l.b16 %v1478
        %v1598 = vunpack.c.l.b16 %v1479
        %v1599 = vunpack.c.l.b16 %v1480
        %v1600 = vunpack.c.l.b16 %v1481
        %v1601 = vunpack.c.l.b16 %v1482
        %v1602 = vunpack.c.l.b16 %v1483
        %v1603 = vunpack.c.l.b16 %v1484
        %v1604 = vunpack.c.l.b16 %v1485
        %v1605 = vunpack.c.l.b16 %v1486
        %v1606 = vunpack.c.l.b16 %v1487
        %v1607 = vunpack.c.l.b16 %v1488
        %v1608 = vunpack.c.l.b16 %v1489
        %v1609 = vunpack.c.l.b16 %v1490
        %v1610 = vunpack.c.l.b16 %v1491
        %v1611 = vunpack.c.l.b16 %v1492
        %v1612 = vpack.c.b16 %v1597, %v1596
        %v1613 = vpack.c.b16 %v1599, %v1598
        %v1614 = vpack.c.b16 %v1601, %v1600
        %v1615 = vpack.c.b16 %v1603, %v1602
        %v1616 = vpack.c.b16 %v1605, %v1604
        %v1617 = vpack.c.b16 %v1607, %v1606
        %v1618 = vpack.c.b16 %v1609, %v1608
        %v1619 = vpack.c.b16 %v1611, %v1610
        %1628 = vmatprep.subr.bf16.mxu0 0
        %1629 = vmatpush1.bf16.msra.mxu0 %v1612
        %1630 = vmatprep.subr.bf16.mxu0 0
        %1631 = vmatpush1.bf16.msra.mxu0 %v1613
        %1632 = vmatprep.subr.bf16.mxu0 0
        %1633 = vmatpush1.bf16.msra.mxu0 %v1614
        %1634 = vmatprep.subr.bf16.mxu0 0
        %1635 = vmatpush1.bf16.msra.mxu0 %v1615
        %1636 = vmatprep.subr.bf16.mxu0 0
        %1637 = vmatpush1.bf16.msra.mxu0 %v1616
        %1638 = vmatprep.subr.bf16.mxu0 0
        %1639 = vmatpush1.bf16.msra.mxu0 %v1617
        %1640 = vmatprep.subr.bf16.mxu0 0
        %1641 = vmatpush1.bf16.msra.mxu0 %v1618
        %1642 = vmatprep.subr.bf16.mxu0 0
        %1643 = vmatpush1.bf16.msra.mxu0 %v1619
        %1644 = vmatprep.subr.bf16.mxu0 0
        %1645 = vmatpush1.bf16.msra.mxu0 0
        %1646 = vmatprep.subr.bf16.mxu0 0
        %1647 = vmatpush1.bf16.msra.mxu0 0
        %1648 = vmatprep.subr.bf16.mxu0 0
        %1649 = vmatpush1.bf16.msra.mxu0 0
        %1650 = vmatprep.subr.bf16.mxu0 0
        %1651 = vmatpush1.bf16.msra.mxu0 0
        %1652 = vmatprep.subr.bf16.mxu0 0
        %1653 = vmatpush1.bf16.msra.mxu0 0
        %1654 = vmatprep.subr.bf16.mxu0 0
        %1655 = vmatpush1.bf16.msra.mxu0 0
        %1656 = vmatprep.subr.bf16.mxu0 0
        %1657 = vmatpush1.bf16.msra.mxu0 0
        %1658 = vmatprep.subr.bf16.mxu0 0
        %1659 = vmatpush1.bf16.msra.mxu0 0
        %1660 = vmatprep.mubr.bf16.mxu0 0
        %1661 = vmatmul.mubr.bf16.gmra.mrb[0].mxu0 %v1538
        %v1662 = vpop.f32.mrb[0].mxu0
        %v1663 = vadd.f32 0.0, %v1662
        %v1664 = vpop.f32.mrb[0].mxu0
        %v1665 = vpop.f32.mrb[0].mxu0
        %v1666 = vadd.f32 0.0, %v1665
        %v1667 = vpop.f32.mrb[0].mxu0
        %1668 = vmatprep.mubr.bf16.mxu0 0
        %1669 = vmatmul.mubr.bf16.gmra.mrb[0].mxu0 %v1547
        %v1670 = vpop.f32.mrb[0].mxu0
        %v1671 = vadd.f32 0.0, %v1670
        %v1672 = vpop.f32.mrb[0].mxu0
        %v1673 = vpop.f32.mrb[0].mxu0
        %v1674 = vadd.f32 0.0, %v1673
        %v1675 = vpop.f32.mrb[0].mxu0
        %1676 = vmatprep.mubr.bf16.mxu0 0
        %1677 = vmatmul.mubr.bf16.gmra.mrb[0].mxu0 %v1556
        %v1678 = vpop.f32.mrb[0].mxu0
        %v1679 = vadd.f32 0.0, %v1678
        %v1680 = vpop.f32.mrb[0].mxu0
        %v1681 = vpop.f32.mrb[0].mxu0
        %v1682 = vadd.f32 0.0, %v1681
        %v1683 = vpop.f32.mrb[0].mxu0
        %1684 = vmatprep.mubr.bf16.mxu0 0
        %1685 = vmatmul.mubr.bf16.gmra.mrb[0].mxu0 %v1565
        %v1686 = vpop.f32.mrb[0].mxu0
        %v1687 = vadd.f32 0.0, %v1686
        %v1688 = vpop.f32.mrb[0].mxu0
        %v1689 = vpop.f32.mrb[0].mxu0
        %v1690 = vadd.f32 0.0, %v1689
        %v1691 = vpop.f32.mrb[0].mxu0
        %1692 = vmatprep.mubr.bf16.mxu0 0
        %1693 = vmatmul.mubr.bf16.gmra.mrb[0].mxu0 %v1574
        %v1694 = vpop.f32.mrb[0].mxu0
        %v1695 = vadd.f32 0.0, %v1694
        %v1696 = vpop.f32.mrb[0].mxu0
        %v1697 = vpop.f32.mrb[0].mxu0
        %v1698 = vadd.f32 0.0, %v1697
        %v1699 = vpop.f32.mrb[0].mxu0
        %1700 = vdwg.mxu0
        %v1701 = vld [vmem:[#allocation2] sm:$0xff]
        %v1702 = vld [vmem:[#allocation2 + $0x8] sm:$0xff]
        %v1703 = vld [vmem:[#allocation2 + $0x10] sm:$0xff]
        %v1704 = vld [vmem:[#allocation2 + $0x18] sm:$0xff]
        %v1705 = vld [vmem:[#allocation2 + $0x20] sm:$0xff]
        %v1706 = vld [vmem:[#allocation2 + $0x28] sm:$0xff]
        %v1707 = vld [vmem:[#allocation2 + $0x30] sm:$0xff]
        %v1708 = vld [vmem:[#allocation2 + $0x38] sm:$0xff]
        %v1709 = vld [vmem:[#allocation2 + $0x40] sm:$0xff]
        %v1710 = vld [vmem:[#allocation2 + $0x48] sm:$0xff]
        %v1711 = vadd.f32 %v1701, %v1663
        %v1712 = vadd.f32 %v1702, %v1666
        %v1713 = vadd.f32 %v1703, %v1671
        %v1714 = vadd.f32 %v1704, %v1674
        %v1715 = vadd.f32 %v1705, %v1679
        %v1716 = vadd.f32 %v1706, %v1682
        %v1717 = vadd.f32 %v1707, %v1687
        %v1718 = vadd.f32 %v1708, %v1690
        %v1719 = vadd.f32 %v1709, %v1695
        %v1720 = vadd.f32 %v1710, %v1698
        %1721 = vst [vmem:[#allocation2] sm:$0xff] %v1711
        %1722 = vst [vmem:[#allocation2 + $0x8] sm:$0xff] %v1712
        %1723 = vst [vmem:[#allocation2 + $0x10] sm:$0xff] %v1713
        %1724 = vst [vmem:[#allocation2 + $0x18] sm:$0xff] %v1714
        %1725 = vst [vmem:[#allocation2 + $0x20] sm:$0xff] %v1715
        %1726 = vst [vmem:[#allocation2 + $0x28] sm:$0xff] %v1716
        %1727 = vst [vmem:[#allocation2 + $0x30] sm:$0xff] %v1717
        %1728 = vst [vmem:[#allocation2 + $0x38] sm:$0xff] %v1718
        %1729 = vst [vmem:[#allocation2 + $0x40] sm:$0xff] %v1719
        %1730 = vst [vmem:[#allocation2 + $0x48] sm:$0xff] %v1720
        %v1731 = vld [vmem:[%s312 + $0x4] sm:$0xe]
        %v1732 = vld [vmem:[%s312 + $0x8] sm:$0xf]
        %v1733 = vld [vmem:[%s312 + $0xc] sm:$0xf]
        %v1734 = vld [vmem:[%s312 + $0x10] sm:$0xf]
        %v1735 = vld [vmem:[%s312 + $0x14] sm:$0xf]
        %v1736 = vld [vmem:[%s312 + $0x18] sm:$0xf]
        %v1737 = vld [vmem:[%s312 + $0x1c] sm:$0xf]
        %v1738 = vld [vmem:[%s312 + $0x20] sm:$0xf]
        %v1739 = vld [vmem:[%s312 + $0x24] sm:$0xf]
        %v1740 = vld [vmem:[%s312 + $0x28] sm:$0xf]
        %v1741 = vld [vmem:[%s312 + $0x2c] sm:$0x1]
        %v1742 = vld [vmem:[#allocation7 + $0x180] sm:$0xf]
        %v1743 = vld [vmem:[#allocation7 + $0x184] sm:$0xf]
        %v1744 = vld [vmem:[#allocation7 + $0x188] sm:$0xf]
        %v1745 = vld [vmem:[#allocation7 + $0x18c] sm:$0xf]
        %v1746 = vld [vmem:[#allocation7 + $0x190] sm:$0xf]
        %v1747 = vld [vmem:[#allocation7 + $0x194] sm:$0xf]
        %v1748 = vld [vmem:[#allocation7 + $0x198] sm:$0xf]
        %v1749 = vld [vmem:[#allocation7 + $0x19c] sm:$0xf]
        %v1750 = vld [vmem:[#allocation7 + $0x1a0] sm:$0xf]
        %v1751 = vld [vmem:[#allocation7 + $0x1a4] sm:$0xf]
        %v1752 = vld [vmem:[#allocation7 + $0x1a8] sm:$0xf]
        %v1753 = vld [vmem:[#allocation7 + $0x1ac] sm:$0xf]
        %v1754 = vld [vmem:[#allocation7 + $0x1b0] sm:$0xf]
        %v1755 = vld [vmem:[#allocation7 + $0x1b4] sm:$0xf]
        %v1756 = vld [vmem:[#allocation7 + $0x1b8] sm:$0xf]
        %v1757 = vld [vmem:[#allocation7 + $0x1bc] sm:$0xf]
        %v1769 = vunpack.c.l.b16 %v1731
        %v1770 = vunpack.c.l.b16 %v1732
        %v1771 = vunpack.c.l.b16 %v1733
        %v1772 = vunpack.c.l.b16 %v1734
        %v1773 = vunpack.c.l.b16 %v1735
        %v1774 = vunpack.c.l.b16 %v1736
        %v1775 = vunpack.c.l.b16 %v1737
        %v1776 = vunpack.c.l.b16 %v1738
        %v1777 = vunpack.c.l.b16 %v1739
        %v1778 = vunpack.c.l.b16 %v1740
        %v1779 = vunpack.c.l.b16 %v1741
        %v1780 = vpack.c.b16 %v1770, %v1769
        %v1781 = vpack.c.b16 %v1772, %v1771
        %v1782 = vpack.c.b16 %v1774, %v1773
        %v1783 = vpack.c.b16 %v1776, %v1775
        %v1784 = vpack.c.b16 %v1778, %v1777
        %v1785 = vpack.c.b16 %v1779, %v1779
        %v1786 = vrot.slane %v1780, 1
        %v1787 = vrot.slane %v1781, 1
        %v1788 = vsel %vm596, %v1786, %v1787
        %v1789 = vrot.slane %v1782, 1
        %v1790 = vsel %vm596, %v1787, %v1789
        %v1791 = vrot.slane %v1783, 1
        %v1792 = vsel %vm596, %v1789, %v1791
        %v1793 = vrot.slane %v1784, 1
        %v1794 = vsel %vm596, %v1791, %v1793
        %v1795 = vrot.slane %v1785, 1
        %v1796 = vsel %vm596, %v1793, %v1795
        %v1818 = vunpack.c.l.b16 %v1742
        %v1819 = vunpack.c.l.b16 %v1743
        %v1820 = vunpack.c.l.b16 %v1744
        %v1821 = vunpack.c.l.b16 %v1745
        %v1822 = vunpack.c.l.b16 %v1746
        %v1823 = vunpack.c.l.b16 %v1747
        %v1824 = vunpack.c.l.b16 %v1748
        %v1825 = vunpack.c.l.b16 %v1749
        %v1826 = vunpack.c.l.b16 %v1750
        %v1827 = vunpack.c.l.b16 %v1751
        %v1828 = vunpack.c.l.b16 %v1752
        %v1829 = vunpack.c.l.b16 %v1753
        %v1830 = vunpack.c.l.b16 %v1754
        %v1831 = vunpack.c.l.b16 %v1755
        %v1832 = vunpack.c.l.b16 %v1756
        %v1833 = vunpack.c.l.b16 %v1757
        %v1834 = vpack.c.b16 %v1819, %v1818
        %v1835 = vpack.c.b16 %v1821, %v1820
        %v1836 = vpack.c.b16 %v1823, %v1822
        %v1837 = vpack.c.b16 %v1825, %v1824
        %v1838 = vpack.c.b16 %v1827, %v1826
        %v1839 = vpack.c.b16 %v1829, %v1828
        %v1840 = vpack.c.b16 %v1831, %v1830
        %v1841 = vpack.c.b16 %v1833, %v1832
        %1850 = vmatprep.subr.bf16.mxu0 0
        %1851 = vmatpush1.bf16.msra.mxu0 %v1834
        %1852 = vmatprep.subr.bf16.mxu0 0
        %1853 = vmatpush1.bf16.msra.mxu0 %v1835
        %1854 = vmatprep.subr.bf16.mxu0 0
        %1855 = vmatpush1.bf16.msra.mxu0 %v1836
        %1856 = vmatprep.subr.bf16.mxu0 0
        %1857 = vmatpush1.bf16.msra.mxu0 %v1837
        %1858 = vmatprep.subr.bf16.mxu0 0
        %1859 = vmatpush1.bf16.msra.mxu0 %v1838
        %1860 = vmatprep.subr.bf16.mxu0 0
        %1861 = vmatpush1.bf16.msra.mxu0 %v1839
        %1862 = vmatprep.subr.bf16.mxu0 0
        %1863 = vmatpush1.bf16.msra.mxu0 %v1840
        %1864 = vmatprep.subr.bf16.mxu0 0
        %1865 = vmatpush1.bf16.msra.mxu0 %v1841
        %1866 = vmatprep.subr.bf16.mxu0 0
        %1867 = vmatpush1.bf16.msra.mxu0 0
        %1868 = vmatprep.subr.bf16.mxu0 0
        %1869 = vmatpush1.bf16.msra.mxu0 0
        %1870 = vmatprep.subr.bf16.mxu0 0
        %1871 = vmatpush1.bf16.msra.mxu0 0
        %1872 = vmatprep.subr.bf16.mxu0 0
        %1873 = vmatpush1.bf16.msra.mxu0 0
        %1874 = vmatprep.subr.bf16.mxu0 0
        %1875 = vmatpush1.bf16.msra.mxu0 0
        %1876 = vmatprep.subr.bf16.mxu0 0
        %1877 = vmatpush1.bf16.msra.mxu0 0
        %1878 = vmatprep.subr.bf16.mxu0 0
        %1879 = vmatpush1.bf16.msra.mxu0 0
        %1880 = vmatprep.subr.bf16.mxu0 0
        %1881 = vmatpush1.bf16.msra.mxu0 0
        %1882 = vmatprep.mubr.bf16.mxu0 0
        %1883 = vmatmul.mubr.bf16.gmra.mrb[0].mxu0 %v1788
        %v1884 = vpop.f32.mrb[0].mxu0
        %v1885 = vadd.f32 0.0, %v1884
        %v1886 = vpop.f32.mrb[0].mxu0
        %v1887 = vpop.f32.mrb[0].mxu0
        %v1888 = vadd.f32 0.0, %v1887
        %v1889 = vpop.f32.mrb[0].mxu0
        %1890 = vmatprep.mubr.bf16.mxu0 0
        %1891 = vmatmul.mubr.bf16.gmra.mrb[0].mxu0 %v1790
        %v1892 = vpop.f32.mrb[0].mxu0
        %v1893 = vadd.f32 0.0, %v1892
        %v1894 = vpop.f32.mrb[0].mxu0
        %v1895 = vpop.f32.mrb[0].mxu0
        %v1896 = vadd.f32 0.0, %v1895
        %v1897 = vpop.f32.mrb[0].mxu0
        %1898 = vmatprep.mubr.bf16.mxu0 0
        %1899 = vmatmul.mubr.bf16.gmra.mrb[0].mxu0 %v1792
        %v1900 = vpop.f32.mrb[0].mxu0
        %v1901 = vadd.f32 0.0, %v1900
        %v1902 = vpop.f32.mrb[0].mxu0
        %v1903 = vpop.f32.mrb[0].mxu0
        %v1904 = vadd.f32 0.0, %v1903
        %v1905 = vpop.f32.mrb[0].mxu0
        %1906 = vmatprep.mubr.bf16.mxu0 0
        %1907 = vmatmul.mubr.bf16.gmra.mrb[0].mxu0 %v1794
        %v1908 = vpop.f32.mrb[0].mxu0
        %v1909 = vadd.f32 0.0, %v1908
        %v1910 = vpop.f32.mrb[0].mxu0
        %v1911 = vpop.f32.mrb[0].mxu0
        %v1912 = vadd.f32 0.0, %v1911
        %v1913 = vpop.f32.mrb[0].mxu0
        %1914 = vmatprep.mubr.bf16.mxu0 0
        %1915 = vmatmul.mubr.bf16.gmra.mrb[0].mxu0 %v1796
        %v1916 = vpop.f32.mrb[0].mxu0
        %v1917 = vadd.f32 0.0, %v1916
        %v1918 = vpop.f32.mrb[0].mxu0
        %v1919 = vpop.f32.mrb[0].mxu0
        %v1920 = vadd.f32 0.0, %v1919
        %v1921 = vpop.f32.mrb[0].mxu0
        %1922 = vdwg.mxu0
        %v1923 = vld [vmem:[#allocation2] sm:$0xff]
        %v1924 = vld [vmem:[#allocation2 + $0x8] sm:$0xff]
        %v1925 = vld [vmem:[#allocation2 + $0x10] sm:$0xff]
        %v1926 = vld [vmem:[#allocation2 + $0x18] sm:$0xff]
        %v1927 = vld [vmem:[#allocation2 + $0x20] sm:$0xff]
        %v1928 = vld [vmem:[#allocation2 + $0x28] sm:$0xff]
        %v1929 = vld [vmem:[#allocation2 + $0x30] sm:$0xff]
        %v1930 = vld [vmem:[#allocation2 + $0x38] sm:$0xff]
        %v1931 = vld [vmem:[#allocation2 + $0x40] sm:$0xff]
        %v1932 = vld [vmem:[#allocation2 + $0x48] sm:$0xff]
        %v1933 = vadd.f32 %v1923, %v1885
        %v1934 = vadd.f32 %v1924, %v1888
        %v1935 = vadd.f32 %v1925, %v1893
        %v1936 = vadd.f32 %v1926, %v1896
        %v1937 = vadd.f32 %v1927, %v1901
        %v1938 = vadd.f32 %v1928, %v1904
        %v1939 = vadd.f32 %v1929, %v1909
        %v1940 = vadd.f32 %v1930, %v1912
        %v1941 = vadd.f32 %v1931, %v1917
        %v1942 = vadd.f32 %v1932, %v1920
        %1943 = vst [vmem:[#allocation2] sm:$0xff] %v1933
        %1944 = vst [vmem:[#allocation2 + $0x8] sm:$0xff] %v1934
        %1945 = vst [vmem:[#allocation2 + $0x10] sm:$0xff] %v1935
        %1946 = vst [vmem:[#allocation2 + $0x18] sm:$0xff] %v1936
        %1947 = vst [vmem:[#allocation2 + $0x20] sm:$0xff] %v1937
        %1948 = vst [vmem:[#allocation2 + $0x28] sm:$0xff] %v1938
        %1949 = vst [vmem:[#allocation2 + $0x30] sm:$0xff] %v1939
        %1950 = vst [vmem:[#allocation2 + $0x38] sm:$0xff] %v1940
        %1951 = vst [vmem:[#allocation2 + $0x40] sm:$0xff] %v1941
        %1952 = vst [vmem:[#allocation2 + $0x48] sm:$0xff] %v1942
        %v1953 = vld [vmem:[%s312 + $0x30] sm:$0xc]
        %v1954 = vld [vmem:[%s312 + $0x34] sm:$0xf]
        %v1955 = vld [vmem:[%s312 + $0x38] sm:$0xf]
        %v1956 = vld [vmem:[%s312 + $0x3c] sm:$0xf]
        %v1957 = vld [vmem:[%s312 + $0x40] sm:$0xf]
        %v1958 = vld [vmem:[%s312 + $0x44] sm:$0xf]
        %v1959 = vld [vmem:[%s312 + $0x48] sm:$0xf]
        %v1960 = vld [vmem:[%s312 + $0x4c] sm:$0xf]
        %v1961 = vld [vmem:[%s312 + $0x50] sm:$0xf]
        %v1962 = vld [vmem:[%s312 + $0x54] sm:$0xf]
        %v1963 = vld [vmem:[%s312 + $0x58] sm:$0x3]
        %v1964 = vld [vmem:[#allocation7 + $0x1c0] sm:$0xf]
        %v1965 = vld [vmem:[#allocation7 + $0x1c4] sm:$0xf]
        %v1966 = vld [vmem:[#allocation7 + $0x1c8] sm:$0xf]
        %v1967 = vld [vmem:[#allocation7 + $0x1cc] sm:$0xf]
        %v1968 = vld [vmem:[#allocation7 + $0x1d0] sm:$0xf]
        %v1969 = vld [vmem:[#allocation7 + $0x1d4] sm:$0xf]
        %v1970 = vld [vmem:[#allocation7 + $0x1d8] sm:$0xf]
        %v1971 = vld [vmem:[#allocation7 + $0x1dc] sm:$0xf]
        %v1972 = vld [vmem:[#allocation7 + $0x1e0] sm:$0xf]
        %v1973 = vld [vmem:[#allocation7 + $0x1e4] sm:$0xf]
        %v1974 = vld [vmem:[#allocation7 + $0x1e8] sm:$0xf]
        %v1975 = vld [vmem:[#allocation7 + $0x1ec] sm:$0xf]
        %v1976 = vld [vmem:[#allocation7 + $0x1f0] sm:$0xf]
        %v1977 = vld [vmem:[#allocation7 + $0x1f4] sm:$0xf]
        %v1978 = vld [vmem:[#allocation7 + $0x1f8] sm:$0xf]
        %v1979 = vld [vmem:[#allocation7 + $0x1fc] sm:$0xf]
        %v1991 = vunpack.c.l.b16 %v1953
        %v1992 = vunpack.c.l.b16 %v1954
        %v1993 = vunpack.c.l.b16 %v1955
        %v1994 = vunpack.c.l.b16 %v1956
        %v1995 = vunpack.c.l.b16 %v1957
        %v1996 = vunpack.c.l.b16 %v1958
        %v1997 = vunpack.c.l.b16 %v1959
        %v1998 = vunpack.c.l.b16 %v1960
        %v1999 = vunpack.c.l.b16 %v1961
        %v2000 = vunpack.c.l.b16 %v1962
        %v2001 = vunpack.c.l.b16 %v1963
        %v2002 = vpack.c.b16 %v1992, %v1991
        %v2003 = vpack.c.b16 %v1994, %v1993
        %v2004 = vpack.c.b16 %v1996, %v1995
        %v2005 = vpack.c.b16 %v1998, %v1997
        %v2006 = vpack.c.b16 %v2000, %v1999
        %v2007 = vpack.c.b16 %v2001, %v2001
        %v2008 = vrot.slane %v2002, 2
        %v2009 = vrot.slane %v2003, 2
        %v2010 = vsel %vm1075, %v2008, %v2009
        %v2011 = vrot.slane %v2004, 2
        %v2012 = vsel %vm1075, %v2009, %v2011
        %v2013 = vrot.slane %v2005, 2
        %v2014 = vsel %vm1075, %v2011, %v2013
        %v2015 = vrot.slane %v2006, 2
        %v2016 = vsel %vm1075, %v2013, %v2015
        %v2017 = vrot.slane %v2007, 2
        %v2018 = vsel %vm1075, %v2015, %v2017
        %v2040 = vunpack.c.l.b16 %v1964
        %v2041 = vunpack.c.l.b16 %v1965
        %v2042 = vunpack.c.l.b16 %v1966
        %v2043 = vunpack.c.l.b16 %v1967
        %v2044 = vunpack.c.l.b16 %v1968
        %v2045 = vunpack.c.l.b16 %v1969
        %v2046 = vunpack.c.l.b16 %v1970
        %v2047 = vunpack.c.l.b16 %v1971
        %v2048 = vunpack.c.l.b16 %v1972
        %v2049 = vunpack.c.l.b16 %v1973
        %v2050 = vunpack.c.l.b16 %v1974
        %v2051 = vunpack.c.l.b16 %v1975
        %v2052 = vunpack.c.l.b16 %v1976
        %v2053 = vunpack.c.l.b16 %v1977
        %v2054 = vunpack.c.l.b16 %v1978
        %v2055 = vunpack.c.l.b16 %v1979
        %v2056 = vpack.c.b16 %v2041, %v2040
        %v2057 = vpack.c.b16 %v2043, %v2042
        %v2058 = vpack.c.b16 %v2045, %v2044
        %v2059 = vpack.c.b16 %v2047, %v2046
        %v2060 = vpack.c.b16 %v2049, %v2048
        %v2061 = vpack.c.b16 %v2051, %v2050
        %v2062 = vpack.c.b16 %v2053, %v2052
        %v2063 = vpack.c.b16 %v2055, %v2054
        %2072 = vmatprep.subr.bf16.mxu0 0
        %2073 = vmatpush1.bf16.msra.mxu0 %v2056
        %2074 = vmatprep.subr.bf16.mxu0 0
        %2075 = vmatpush1.bf16.msra.mxu0 %v2057
        %2076 = vmatprep.subr.bf16.mxu0 0
        %2077 = vmatpush1.bf16.msra.mxu0 %v2058
        %2078 = vmatprep.subr.bf16.mxu0 0
        %2079 = vmatpush1.bf16.msra.mxu0 %v2059
        %2080 = vmatprep.subr.bf16.mxu0 0
        %2081 = vmatpush1.bf16.msra.mxu0 %v2060
        %2082 = vmatprep.subr.bf16.mxu0 0
        %2083 = vmatpush1.bf16.msra.mxu0 %v2061
        %2084 = vmatprep.subr.bf16.mxu0 0
        %2085 = vmatpush1.bf16.msra.mxu0 %v2062
        %2086 = vmatprep.subr.bf16.mxu0 0
        %2087 = vmatpush1.bf16.msra.mxu0 %v2063
        %2088 = vmatprep.subr.bf16.mxu0 0
        %2089 = vmatpush1.bf16.msra.mxu0 0
        %2090 = vmatprep.subr.bf16.mxu0 0
        %2091 = vmatpush1.bf16.msra.mxu0 0
        %2092 = vmatprep.subr.bf16.mxu0 0
        %2093 = vmatpush1.bf16.msra.mxu0 0
        %2094 = vmatprep.subr.bf16.mxu0 0
        %2095 = vmatpush1.bf16.msra.mxu0 0
        %2096 = vmatprep.subr.bf16.mxu0 0
        %2097 = vmatpush1.bf16.msra.mxu0 0
        %2098 = vmatprep.subr.bf16.mxu0 0
        %2099 = vmatpush1.bf16.msra.mxu0 0
        %2100 = vmatprep.subr.bf16.mxu0 0
        %2101 = vmatpush1.bf16.msra.mxu0 0
        %2102 = vmatprep.subr.bf16.mxu0 0
        %2103 = vmatpush1.bf16.msra.mxu0 0
        %2104 = vmatprep.mubr.bf16.mxu0 0
        %2105 = vmatmul.mubr.bf16.gmra.mrb[0].mxu0 %v2010
        %v2106 = vpop.f32.mrb[0].mxu0
        %v2107 = vadd.f32 0.0, %v2106
        %v2108 = vpop.f32.mrb[0].mxu0
        %v2109 = vpop.f32.mrb[0].mxu0
        %v2110 = vadd.f32 0.0, %v2109
        %v2111 = vpop.f32.mrb[0].mxu0
        %2112 = vmatprep.mubr.bf16.mxu0 0
        %2113 = vmatmul.mubr.bf16.gmra.mrb[0].mxu0 %v2012
        %v2114 = vpop.f32.mrb[0].mxu0
        %v2115 = vadd.f32 0.0, %v2114
        %v2116 = vpop.f32.mrb[0].mxu0
        %v2117 = vpop.f32.mrb[0].mxu0
        %v2118 = vadd.f32 0.0, %v2117
        %v2119 = vpop.f32.mrb[0].mxu0
        %2120 = vmatprep.mubr.bf16.mxu0 0
        %2121 = vmatmul.mubr.bf16.gmra.mrb[0].mxu0 %v2014
        %v2122 = vpop.f32.mrb[0].mxu0
        %v2123 = vadd.f32 0.0, %v2122
        %v2124 = vpop.f32.mrb[0].mxu0
        %v2125 = vpop.f32.mrb[0].mxu0
        %v2126 = vadd.f32 0.0, %v2125
        %v2127 = vpop.f32.mrb[0].mxu0
        %2128 = vmatprep.mubr.bf16.mxu0 0
        %2129 = vmatmul.mubr.bf16.gmra.mrb[0].mxu0 %v2016
        %v2130 = vpop.f32.mrb[0].mxu0
        %v2131 = vadd.f32 0.0, %v2130
        %v2132 = vpop.f32.mrb[0].mxu0
        %v2133 = vpop.f32.mrb[0].mxu0
        %v2134 = vadd.f32 0.0, %v2133
        %v2135 = vpop.f32.mrb[0].mxu0
        %2136 = vmatprep.mubr.bf16.mxu0 0
        %2137 = vmatmul.mubr.bf16.gmra.mrb[0].mxu0 %v2018
        %v2138 = vpop.f32.mrb[0].mxu0
        %v2139 = vadd.f32 0.0, %v2138
        %v2140 = vpop.f32.mrb[0].mxu0
        %v2141 = vpop.f32.mrb[0].mxu0
        %v2142 = vadd.f32 0.0, %v2141
        %v2143 = vpop.f32.mrb[0].mxu0
        %2144 = vdwg.mxu0
        %v2145 = vld [vmem:[#allocation2] sm:$0xff]
        %v2146 = vld [vmem:[#allocation2 + $0x8] sm:$0xff]
        %v2147 = vld [vmem:[#allocation2 + $0x10] sm:$0xff]
        %v2148 = vld [vmem:[#allocation2 + $0x18] sm:$0xff]
        %v2149 = vld [vmem:[#allocation2 + $0x20] sm:$0xff]
        %v2150 = vld [vmem:[#allocation2 + $0x28] sm:$0xff]
        %v2151 = vld [vmem:[#allocation2 + $0x30] sm:$0xff]
        %v2152 = vld [vmem:[#allocation2 + $0x38] sm:$0xff]
        %v2153 = vld [vmem:[#allocation2 + $0x40] sm:$0xff]
        %v2154 = vld [vmem:[#allocation2 + $0x48] sm:$0xff]
        %v2155 = vadd.f32 %v2145, %v2107
        %v2156 = vadd.f32 %v2146, %v2110
        %v2157 = vadd.f32 %v2147, %v2115
        %v2158 = vadd.f32 %v2148, %v2118
        %v2159 = vadd.f32 %v2149, %v2123
        %v2160 = vadd.f32 %v2150, %v2126
        %v2161 = vadd.f32 %v2151, %v2131
        %v2162 = vadd.f32 %v2152, %v2134
        %v2163 = vadd.f32 %v2153, %v2139
        %v2164 = vadd.f32 %v2154, %v2142
        %2165 = vst [vmem:[#allocation2] sm:$0xff] %v2155
        %2166 = vst [vmem:[#allocation2 + $0x8] sm:$0xff] %v2156
        %2167 = vst [vmem:[#allocation2 + $0x10] sm:$0xff] %v2157
        %2168 = vst [vmem:[#allocation2 + $0x18] sm:$0xff] %v2158
        %2169 = vst [vmem:[#allocation2 + $0x20] sm:$0xff] %v2159
        %2170 = vst [vmem:[#allocation2 + $0x28] sm:$0xff] %v2160
        %2171 = vst [vmem:[#allocation2 + $0x30] sm:$0xff] %v2161
        %2172 = vst [vmem:[#allocation2 + $0x38] sm:$0xff] %v2162
        %2173 = vst [vmem:[#allocation2 + $0x40] sm:$0xff] %v2163
        %2174 = vst [vmem:[#allocation2 + $0x48] sm:$0xff] %v2164
        %v2175 = vld [vmem:[%s312 + $0x4] sm:$0xe]
        %v2176 = vld [vmem:[%s312 + $0x8] sm:$0xf]
        %v2177 = vld [vmem:[%s312 + $0xc] sm:$0xf]
        %v2178 = vld [vmem:[%s312 + $0x10] sm:$0xf]
        %v2179 = vld [vmem:[%s312 + $0x14] sm:$0xf]
        %v2180 = vld [vmem:[%s312 + $0x18] sm:$0xf]
        %v2181 = vld [vmem:[%s312 + $0x1c] sm:$0xf]
        %v2182 = vld [vmem:[%s312 + $0x20] sm:$0xf]
        %v2183 = vld [vmem:[%s312 + $0x24] sm:$0xf]
        %v2184 = vld [vmem:[%s312 + $0x28] sm:$0xf]
        %v2185 = vld [vmem:[%s312 + $0x2c] sm:$0x3]
        %v2186 = vld [vmem:[#allocation7 + $0x200] sm:$0xf]
        %v2187 = vld [vmem:[#allocation7 + $0x204] sm:$0xf]
        %v2188 = vld [vmem:[#allocation7 + $0x208] sm:$0xf]
        %v2189 = vld [vmem:[#allocation7 + $0x20c] sm:$0xf]
        %v2190 = vld [vmem:[#allocation7 + $0x210] sm:$0xf]
        %v2191 = vld [vmem:[#allocation7 + $0x214] sm:$0xf]
        %v2192 = vld [vmem:[#allocation7 + $0x218] sm:$0xf]
        %v2193 = vld [vmem:[#allocation7 + $0x21c] sm:$0xf]
        %v2194 = vld [vmem:[#allocation7 + $0x220] sm:$0xf]
        %v2195 = vld [vmem:[#allocation7 + $0x224] sm:$0xf]
        %v2196 = vld [vmem:[#allocation7 + $0x228] sm:$0xf]
        %v2197 = vld [vmem:[#allocation7 + $0x22c] sm:$0xf]
        %v2198 = vld [vmem:[#allocation7 + $0x230] sm:$0xf]
        %v2199 = vld [vmem:[#allocation7 + $0x234] sm:$0xf]
        %v2200 = vld [vmem:[#allocation7 + $0x238] sm:$0xf]
        %v2201 = vld [vmem:[#allocation7 + $0x23c] sm:$0xf]
        %v2213 = vunpack.c.l.b16 %v2175
        %v2214 = vunpack.c.l.b16 %v2176
        %v2215 = vunpack.c.l.b16 %v2177
        %v2216 = vunpack.c.l.b16 %v2178
        %v2217 = vunpack.c.l.b16 %v2179
        %v2218 = vunpack.c.l.b16 %v2180
        %v2219 = vunpack.c.l.b16 %v2181
        %v2220 = vunpack.c.l.b16 %v2182
        %v2221 = vunpack.c.l.b16 %v2183
        %v2222 = vunpack.c.l.b16 %v2184
        %v2223 = vunpack.c.l.b16 %v2185
        %v2224 = vpack.c.b16 %v2214, %v2213
        %v2225 = vpack.c.b16 %v2216, %v2215
        %v2226 = vpack.c.b16 %v2218, %v2217
        %v2227 = vpack.c.b16 %v2220, %v2219
        %v2228 = vpack.c.b16 %v2222, %v2221
        %v2229 = vpack.c.b16 %v2223, %v2223
        %vm2230 = vsmask.f32 6400
        %v2232 = vshrl.u32 %v2224, 16
        %v2234 = vrot.slane %v2232, 1
        %v2235 = vshll.u32 %v2224, 16
        %v2237 = vrot.slane %v2235, 2
        %v2238 = vor.u32 %v2234, %v2237
        %v2240 = vshrl.u32 %v2225, 16
        %v2242 = vrot.slane %v2240, 1
        %v2243 = vshll.u32 %v2225, 16
        %v2245 = vrot.slane %v2243, 2
        %v2246 = vor.u32 %v2242, %v2245
        %v2247 = vsel %vm2230, %v2238, %v2246
        %v2249 = vshrl.u32 %v2226, 16
        %v2251 = vrot.slane %v2249, 1
        %v2252 = vshll.u32 %v2226, 16
        %v2254 = vrot.slane %v2252, 2
        %v2255 = vor.u32 %v2251, %v2254
        %v2256 = vsel %vm2230, %v2246, %v2255
        %v2258 = vshrl.u32 %v2227, 16
        %v2260 = vrot.slane %v2258, 1
        %v2261 = vshll.u32 %v2227, 16
        %v2263 = vrot.slane %v2261, 2
        %v2264 = vor.u32 %v2260, %v2263
        %v2265 = vsel %vm2230, %v2255, %v2264
        %v2267 = vshrl.u32 %v2228, 16
        %v2269 = vrot.slane %v2267, 1
        %v2270 = vshll.u32 %v2228, 16
        %v2272 = vrot.slane %v2270, 2
        %v2273 = vor.u32 %v2269, %v2272
        %v2274 = vsel %vm2230, %v2264, %v2273
        %v2276 = vshrl.u32 %v2229, 16
        %v2278 = vrot.slane %v2276, 1
        %v2279 = vshll.u32 %v2229, 16
        %v2281 = vrot.slane %v2279, 2
        %v2282 = vor.u32 %v2278, %v2281
        %v2283 = vsel %vm2230, %v2273, %v2282
        %v2305 = vunpack.c.l.b16 %v2186
        %v2306 = vunpack.c.l.b16 %v2187
        %v2307 = vunpack.c.l.b16 %v2188
        %v2308 = vunpack.c.l.b16 %v2189
        %v2309 = vunpack.c.l.b16 %v2190
        %v2310 = vunpack.c.l.b16 %v2191
        %v2311 = vunpack.c.l.b16 %v2192
        %v2312 = vunpack.c.l.b16 %v2193
        %v2313 = vunpack.c.l.b16 %v2194
        %v2314 = vunpack.c.l.b16 %v2195
        %v2315 = vunpack.c.l.b16 %v2196
        %v2316 = vunpack.c.l.b16 %v2197
        %v2317 = vunpack.c.l.b16 %v2198
        %v2318 = vunpack.c.l.b16 %v2199
        %v2319 = vunpack.c.l.b16 %v2200
        %v2320 = vunpack.c.l.b16 %v2201
        %v2321 = vpack.c.b16 %v2306, %v2305
        %v2322 = vpack.c.b16 %v2308, %v2307
        %v2323 = vpack.c.b16 %v2310, %v2309
        %v2324 = vpack.c.b16 %v2312, %v2311
        %v2325 = vpack.c.b16 %v2314, %v2313
        %v2326 = vpack.c.b16 %v2316, %v2315
        %v2327 = vpack.c.b16 %v2318, %v2317
        %v2328 = vpack.c.b16 %v2320, %v2319
        %2337 = vmatprep.subr.bf16.mxu0 0
        %2338 = vmatpush1.bf16.msra.mxu0 %v2321
        %2339 = vmatprep.subr.bf16.mxu0 0
        %2340 = vmatpush1.bf16.msra.mxu0 %v2322
        %2341 = vmatprep.subr.bf16.mxu0 0
        %2342 = vmatpush1.bf16.msra.mxu0 %v2323
        %2343 = vmatprep.subr.bf16.mxu0 0
        %2344 = vmatpush1.bf16.msra.mxu0 %v2324
        %2345 = vmatprep.subr.bf16.mxu0 0
        %2346 = vmatpush1.bf16.msra.mxu0 %v2325
        %2347 = vmatprep.subr.bf16.mxu0 0
        %2348 = vmatpush1.bf16.msra.mxu0 %v2326
        %2349 = vmatprep.subr.bf16.mxu0 0
        %2350 = vmatpush1.bf16.msra.mxu0 %v2327
        %2351 = vmatprep.subr.bf16.mxu0 0
        %2352 = vmatpush1.bf16.msra.mxu0 %v2328
        %2353 = vmatprep.subr.bf16.mxu0 0
        %2354 = vmatpush1.bf16.msra.mxu0 0
        %2355 = vmatprep.subr.bf16.mxu0 0
        %2356 = vmatpush1.bf16.msra.mxu0 0
        %2357 = vmatprep.subr.bf16.mxu0 0
        %2358 = vmatpush1.bf16.msra.mxu0 0
        %2359 = vmatprep.subr.bf16.mxu0 0
        %2360 = vmatpush1.bf16.msra.mxu0 0
        %2361 = vmatprep.subr.bf16.mxu0 0
        %2362 = vmatpush1.bf16.msra.mxu0 0
        %2363 = vmatprep.subr.bf16.mxu0 0
        %2364 = vmatpush1.bf16.msra.mxu0 0
        %2365 = vmatprep.subr.bf16.mxu0 0
        %2366 = vmatpush1.bf16.msra.mxu0 0
        %2367 = vmatprep.subr.bf16.mxu0 0
        %2368 = vmatpush1.bf16.msra.mxu0 0
        %2369 = vmatprep.mubr.bf16.mxu0 0
        %2370 = vmatmul.mubr.bf16.gmra.mrb[0].mxu0 %v2247
        %v2371 = vpop.f32.mrb[0].mxu0
        %v2372 = vadd.f32 0.0, %v2371
        %v2373 = vpop.f32.mrb[0].mxu0
        %v2374 = vpop.f32.mrb[0].mxu0
        %v2375 = vadd.f32 0.0, %v2374
        %v2376 = vpop.f32.mrb[0].mxu0
        %2377 = vmatprep.mubr.bf16.mxu0 0
        %2378 = vmatmul.mubr.bf16.gmra.mrb[0].mxu0 %v2256
        %v2379 = vpop.f32.mrb[0].mxu0
        %v2380 = vadd.f32 0.0, %v2379
        %v2381 = vpop.f32.mrb[0].mxu0
        %v2382 = vpop.f32.mrb[0].mxu0
        %v2383 = vadd.f32 0.0, %v2382
        %v2384 = vpop.f32.mrb[0].mxu0
        %2385 = vmatprep.mubr.bf16.mxu0 0
        %2386 = vmatmul.mubr.bf16.gmra.mrb[0].mxu0 %v2265
        %v2387 = vpop.f32.mrb[0].mxu0
        %v2388 = vadd.f32 0.0, %v2387
        %v2389 = vpop.f32.mrb[0].mxu0
        %v2390 = vpop.f32.mrb[0].mxu0
        %v2391 = vadd.f32 0.0, %v2390
        %v2392 = vpop.f32.mrb[0].mxu0
        %2393 = vmatprep.mubr.bf16.mxu0 0
        %2394 = vmatmul.mubr.bf16.gmra.mrb[0].mxu0 %v2274
        %v2395 = vpop.f32.mrb[0].mxu0
        %v2396 = vadd.f32 0.0, %v2395
        %v2397 = vpop.f32.mrb[0].mxu0
        %v2398 = vpop.f32.mrb[0].mxu0
        %v2399 = vadd.f32 0.0, %v2398
        %v2400 = vpop.f32.mrb[0].mxu0
        %2401 = vmatprep.mubr.bf16.mxu0 0
        %2402 = vmatmul.mubr.bf16.gmra.mrb[0].mxu0 %v2283
        %v2403 = vpop.f32.mrb[0].mxu0
        %v2404 = vadd.f32 0.0, %v2403
        %v2405 = vpop.f32.mrb[0].mxu0
        %v2406 = vpop.f32.mrb[0].mxu0
        %v2407 = vadd.f32 0.0, %v2406
        %v2408 = vpop.f32.mrb[0].mxu0
        %2409 = vdwg.mxu0
        %v2410 = vld [vmem:[#allocation2] sm:$0xff]
        %v2411 = vld [vmem:[#allocation2 + $0x8] sm:$0xff]
        %v2412 = vld [vmem:[#allocation2 + $0x10] sm:$0xff]
        %v2413 = vld [vmem:[#allocation2 + $0x18] sm:$0xff]
        %v2414 = vld [vmem:[#allocation2 + $0x20] sm:$0xff]
        %v2415 = vld [vmem:[#allocation2 + $0x28] sm:$0xff]
        %v2416 = vld [vmem:[#allocation2 + $0x30] sm:$0xff]
        %v2417 = vld [vmem:[#allocation2 + $0x38] sm:$0xff]
        %v2418 = vld [vmem:[#allocation2 + $0x40] sm:$0xff]
        %v2419 = vld [vmem:[#allocation2 + $0x48] sm:$0xff]
        %v2420 = vadd.f32 %v2410, %v2372
        %v2421 = vadd.f32 %v2411, %v2375
        %v2422 = vadd.f32 %v2412, %v2380
        %v2423 = vadd.f32 %v2413, %v2383
        %v2424 = vadd.f32 %v2414, %v2388
        %v2425 = vadd.f32 %v2415, %v2391
        %v2426 = vadd.f32 %v2416, %v2396
        %v2427 = vadd.f32 %v2417, %v2399
        %v2428 = vadd.f32 %v2418, %v2404
        %v2429 = vadd.f32 %v2419, %v2407
        %2430 = vst [vmem:[#allocation2] sm:$0xff] %v2420
        %2431 = vst [vmem:[#allocation2 + $0x8] sm:$0xff] %v2421
        %2432 = vst [vmem:[#allocation2 + $0x10] sm:$0xff] %v2422
        %2433 = vst [vmem:[#allocation2 + $0x18] sm:$0xff] %v2423
        %2434 = vst [vmem:[#allocation2 + $0x20] sm:$0xff] %v2424
        %2435 = vst [vmem:[#allocation2 + $0x28] sm:$0xff] %v2425
        %2436 = vst [vmem:[#allocation2 + $0x30] sm:$0xff] %v2426
        %2437 = vst [vmem:[#allocation2 + $0x38] sm:$0xff] %v2427
        %2438 = vst [vmem:[#allocation2 + $0x40] sm:$0xff] %v2428
        %2439 = vst [vmem:[#allocation2 + $0x48] sm:$0xff] %v2429
        %v2440 = vld [vmem:[#allocation2] sm:$0xff]
        %v2441 = vld [vmem:[#allocation2 + $0x8] sm:$0xff]
        %v2442 = vld [vmem:[#allocation2 + $0x10] sm:$0xff]
        %v2443 = vld [vmem:[#allocation2 + $0x18] sm:$0xff]
        %v2444 = vld [vmem:[#allocation2 + $0x20] sm:$0xff]
        %v2445 = vld [vmem:[#allocation2 + $0x28] sm:$0xff]
        %v2446 = vld [vmem:[#allocation2 + $0x30] sm:$0xff]
        %v2447 = vld [vmem:[#allocation2 + $0x38] sm:$0xff]
        %v2448 = vld [vmem:[#allocation2 + $0x40] sm:$0xff]
        %v2449 = vld [vmem:[#allocation2 + $0x48] sm:$0xff]
        %v2450 = vld [vmem:[%s2] sm:$0x1]
        %v2452 = vlaneseq
        %v2453 = vshrl.u32 %v2452, 7
        %v2454 = vsub.s32 0, %v2453
        %v2455 = vrot.slane %v2450, %v2454
        %v2457 = vadd.f32 %v2440, %v2455
        %v2458 = vadd.f32 %v2441, %v2455
        %v2459 = vadd.f32 %v2442, %v2455
        %v2460 = vadd.f32 %v2443, %v2455
        %v2461 = vadd.f32 %v2444, %v2455
        %v2462 = vadd.f32 %v2445, %v2455
        %v2463 = vadd.f32 %v2446, %v2455
        %v2464 = vadd.f32 %v2447, %v2455
        %v2465 = vadd.f32 %v2448, %v2455
        %v2466 = vadd.f32 %v2449, %v2455
        %v2467 = vmax.f32 %v2457, 0.0
        %v2468 = vmax.f32 %v2458, 0.0
        %v2469 = vmax.f32 %v2459, 0.0
        %v2470 = vmax.f32 %v2460, 0.0
        %v2471 = vmax.f32 %v2461, 0.0
        %v2472 = vmax.f32 %v2462, 0.0
        %v2473 = vmax.f32 %v2463, 0.0
        %v2474 = vmax.f32 %v2464, 0.0
        %v2475 = vmax.f32 %v2465, 0.0
        %v2476 = vmax.f32 %v2466, 0.0
        %v2477 = vld [vmem:[%s5] sm:$0xff]
        %v2478 = vld [vmem:[%s5 + $0x8] sm:$0xff]
        %v2479 = vld [vmem:[%s5 + $0x10] sm:$0xff]
        %v2480 = vld [vmem:[%s5 + $0x18] sm:$0xff]
        %v2481 = vld [vmem:[%s5 + $0x20] sm:$0xff]
        %v2482 = vld [vmem:[%s5 + $0x28] sm:$0xff]
        %v2483 = vld [vmem:[%s5 + $0x30] sm:$0xff]
        %v2484 = vld [vmem:[%s5 + $0x38] sm:$0xff]
        %v2485 = vld [vmem:[%s5 + $0x40] sm:$0xff]
        %v2486 = vld [vmem:[%s5 + $0x48] sm:$0xff]
        %2488 = vset.pattern.permute.xlu0 0
        %2489 = vperm.xlu0 %2488, %v2477
        %v2490 = vpop.permute.xlu0 %2489
        %2493 = vset.pattern.permute.xlu0 0
        %2494 = vperm.xlu0 %2493, %v2478
        %v2495 = vpop.permute.xlu0 %2494
        %2498 = vset.pattern.permute.xlu0 0
        %2499 = vperm.xlu0 %2498, %v2479
        %v2500 = vpop.permute.xlu0 %2499
        %2503 = vset.pattern.permute.xlu0 0
        %2504 = vperm.xlu0 %2503, %v2480
        %v2505 = vpop.permute.xlu0 %2504
        %2508 = vset.pattern.permute.xlu0 0
        %2509 = vperm.xlu0 %2508, %v2481
        %v2510 = vpop.permute.xlu0 %2509
        %2513 = vset.pattern.permute.xlu0 0
        %2514 = vperm.xlu0 %2513, %v2482
        %v2515 = vpop.permute.xlu0 %2514
        %2518 = vset.pattern.permute.xlu0 0
        %2519 = vperm.xlu0 %2518, %v2483
        %v2520 = vpop.permute.xlu0 %2519
        %2523 = vset.pattern.permute.xlu0 0
        %2524 = vperm.xlu0 %2523, %v2484
        %v2525 = vpop.permute.xlu0 %2524
        %2528 = vset.pattern.permute.xlu0 0
        %2529 = vperm.xlu0 %2528, %v2485
        %v2530 = vpop.permute.xlu0 %2529
        %2533 = vset.pattern.permute.xlu0 0
        %2534 = vperm.xlu0 %2533, %v2486
        %v2535 = vpop.permute.xlu0 %2534
        %v2537 = vmul.f32 %v2467, %v2490
        %v2538 = vmul.f32 %v2468, %v2495
        %v2539 = vmul.f32 %v2469, %v2500
        %v2540 = vmul.f32 %v2470, %v2505
        %v2541 = vmul.f32 %v2471, %v2510
        %v2542 = vmul.f32 %v2472, %v2515
        %v2543 = vmul.f32 %v2473, %v2520
        %v2544 = vmul.f32 %v2474, %v2525
        %v2545 = vmul.f32 %v2475, %v2530
        %v2546 = vmul.f32 %v2476, %v2535
        %v2547 = vpack.c.bf16 %v2538, %v2537
        %v2548 = vpack.c.bf16 %v2540, %v2539
        %v2549 = vpack.c.bf16 %v2542, %v2541
        %v2550 = vpack.c.bf16 %v2544, %v2543
        %v2551 = vpack.c.bf16 %v2546, %v2545
        %2552 = vst [vmem:[#allocation3] sm:$0xf] 0
        %vm2553 = vcmask 1041408
        %vm2554 = vsmask.f32 1280
        %vm2555 = vmand %vm2553, %vm2554
        %v2556 = vld [vmem:[#allocation3 + $0x4] sm:$0x3]
        %v2557 = vsel %vm2555, 0, %v2556
        %2558 = vst [vmem:[#allocation3 + $0x4] sm:$0x3] %v2557
        %vm2559 = vcmask 1043457
        %vm2560 = vsmask.f32 7942
        %vm2561 = vmand %vm2559, %vm2560
        %v2562 = vld [vmem:[#allocation3 + $0x2c] sm:$0xe]
        %v2563 = vsel %vm2561, 0, %v2562
        %2564 = vst [vmem:[#allocation3 + $0x2c] sm:$0xe] %v2563
        %2565 = vst [vmem:[#allocation3 + $0x30] sm:$0xf] 0
        %v2571 = vunpack.c.l.b16 %v2547
        %v2572 = vunpack.c.h.b16 %v2547
        %v2573 = vunpack.c.l.b16 %v2548
        %v2574 = vunpack.c.h.b16 %v2548
        %v2575 = vunpack.c.l.b16 %v2549
        %v2576 = vunpack.c.h.b16 %v2549
        %v2577 = vunpack.c.l.b16 %v2550
        %v2578 = vunpack.c.h.b16 %v2550
        %v2579 = vunpack.c.l.b16 %v2551
        %v2580 = vunpack.c.h.b16 %v2551
        %v2581 = vpack.c.b16 %v2571, %v2571
        %v2582 = vpack.c.b16 %v2572, %v2572
        %v2583 = vpack.c.b16 %v2573, %v2573
        %v2584 = vpack.c.b16 %v2574, %v2574
        %v2585 = vpack.c.b16 %v2575, %v2575
        %v2586 = vpack.c.b16 %v2576, %v2576
        %v2587 = vpack.c.b16 %v2577, %v2577
        %v2588 = vpack.c.b16 %v2578, %v2578
        %v2589 = vpack.c.b16 %v2579, %v2579
        %v2590 = vpack.c.b16 %v2580, %v2580
        %vm2591 = vsmask.f32 5392
        %vm2592 = vmor %vm2554, %vm2591
        %v2594 = vshrl.u32 %v2581, 16
        %v2596 = vrot.slane %v2594, 6
        %v2597 = vshll.u32 %v2581, 16
        %v2599 = vrot.slane %v2597, 7
        %v2600 = vor.u32 %v2596, %v2599
        %v2601 = vrot.slane %v2600, 4
        %v2603 = vshrl.u32 %v2582, 16
        %v2605 = vrot.slane %v2603, 6
        %v2606 = vshll.u32 %v2582, 16
        %v2608 = vrot.slane %v2606, 7
        %v2609 = vor.u32 %v2605, %v2608
        %v2610 = vsel %vm2592, %v2601, %v2609
        %v2611 = vrot.slane %v2609, 4
        %v2613 = vshrl.u32 %v2583, 16
        %v2615 = vrot.slane %v2613, 6
        %v2616 = vshll.u32 %v2583, 16
        %v2618 = vrot.slane %v2616, 7
        %v2619 = vor.u32 %v2615, %v2618
        %v2620 = vsel %vm2592, %v2611, %v2619
        %v2621 = vrot.slane %v2619, 4
        %v2623 = vshrl.u32 %v2584, 16
        %v2625 = vrot.slane %v2623, 6
        %v2626 = vshll.u32 %v2584, 16
        %v2628 = vrot.slane %v2626, 7
        %v2629 = vor.u32 %v2625, %v2628
        %v2630 = vsel %vm2592, %v2621, %v2629
        %v2631 = vrot.slane %v2629, 4
        %v2633 = vshrl.u32 %v2585, 16
        %v2635 = vrot.slane %v2633, 6
        %v2636 = vshll.u32 %v2585, 16
        %v2638 = vrot.slane %v2636, 7
        %v2639 = vor.u32 %v2635, %v2638
        %v2640 = vsel %vm2592, %v2631, %v2639
        %v2641 = vrot.slane %v2639, 4
        %v2643 = vshrl.u32 %v2586, 16
        %v2645 = vrot.slane %v2643, 6
        %v2646 = vshll.u32 %v2586, 16
        %v2648 = vrot.slane %v2646, 7
        %v2649 = vor.u32 %v2645, %v2648
        %v2650 = vsel %vm2592, %v2641, %v2649
        %v2651 = vrot.slane %v2649, 4
        %v2653 = vshrl.u32 %v2587, 16
        %v2655 = vrot.slane %v2653, 6
        %v2656 = vshll.u32 %v2587, 16
        %v2658 = vrot.slane %v2656, 7
        %v2659 = vor.u32 %v2655, %v2658
        %v2660 = vsel %vm2592, %v2651, %v2659
        %v2661 = vrot.slane %v2659, 4
        %v2663 = vshrl.u32 %v2588, 16
        %v2665 = vrot.slane %v2663, 6
        %v2666 = vshll.u32 %v2588, 16
        %v2668 = vrot.slane %v2666, 7
        %v2669 = vor.u32 %v2665, %v2668
        %v2670 = vsel %vm2592, %v2661, %v2669
        %v2671 = vrot.slane %v2669, 4
        %v2673 = vshrl.u32 %v2589, 16
        %v2675 = vrot.slane %v2673, 6
        %v2676 = vshll.u32 %v2589, 16
        %v2678 = vrot.slane %v2676, 7
        %v2679 = vor.u32 %v2675, %v2678
        %v2680 = vsel %vm2592, %v2671, %v2679
        %v2681 = vrot.slane %v2679, 4
        %v2683 = vshrl.u32 %v2590, 16
        %v2685 = vrot.slane %v2683, 6
        %v2686 = vshll.u32 %v2590, 16
        %v2688 = vrot.slane %v2686, 7
        %v2689 = vor.u32 %v2685, %v2688
        %v2690 = vsel %vm2592, %v2681, %v2689
        %v2691 = vrot.slane %v2689, 4
        %v2703 = vld [vmem:[#allocation3 + $0x4] sm:$0xe]
        %v2704 = vsel %vm2561, %v2600, %v2703
        %2705 = vst [vmem:[#allocation3 + $0x4] sm:$0xe] %v2704
        %2706 = vst [vmem:[#allocation3 + $0x8] sm:$0xf] %v2610
        %2707 = vst [vmem:[#allocation3 + $0xc] sm:$0xf] %v2620
        %2708 = vst [vmem:[#allocation3 + $0x10] sm:$0xf] %v2630
        %2709 = vst [vmem:[#allocation3 + $0x14] sm:$0xf] %v2640
        %2710 = vst [vmem:[#allocation3 + $0x18] sm:$0xf] %v2650
        %2711 = vst [vmem:[#allocation3 + $0x1c] sm:$0xf] %v2660
        %2712 = vst [vmem:[#allocation3 + $0x20] sm:$0xf] %v2670
        %2713 = vst [vmem:[#allocation3 + $0x24] sm:$0xf] %v2680
        %2714 = vst [vmem:[#allocation3 + $0x28] sm:$0xf] %v2690
        %v2715 = vld [vmem:[#allocation3 + $0x2c] sm:$0x3]
        %v2716 = vsel %vm2555, %v2691, %v2715
        %2717 = vst [vmem:[#allocation3 + $0x2c] sm:$0x3] %v2716
        %v2718 = vld [vmem:[%s312 + $0x84] sm:$0x8]
        %v2719 = vld [vmem:[%s312 + $0x88] sm:$0xf]
        %v2720 = vld [vmem:[%s312 + $0x8c] sm:$0xf]
        %v2721 = vld [vmem:[%s312 + $0x90] sm:$0xf]
        %v2722 = vld [vmem:[%s312 + $0x94] sm:$0xf]
        %v2723 = vld [vmem:[%s312 + $0x98] sm:$0xf]
        %v2724 = vld [vmem:[%s312 + $0x9c] sm:$0xf]
        %v2725 = vld [vmem:[%s312 + $0xa0] sm:$0xf]
        %v2726 = vld [vmem:[%s312 + $0xa4] sm:$0xf]
        %v2727 = vld [vmem:[%s312 + $0xa8] sm:$0xf]
        %v2728 = vld [vmem:[%s312 + $0xac] sm:$0x7]
        %v2729 = vld [vmem:[%s6] sm:$0xf]
        %v2730 = vld [vmem:[%s6 + $0x4] sm:$0xf]
        %v2731 = vld [vmem:[%s6 + $0x8] sm:$0xf]
        %v2732 = vld [vmem:[%s6 + $0xc] sm:$0xf]
        %v2733 = vld [vmem:[%s6 + $0x10] sm:$0xf]
        %v2734 = vld [vmem:[%s6 + $0x14] sm:$0xf]
        %v2735 = vld [vmem:[%s6 + $0x18] sm:$0xf]
        %v2736 = vld [vmem:[%s6 + $0x1c] sm:$0xf]
        %v2737 = vld [vmem:[%s6 + $0x20] sm:$0xf]
        %v2738 = vld [vmem:[%s6 + $0x24] sm:$0xf]
        %v2739 = vld [vmem:[%s6 + $0x28] sm:$0xf]
        %v2740 = vld [vmem:[%s6 + $0x2c] sm:$0xf]
        %v2741 = vld [vmem:[%s6 + $0x30] sm:$0xf]
        %v2742 = vld [vmem:[%s6 + $0x34] sm:$0xf]
        %v2743 = vld [vmem:[%s6 + $0x38] sm:$0xf]
        %v2744 = vld [vmem:[%s6 + $0x3c] sm:$0xf]
        %v2745 = vld [vmem:[%s7] sm:$0x1]
        %v2747 = vlaneseq
        %v2748 = vshrl.u32 %v2747, 7
        %v2749 = vsub.s32 0, %v2748
        %v2750 = vrot.slane %v2745, %v2749
        %v2763 = vunpack.c.l.b16 %v2718
        %v2764 = vunpack.c.l.b16 %v2719
        %v2765 = vunpack.c.l.b16 %v2720
        %v2766 = vunpack.c.l.b16 %v2721
        %v2767 = vunpack.c.l.b16 %v2722
        %v2768 = vunpack.c.l.b16 %v2723
        %v2769 = vunpack.c.l.b16 %v2724
        %v2770 = vunpack.c.l.b16 %v2725
        %v2771 = vunpack.c.l.b16 %v2726
        %v2772 = vunpack.c.l.b16 %v2727
        %v2773 = vunpack.c.l.b16 %v2728
        %v2774 = vpack.c.b16 %v2764, %v2763
        %v2775 = vpack.c.b16 %v2766, %v2765
        %v2776 = vpack.c.b16 %v2768, %v2767
        %v2777 = vpack.c.b16 %v2770, %v2769
        %v2778 = vpack.c.b16 %v2772, %v2771
        %v2779 = vpack.c.b16 %v2773, %v2773
        %v2780 = vrot.slane %v2774, 3
        %v2781 = vrot.slane %v2775, 3
        %v2782 = vsel %vm1298, %v2780, %v2781
        %v2783 = vrot.slane %v2776, 3
        %v2784 = vsel %vm1298, %v2781, %v2783
        %v2785 = vrot.slane %v2777, 3
        %v2786 = vsel %vm1298, %v2783, %v2785
        %v2787 = vrot.slane %v2778, 3
        %v2788 = vsel %vm1298, %v2785, %v2787
        %v2789 = vrot.slane %v2779, 3
        %v2790 = vsel %vm1298, %v2787, %v2789
        %v2812 = vunpack.c.l.b16 %v2729
        %v2813 = vunpack.c.l.b16 %v2730
        %v2814 = vunpack.c.l.b16 %v2731
        %v2815 = vunpack.c.l.b16 %v2732
        %v2816 = vunpack.c.l.b16 %v2733
        %v2817 = vunpack.c.l.b16 %v2734
        %v2818 = vunpack.c.l.b16 %v2735
        %v2819 = vunpack.c.l.b16 %v2736
        %v2820 = vunpack.c.l.b16 %v2737
        %v2821 = vunpack.c.l.b16 %v2738
        %v2822 = vunpack.c.l.b16 %v2739
        %v2823 = vunpack.c.l.b16 %v2740
        %v2824 = vunpack.c.l.b16 %v2741
        %v2825 = vunpack.c.l.b16 %v2742
        %v2826 = vunpack.c.l.b16 %v2743
        %v2827 = vunpack.c.l.b16 %v2744
        %v2828 = vpack.c.b16 %v2813, %v2812
        %v2829 = vpack.c.b16 %v2815, %v2814
        %v2830 = vpack.c.b16 %v2817, %v2816
        %v2831 = vpack.c.b16 %v2819, %v2818
        %v2832 = vpack.c.b16 %v2821, %v2820
        %v2833 = vpack.c.b16 %v2823, %v2822
        %v2834 = vpack.c.b16 %v2825, %v2824
        %v2835 = vpack.c.b16 %v2827, %v2826
        %2844 = vmatprep.subr.bf16.mxu0 0
        %2845 = vmatpush1.bf16.msra.mxu0 %v2828
        %2846 = vmatprep.subr.bf16.mxu0 0
        %2847 = vmatpush1.bf16.msra.mxu0 %v2829
        %2848 = vmatprep.subr.bf16.mxu0 0
        %2849 = vmatpush1.bf16.msra.mxu0 %v2830
        %2850 = vmatprep.subr.bf16.mxu0 0
        %2851 = vmatpush1.bf16.msra.mxu0 %v2831
        %2852 = vmatprep.subr.bf16.mxu0 0
        %2853 = vmatpush1.bf16.msra.mxu0 %v2832
        %2854 = vmatprep.subr.bf16.mxu0 0
        %2855 = vmatpush1.bf16.msra.mxu0 %v2833
        %2856 = vmatprep.subr.bf16.mxu0 0
        %2857 = vmatpush1.bf16.msra.mxu0 %v2834
        %2858 = vmatprep.subr.bf16.mxu0 0
        %2859 = vmatpush1.bf16.msra.mxu0 %v2835
        %2860 = vmatprep.subr.bf16.mxu0 0
        %2861 = vmatpush1.bf16.msra.mxu0 0
        %2862 = vmatprep.subr.bf16.mxu0 0
        %2863 = vmatpush1.bf16.msra.mxu0 0
        %2864 = vmatprep.subr.bf16.mxu0 0
        %2865 = vmatpush1.bf16.msra.mxu0 0
        %2866 = vmatprep.subr.bf16.mxu0 0
        %2867 = vmatpush1.bf16.msra.mxu0 0
        %2868 = vmatprep.subr.bf16.mxu0 0
        %2869 = vmatpush1.bf16.msra.mxu0 0
        %2870 = vmatprep.subr.bf16.mxu0 0
        %2871 = vmatpush1.bf16.msra.mxu0 0
        %2872 = vmatprep.subr.bf16.mxu0 0
        %2873 = vmatpush1.bf16.msra.mxu0 0
        %2874 = vmatprep.subr.bf16.mxu0 0
        %2875 = vmatpush1.bf16.msra.mxu0 0
        %2876 = vmatprep.mubr.bf16.mxu0 0
        %2877 = vmatmul.mubr.bf16.gmra.mrb[0].mxu0 %v2782
        %v2878 = vpop.f32.mrb[0].mxu0
        %v2879 = vadd.f32 %v2750, %v2878
        %v2880 = vpop.f32.mrb[0].mxu0
        %v2881 = vpop.f32.mrb[0].mxu0
        %v2882 = vadd.f32 %v2750, %v2881
        %v2883 = vpop.f32.mrb[0].mxu0
        %2884 = vmatprep.mubr.bf16.mxu0 0
        %2885 = vmatmul.mubr.bf16.gmra.mrb[0].mxu0 %v2784
        %v2886 = vpop.f32.mrb[0].mxu0
        %v2887 = vadd.f32 %v2750, %v2886
        %v2888 = vpop.f32.mrb[0].mxu0
        %v2889 = vpop.f32.mrb[0].mxu0
        %v2890 = vadd.f32 %v2750, %v2889
        %v2891 = vpop.f32.mrb[0].mxu0
        %2892 = vmatprep.mubr.bf16.mxu0 0
        %2893 = vmatmul.mubr.bf16.gmra.mrb[0].mxu0 %v2786
        %v2894 = vpop.f32.mrb[0].mxu0
        %v2895 = vadd.f32 %v2750, %v2894
        %v2896 = vpop.f32.mrb[0].mxu0
        %v2897 = vpop.f32.mrb[0].mxu0
        %v2898 = vadd.f32 %v2750, %v2897
        %v2899 = vpop.f32.mrb[0].mxu0
        %2900 = vmatprep.mubr.bf16.mxu0 0
        %2901 = vmatmul.mubr.bf16.gmra.mrb[0].mxu0 %v2788
        %v2902 = vpop.f32.mrb[0].mxu0
        %v2903 = vadd.f32 %v2750, %v2902
        %v2904 = vpop.f32.mrb[0].mxu0
        %v2905 = vpop.f32.mrb[0].mxu0
        %v2906 = vadd.f32 %v2750, %v2905
        %v2907 = vpop.f32.mrb[0].mxu0
        %2908 = vmatprep.mubr.bf16.mxu0 0
        %2909 = vmatmul.mubr.bf16.gmra.mrb[0].mxu0 %v2790
        %v2910 = vpop.f32.mrb[0].mxu0
        %v2911 = vadd.f32 %v2750, %v2910
        %v2912 = vpop.f32.mrb[0].mxu0
        %v2913 = vpop.f32.mrb[0].mxu0
        %v2914 = vadd.f32 %v2750, %v2913
        %v2915 = vpop.f32.mrb[0].mxu0
        %2916 = vdwg.mxu0
        %2917 = vst [vmem:[#allocation2] sm:$0xff] %v2879
        %2918 = vst [vmem:[#allocation2 + $0x8] sm:$0xff] %v2882
        %2919 = vst [vmem:[#allocation2 + $0x10] sm:$0xff] %v2887
        %2920 = vst [vmem:[#allocation2 + $0x18] sm:$0xff] %v2890
        %2921 = vst [vmem:[#allocation2 + $0x20] sm:$0xff] %v2895
        %2922 = vst [vmem:[#allocation2 + $0x28] sm:$0xff] %v2898
        %2923 = vst [vmem:[#allocation2 + $0x30] sm:$0xff] %v2903
        %2924 = vst [vmem:[#allocation2 + $0x38] sm:$0xff] %v2906
        %2925 = vst [vmem:[#allocation2 + $0x40] sm:$0xff] %v2911
        %2926 = vst [vmem:[#allocation2 + $0x48] sm:$0xff] %v2914
        %v2927 = vld [vmem:[#allocation3] sm:$0xf]
        %v2928 = vld [vmem:[#allocation3 + $0x4] sm:$0xf]
        %v2929 = vld [vmem:[#allocation3 + $0x8] sm:$0xf]
        %v2930 = vld [vmem:[#allocation3 + $0xc] sm:$0xf]
        %v2931 = vld [vmem:[#allocation3 + $0x10] sm:$0xf]
        %v2932 = vld [vmem:[#allocation3 + $0x14] sm:$0xf]
        %v2933 = vld [vmem:[#allocation3 + $0x18] sm:$0xf]
        %v2934 = vld [vmem:[#allocation3 + $0x1c] sm:$0xf]
        %v2935 = vld [vmem:[#allocation3 + $0x20] sm:$0xf]
        %v2936 = vld [vmem:[#allocation3 + $0x24] sm:$0xf]
        %v2937 = vld [vmem:[#allocation9] sm:$0xf]
        %v2938 = vld [vmem:[#allocation9 + $0x4] sm:$0xf]
        %v2939 = vld [vmem:[#allocation9 + $0x8] sm:$0xf]
        %v2940 = vld [vmem:[#allocation9 + $0xc] sm:$0xf]
        %v2941 = vld [vmem:[#allocation9 + $0x10] sm:$0xf]
        %v2942 = vld [vmem:[#allocation9 + $0x14] sm:$0xf]
        %v2943 = vld [vmem:[#allocation9 + $0x18] sm:$0xf]
        %v2944 = vld [vmem:[#allocation9 + $0x1c] sm:$0xf]
        %v2945 = vld [vmem:[#allocation9 + $0x20] sm:$0xf]
        %v2946 = vld [vmem:[#allocation9 + $0x24] sm:$0xf]
        %v2947 = vld [vmem:[#allocation9 + $0x28] sm:$0xf]
        %v2948 = vld [vmem:[#allocation9 + $0x2c] sm:$0xf]
        %v2949 = vld [vmem:[#allocation9 + $0x30] sm:$0xf]
        %v2950 = vld [vmem:[#allocation9 + $0x34] sm:$0xf]
        %v2951 = vld [vmem:[#allocation9 + $0x38] sm:$0xf]
        %v2952 = vld [vmem:[#allocation9 + $0x3c] sm:$0xf]
        %v2953 = vld [vmem:[#allocation2] sm:$0xff]
        %v2954 = vld [vmem:[#allocation2 + $0x8] sm:$0xff]
        %v2955 = vld [vmem:[#allocation2 + $0x10] sm:$0xff]
        %v2956 = vld [vmem:[#allocation2 + $0x18] sm:$0xff]
        %v2957 = vld [vmem:[#allocation2 + $0x20] sm:$0xff]
        %v2958 = vld [vmem:[#allocation2 + $0x28] sm:$0xff]
        %v2959 = vld [vmem:[#allocation2 + $0x30] sm:$0xff]
        %v2960 = vld [vmem:[#allocation2 + $0x38] sm:$0xff]
        %v2961 = vld [vmem:[#allocation2 + $0x40] sm:$0xff]
        %v2962 = vld [vmem:[#allocation2 + $0x48] sm:$0xff]
        %v2973 = vunpack.c.l.b16 %v2927
        %v2974 = vunpack.c.l.b16 %v2928
        %v2975 = vunpack.c.l.b16 %v2929
        %v2976 = vunpack.c.l.b16 %v2930
        %v2977 = vunpack.c.l.b16 %v2931
        %v2978 = vunpack.c.l.b16 %v2932
        %v2979 = vunpack.c.l.b16 %v2933
        %v2980 = vunpack.c.l.b16 %v2934
        %v2981 = vunpack.c.l.b16 %v2935
        %v2982 = vunpack.c.l.b16 %v2936
        %v2983 = vpack.c.b16 %v2974, %v2973
        %v2984 = vpack.c.b16 %v2976, %v2975
        %v2985 = vpack.c.b16 %v2978, %v2977
        %v2986 = vpack.c.b16 %v2980, %v2979
        %v2987 = vpack.c.b16 %v2982, %v2981
        %v3009 = vunpack.c.l.b16 %v2937
        %v3010 = vunpack.c.l.b16 %v2938
        %v3011 = vunpack.c.l.b16 %v2939
        %v3012 = vunpack.c.l.b16 %v2940
        %v3013 = vunpack.c.l.b16 %v2941
        %v3014 = vunpack.c.l.b16 %v2942
        %v3015 = vunpack.c.l.b16 %v2943
        %v3016 = vunpack.c.l.b16 %v2944
        %v3017 = vunpack.c.l.b16 %v2945
        %v3018 = vunpack.c.l.b16 %v2946
        %v3019 = vunpack.c.l.b16 %v2947
        %v3020 = vunpack.c.l.b16 %v2948
        %v3021 = vunpack.c.l.b16 %v2949
        %v3022 = vunpack.c.l.b16 %v2950
        %v3023 = vunpack.c.l.b16 %v2951
        %v3024 = vunpack.c.l.b16 %v2952
        %v3025 = vpack.c.b16 %v3010, %v3009
        %v3026 = vpack.c.b16 %v3012, %v3011
        %v3027 = vpack.c.b16 %v3014, %v3013
        %v3028 = vpack.c.b16 %v3016, %v3015
        %v3029 = vpack.c.b16 %v3018, %v3017
        %v3030 = vpack.c.b16 %v3020, %v3019
        %v3031 = vpack.c.b16 %v3022, %v3021
        %v3032 = vpack.c.b16 %v3024, %v3023
        %3041 = vmatprep.subr.bf16.mxu0 0
        %3042 = vmatpush1.bf16.msra.mxu0 %v3025
        %3043 = vmatprep.subr.bf16.mxu0 0
        %3044 = vmatpush1.bf16.msra.mxu0 %v3026
        %3045 = vmatprep.subr.bf16.mxu0 0
        %3046 = vmatpush1.bf16.msra.mxu0 %v3027
        %3047 = vmatprep.subr.bf16.mxu0 0
        %3048 = vmatpush1.bf16.msra.mxu0 %v3028
        %3049 = vmatprep.subr.bf16.mxu0 0
        %3050 = vmatpush1.bf16.msra.mxu0 %v3029
        %3051 = vmatprep.subr.bf16.mxu0 0
        %3052 = vmatpush1.bf16.msra.mxu0 %v3030
        %3053 = vmatprep.subr.bf16.mxu0 0
        %3054 = vmatpush1.bf16.msra.mxu0 %v3031
        %3055 = vmatprep.subr.bf16.mxu0 0
        %3056 = vmatpush1.bf16.msra.mxu0 %v3032
        %3057 = vmatprep.subr.bf16.mxu0 0
        %3058 = vmatpush1.bf16.msra.mxu0 0
        %3059 = vmatprep.subr.bf16.mxu0 0
        %3060 = vmatpush1.bf16.msra.mxu0 0
        %3061 = vmatprep.subr.bf16.mxu0 0
        %3062 = vmatpush1.bf16.msra.mxu0 0
        %3063 = vmatprep.subr.bf16.mxu0 0
        %3064 = vmatpush1.bf16.msra.mxu0 0
        %3065 = vmatprep.subr.bf16.mxu0 0
        %3066 = vmatpush1.bf16.msra.mxu0 0
        %3067 = vmatprep.subr.bf16.mxu0 0
        %3068 = vmatpush1.bf16.msra.mxu0 0
        %3069 = vmatprep.subr.bf16.mxu0 0
        %3070 = vmatpush1.bf16.msra.mxu0 0
        %3071 = vmatprep.subr.bf16.mxu0 0
        %3072 = vmatpush1.bf16.msra.mxu0 0
        %3073 = vmatprep.mubr.bf16.mxu0 0
        %3074 = vmatmul.mubr.bf16.gmra.mrb[0].mxu0 %v2983
        %v3075 = vpop.f32.mrb[0].mxu0
        %v3076 = vadd.f32 0.0, %v3075
        %v3077 = vpop.f32.mrb[0].mxu0
        %v3078 = vpop.f32.mrb[0].mxu0
        %v3079 = vadd.f32 0.0, %v3078
        %v3080 = vpop.f32.mrb[0].mxu0
        %3081 = vmatprep.mubr.bf16.mxu0 0
        %3082 = vmatmul.mubr.bf16.gmra.mrb[0].mxu0 %v2984
        %v3083 = vpop.f32.mrb[0].mxu0
        %v3084 = vadd.f32 0.0, %v3083
        %v3085 = vpop.f32.mrb[0].mxu0
        %v3086 = vpop.f32.mrb[0].mxu0
        %v3087 = vadd.f32 0.0, %v3086
        %v3088 = vpop.f32.mrb[0].mxu0
        %3089 = vmatprep.mubr.bf16.mxu0 0
        %3090 = vmatmul.mubr.bf16.gmra.mrb[0].mxu0 %v2985
        %v3091 = vpop.f32.mrb[0].mxu0
        %v3092 = vadd.f32 0.0, %v3091
        %v3093 = vpop.f32.mrb[0].mxu0
        %v3094 = vpop.f32.mrb[0].mxu0
        %v3095 = vadd.f32 0.0, %v3094
        %v3096 = vpop.f32.mrb[0].mxu0
        %3097 = vmatprep.mubr.bf16.mxu0 0
        %3098 = vmatmul.mubr.bf16.gmra.mrb[0].mxu0 %v2986
        %v3099 = vpop.f32.mrb[0].mxu0
        %v3100 = vadd.f32 0.0, %v3099
        %v3101 = vpop.f32.mrb[0].mxu0
        %v3102 = vpop.f32.mrb[0].mxu0
        %v3103 = vadd.f32 0.0, %v3102
        %v3104 = vpop.f32.mrb[0].mxu0
        %3105 = vmatprep.mubr.bf16.mxu0 0
        %3106 = vmatmul.mubr.bf16.gmra.mrb[0].mxu0 %v2987
        %v3107 = vpop.f32.mrb[0].mxu0
        %v3108 = vadd.f32 0.0, %v3107
        %v3109 = vpop.f32.mrb[0].mxu0
        %v3110 = vpop.f32.mrb[0].mxu0
        %v3111 = vadd.f32 0.0, %v3110
        %v3112 = vpop.f32.mrb[0].mxu0
        %3113 = vdwg.mxu0
        %v3114 = vadd.f32 %v2953, %v3076
        %v3115 = vadd.f32 %v2954, %v3079
        %v3116 = vadd.f32 %v2955, %v3084
        %v3117 = vadd.f32 %v2956, %v3087
        %v3118 = vadd.f32 %v2957, %v3092
        %v3119 = vadd.f32 %v2958, %v3095
        %v3120 = vadd.f32 %v2959, %v3100
        %v3121 = vadd.f32 %v2960, %v3103
        %v3122 = vadd.f32 %v2961, %v3108
        %v3123 = vadd.f32 %v2962, %v3111
        %3124 = vst [vmem:[#allocation2] sm:$0xff] %v3114
        %3125 = vst [vmem:[#allocation2 + $0x8] sm:$0xff] %v3115
        %3126 = vst [vmem:[#allocation2 + $0x10] sm:$0xff] %v3116
        %3127 = vst [vmem:[#allocation2 + $0x18] sm:$0xff] %v3117
        %3128 = vst [vmem:[#allocation2 + $0x20] sm:$0xff] %v3118
        %3129 = vst [vmem:[#allocation2 + $0x28] sm:$0xff] %v3119
        %3130 = vst [vmem:[#allocation2 + $0x30] sm:$0xff] %v3120
        %3131 = vst [vmem:[#allocation2 + $0x38] sm:$0xff] %v3121
        %3132 = vst [vmem:[#allocation2 + $0x40] sm:$0xff] %v3122
        %3133 = vst [vmem:[#allocation2 + $0x48] sm:$0xff] %v3123
        %v3134 = vld [vmem:[#allocation3] sm:$0xf]
        %v3135 = vld [vmem:[#allocation3 + $0x4] sm:$0xf]
        %v3136 = vld [vmem:[#allocation3 + $0x8] sm:$0xf]
        %v3137 = vld [vmem:[#allocation3 + $0xc] sm:$0xf]
        %v3138 = vld [vmem:[#allocation3 + $0x10] sm:$0xf]
        %v3139 = vld [vmem:[#allocation3 + $0x14] sm:$0xf]
        %v3140 = vld [vmem:[#allocation3 + $0x18] sm:$0xf]
        %v3141 = vld [vmem:[#allocation3 + $0x1c] sm:$0xf]
        %v3142 = vld [vmem:[#allocation3 + $0x20] sm:$0xf]
        %v3143 = vld [vmem:[#allocation3 + $0x24] sm:$0xf]
        %v3144 = vld [vmem:[#allocation3 + $0x28] sm:$0x1]
        %v3145 = vld [vmem:[#allocation9 + $0x40] sm:$0xf]
        %v3146 = vld [vmem:[#allocation9 + $0x44] sm:$0xf]
        %v3147 = vld [vmem:[#allocation9 + $0x48] sm:$0xf]
        %v3148 = vld [vmem:[#allocation9 + $0x4c] sm:$0xf]
        %v3149 = vld [vmem:[#allocation9 + $0x50] sm:$0xf]
        %v3150 = vld [vmem:[#allocation9 + $0x54] sm:$0xf]
        %v3151 = vld [vmem:[#allocation9 + $0x58] sm:$0xf]
        %v3152 = vld [vmem:[#allocation9 + $0x5c] sm:$0xf]
        %v3153 = vld [vmem:[#allocation9 + $0x60] sm:$0xf]
        %v3154 = vld [vmem:[#allocation9 + $0x64] sm:$0xf]
        %v3155 = vld [vmem:[#allocation9 + $0x68] sm:$0xf]
        %v3156 = vld [vmem:[#allocation9 + $0x6c] sm:$0xf]
        %v3157 = vld [vmem:[#allocation9 + $0x70] sm:$0xf]
        %v3158 = vld [vmem:[#allocation9 + $0x74] sm:$0xf]
        %v3159 = vld [vmem:[#allocation9 + $0x78] sm:$0xf]
        %v3160 = vld [vmem:[#allocation9 + $0x7c] sm:$0xf]
        %v3161 = vld [vmem:[#allocation2] sm:$0xff]
        %v3162 = vld [vmem:[#allocation2 + $0x8] sm:$0xff]
        %v3163 = vld [vmem:[#allocation2 + $0x10] sm:$0xff]
        %v3164 = vld [vmem:[#allocation2 + $0x18] sm:$0xff]
        %v3165 = vld [vmem:[#allocation2 + $0x20] sm:$0xff]
        %v3166 = vld [vmem:[#allocation2 + $0x28] sm:$0xff]
        %v3167 = vld [vmem:[#allocation2 + $0x30] sm:$0xff]
        %v3168 = vld [vmem:[#allocation2 + $0x38] sm:$0xff]
        %v3169 = vld [vmem:[#allocation2 + $0x40] sm:$0xff]
        %v3170 = vld [vmem:[#allocation2 + $0x48] sm:$0xff]
        %v3182 = vunpack.c.l.b16 %v3134
        %v3183 = vunpack.c.l.b16 %v3135
        %v3184 = vunpack.c.l.b16 %v3136
        %v3185 = vunpack.c.l.b16 %v3137
        %v3186 = vunpack.c.l.b16 %v3138
        %v3187 = vunpack.c.l.b16 %v3139
        %v3188 = vunpack.c.l.b16 %v3140
        %v3189 = vunpack.c.l.b16 %v3141
        %v3190 = vunpack.c.l.b16 %v3142
        %v3191 = vunpack.c.l.b16 %v3143
        %v3192 = vunpack.c.l.b16 %v3144
        %v3193 = vpack.c.b16 %v3183, %v3182
        %v3194 = vpack.c.b16 %v3185, %v3184
        %v3195 = vpack.c.b16 %v3187, %v3186
        %v3196 = vpack.c.b16 %v3189, %v3188
        %v3197 = vpack.c.b16 %v3191, %v3190
        %v3198 = vpack.c.b16 %v3192, %v3192
        %v3200 = vshrl.u32 %v3193, 16
        %v3202 = vshll.u32 %v3193, 16
        %v3204 = vrot.slane %v3202, 1
        %v3205 = vor.u32 %v3200, %v3204
        %v3207 = vshll.u32 %v3194, 16
        %v3209 = vrot.slane %v3207, 1
        %v3210 = vsel %vm819, %v3205, %v3209
        %v3211 = vshrl.u32 %v3194, 16
        %v3213 = vor.u32 %v3211, %v3209
        %v3215 = vshll.u32 %v3195, 16
        %v3217 = vrot.slane %v3215, 1
        %v3218 = vsel %vm819, %v3213, %v3217
        %v3219 = vshrl.u32 %v3195, 16
        %v3221 = vor.u32 %v3219, %v3217
        %v3223 = vshll.u32 %v3196, 16
        %v3225 = vrot.slane %v3223, 1
        %v3226 = vsel %vm819, %v3221, %v3225
        %v3227 = vshrl.u32 %v3196, 16
        %v3229 = vor.u32 %v3227, %v3225
        %v3231 = vshll.u32 %v3197, 16
        %v3233 = vrot.slane %v3231, 1
        %v3234 = vsel %vm819, %v3229, %v3233
        %v3235 = vshrl.u32 %v3197, 16
        %v3237 = vor.u32 %v3235, %v3233
        %v3239 = vshll.u32 %v3198, 16
        %v3241 = vrot.slane %v3239, 1
        %v3242 = vsel %vm819, %v3237, %v3241
        %v3264 = vunpack.c.l.b16 %v3145
        %v3265 = vunpack.c.l.b16 %v3146
        %v3266 = vunpack.c.l.b16 %v3147
        %v3267 = vunpack.c.l.b16 %v3148
        %v3268 = vunpack.c.l.b16 %v3149
        %v3269 = vunpack.c.l.b16 %v3150
        %v3270 = vunpack.c.l.b16 %v3151
        %v3271 = vunpack.c.l.b16 %v3152
        %v3272 = vunpack.c.l.b16 %v3153
        %v3273 = vunpack.c.l.b16 %v3154
        %v3274 = vunpack.c.l.b16 %v3155
        %v3275 = vunpack.c.l.b16 %v3156
        %v3276 = vunpack.c.l.b16 %v3157
        %v3277 = vunpack.c.l.b16 %v3158
        %v3278 = vunpack.c.l.b16 %v3159
        %v3279 = vunpack.c.l.b16 %v3160
        %v3280 = vpack.c.b16 %v3265, %v3264
        %v3281 = vpack.c.b16 %v3267, %v3266
        %v3282 = vpack.c.b16 %v3269, %v3268
        %v3283 = vpack.c.b16 %v3271, %v3270
        %v3284 = vpack.c.b16 %v3273, %v3272
        %v3285 = vpack.c.b16 %v3275, %v3274
        %v3286 = vpack.c.b16 %v3277, %v3276
        %v3287 = vpack.c.b16 %v3279, %v3278
        %3296 = vmatprep.subr.bf16.mxu0 0
        %3297 = vmatpush1.bf16.msra.mxu0 %v3280
        %3298 = vmatprep.subr.bf16.mxu0 0
        %3299 = vmatpush1.bf16.msra.mxu0 %v3281
        %3300 = vmatprep.subr.bf16.mxu0 0
        %3301 = vmatpush1.bf16.msra.mxu0 %v3282
        %3302 = vmatprep.subr.bf16.mxu0 0
        %3303 = vmatpush1.bf16.msra.mxu0 %v3283
        %3304 = vmatprep.subr.bf16.mxu0 0
        %3305 = vmatpush1.bf16.msra.mxu0 %v3284
        %3306 = vmatprep.subr.bf16.mxu0 0
        %3307 = vmatpush1.bf16.msra.mxu0 %v3285
        %3308 = vmatprep.subr.bf16.mxu0 0
        %3309 = vmatpush1.bf16.msra.mxu0 %v3286
        %3310 = vmatprep.subr.bf16.mxu0 0
        %3311 = vmatpush1.bf16.msra.mxu0 %v3287
        %3312 = vmatprep.subr.bf16.mxu0 0
        %3313 = vmatpush1.bf16.msra.mxu0 0
        %3314 = vmatprep.subr.bf16.mxu0 0
        %3315 = vmatpush1.bf16.msra.mxu0 0
        %3316 = vmatprep.subr.bf16.mxu0 0
        %3317 = vmatpush1.bf16.msra.mxu0 0
        %3318 = vmatprep.subr.bf16.mxu0 0
        %3319 = vmatpush1.bf16.msra.mxu0 0
        %3320 = vmatprep.subr.bf16.mxu0 0
        %3321 = vmatpush1.bf16.msra.mxu0 0
        %3322 = vmatprep.subr.bf16.mxu0 0
        %3323 = vmatpush1.bf16.msra.mxu0 0
        %3324 = vmatprep.subr.bf16.mxu0 0
        %3325 = vmatpush1.bf16.msra.mxu0 0
        %3326 = vmatprep.subr.bf16.mxu0 0
        %3327 = vmatpush1.bf16.msra.mxu0 0
        %3328 = vmatprep.mubr.bf16.mxu0 0
        %3329 = vmatmul.mubr.bf16.gmra.mrb[0].mxu0 %v3210
        %v3330 = vpop.f32.mrb[0].mxu0
        %v3331 = vadd.f32 0.0, %v3330
        %v3332 = vpop.f32.mrb[0].mxu0
        %v3333 = vpop.f32.mrb[0].mxu0
        %v3334 = vadd.f32 0.0, %v3333
        %v3335 = vpop.f32.mrb[0].mxu0
        %3336 = vmatprep.mubr.bf16.mxu0 0
        %3337 = vmatmul.mubr.bf16.gmra.mrb[0].mxu0 %v3218
        %v3338 = vpop.f32.mrb[0].mxu0
        %v3339 = vadd.f32 0.0, %v3338
        %v3340 = vpop.f32.mrb[0].mxu0
        %v3341 = vpop.f32.mrb[0].mxu0
        %v3342 = vadd.f32 0.0, %v3341
        %v3343 = vpop.f32.mrb[0].mxu0
        %3344 = vmatprep.mubr.bf16.mxu0 0
        %3345 = vmatmul.mubr.bf16.gmra.mrb[0].mxu0 %v3226
        %v3346 = vpop.f32.mrb[0].mxu0
        %v3347 = vadd.f32 0.0, %v3346
        %v3348 = vpop.f32.mrb[0].mxu0
        %v3349 = vpop.f32.mrb[0].mxu0
        %v3350 = vadd.f32 0.0, %v3349
        %v3351 = vpop.f32.mrb[0].mxu0
        %3352 = vmatprep.mubr.bf16.mxu0 0
        %3353 = vmatmul.mubr.bf16.gmra.mrb[0].mxu0 %v3234
        %v3354 = vpop.f32.mrb[0].mxu0
        %v3355 = vadd.f32 0.0, %v3354
        %v3356 = vpop.f32.mrb[0].mxu0
        %v3357 = vpop.f32.mrb[0].mxu0
        %v3358 = vadd.f32 0.0, %v3357
        %v3359 = vpop.f32.mrb[0].mxu0
        %3360 = vmatprep.mubr.bf16.mxu0 0
        %3361 = vmatmul.mubr.bf16.gmra.mrb[0].mxu0 %v3242
        %v3362 = vpop.f32.mrb[0].mxu0
        %v3363 = vadd.f32 0.0, %v3362
        %v3364 = vpop.f32.mrb[0].mxu0
        %v3365 = vpop.f32.mrb[0].mxu0
        %v3366 = vadd.f32 0.0, %v3365
        %v3367 = vpop.f32.mrb[0].mxu0
        %3368 = vdwg.mxu0
        %v3369 = vadd.f32 %v3161, %v3331
        %v3370 = vadd.f32 %v3162, %v3334
        %v3371 = vadd.f32 %v3163, %v3339
        %v3372 = vadd.f32 %v3164, %v3342
        %v3373 = vadd.f32 %v3165, %v3347
        %v3374 = vadd.f32 %v3166, %v3350
        %v3375 = vadd.f32 %v3167, %v3355
        %v3376 = vadd.f32 %v3168, %v3358
        %v3377 = vadd.f32 %v3169, %v3363
        %v3378 = vadd.f32 %v3170, %v3366
        %3379 = vst [vmem:[#allocation2] sm:$0xff] %v3369
        %3380 = vst [vmem:[#allocation2 + $0x8] sm:$0xff] %v3370
        %3381 = vst [vmem:[#allocation2 + $0x10] sm:$0xff] %v3371
        %3382 = vst [vmem:[#allocation2 + $0x18] sm:$0xff] %v3372
        %3383 = vst [vmem:[#allocation2 + $0x20] sm:$0xff] %v3373
        %3384 = vst [vmem:[#allocation2 + $0x28] sm:$0xff] %v3374
        %3385 = vst [vmem:[#allocation2 + $0x30] sm:$0xff] %v3375
        %3386 = vst [vmem:[#allocation2 + $0x38] sm:$0xff] %v3376
        %3387 = vst [vmem:[#allocation2 + $0x40] sm:$0xff] %v3377
        %3388 = vst [vmem:[#allocation2 + $0x48] sm:$0xff] %v3378
        %v3389 = vld [vmem:[#allocation3] sm:$0xe]
        %v3390 = vld [vmem:[#allocation3 + $0x4] sm:$0xf]
        %v3391 = vld [vmem:[#allocation3 + $0x8] sm:$0xf]
        %v3392 = vld [vmem:[#allocation3 + $0xc] sm:$0xf]
        %v3393 = vld [vmem:[#allocation3 + $0x10] sm:$0xf]
        %v3394 = vld [vmem:[#allocation3 + $0x14] sm:$0xf]
        %v3395 = vld [vmem:[#allocation3 + $0x18] sm:$0xf]
        %v3396 = vld [vmem:[#allocation3 + $0x1c] sm:$0xf]
        %v3397 = vld [vmem:[#allocation3 + $0x20] sm:$0xf]
        %v3398 = vld [vmem:[#allocation3 + $0x24] sm:$0xf]
        %v3399 = vld [vmem:[#allocation3 + $0x28] sm:$0x1]
        %v3400 = vld [vmem:[#allocation9 + $0x80] sm:$0xf]
        %v3401 = vld [vmem:[#allocation9 + $0x84] sm:$0xf]
        %v3402 = vld [vmem:[#allocation9 + $0x88] sm:$0xf]
        %v3403 = vld [vmem:[#allocation9 + $0x8c] sm:$0xf]
        %v3404 = vld [vmem:[#allocation9 + $0x90] sm:$0xf]
        %v3405 = vld [vmem:[#allocation9 + $0x94] sm:$0xf]
        %v3406 = vld [vmem:[#allocation9 + $0x98] sm:$0xf]
        %v3407 = vld [vmem:[#allocation9 + $0x9c] sm:$0xf]
        %v3408 = vld [vmem:[#allocation9 + $0xa0] sm:$0xf]
        %v3409 = vld [vmem:[#allocation9 + $0xa4] sm:$0xf]
        %v3410 = vld [vmem:[#allocation9 + $0xa8] sm:$0xf]
        %v3411 = vld [vmem:[#allocation9 + $0xac] sm:$0xf]
        %v3412 = vld [vmem:[#allocation9 + $0xb0] sm:$0xf]
        %v3413 = vld [vmem:[#allocation9 + $0xb4] sm:$0xf]
        %v3414 = vld [vmem:[#allocation9 + $0xb8] sm:$0xf]
        %v3415 = vld [vmem:[#allocation9 + $0xbc] sm:$0xf]
        %v3416 = vld [vmem:[#allocation2] sm:$0xff]
        %v3417 = vld [vmem:[#allocation2 + $0x8] sm:$0xff]
        %v3418 = vld [vmem:[#allocation2 + $0x10] sm:$0xff]
        %v3419 = vld [vmem:[#allocation2 + $0x18] sm:$0xff]
        %v3420 = vld [vmem:[#allocation2 + $0x20] sm:$0xff]
        %v3421 = vld [vmem:[#allocation2 + $0x28] sm:$0xff]
        %v3422 = vld [vmem:[#allocation2 + $0x30] sm:$0xff]
        %v3423 = vld [vmem:[#allocation2 + $0x38] sm:$0xff]
        %v3424 = vld [vmem:[#allocation2 + $0x40] sm:$0xff]
        %v3425 = vld [vmem:[#allocation2 + $0x48] sm:$0xff]
        %v3437 = vunpack.c.l.b16 %v3389
        %v3438 = vunpack.c.l.b16 %v3390
        %v3439 = vunpack.c.l.b16 %v3391
        %v3440 = vunpack.c.l.b16 %v3392
        %v3441 = vunpack.c.l.b16 %v3393
        %v3442 = vunpack.c.l.b16 %v3394
        %v3443 = vunpack.c.l.b16 %v3395
        %v3444 = vunpack.c.l.b16 %v3396
        %v3445 = vunpack.c.l.b16 %v3397
        %v3446 = vunpack.c.l.b16 %v3398
        %v3447 = vunpack.c.l.b16 %v3399
        %v3448 = vpack.c.b16 %v3438, %v3437
        %v3449 = vpack.c.b16 %v3440, %v3439
        %v3450 = vpack.c.b16 %v3442, %v3441
        %v3451 = vpack.c.b16 %v3444, %v3443
        %v3452 = vpack.c.b16 %v3446, %v3445
        %v3453 = vpack.c.b16 %v3447, %v3447
        %v3454 = vrot.slane %v3448, 1
        %v3455 = vrot.slane %v3449, 1
        %v3456 = vsel %vm596, %v3454, %v3455
        %v3457 = vrot.slane %v3450, 1
        %v3458 = vsel %vm596, %v3455, %v3457
        %v3459 = vrot.slane %v3451, 1
        %v3460 = vsel %vm596, %v3457, %v3459
        %v3461 = vrot.slane %v3452, 1
        %v3462 = vsel %vm596, %v3459, %v3461
        %v3463 = vrot.slane %v3453, 1
        %v3464 = vsel %vm596, %v3461, %v3463
        %v3486 = vunpack.c.l.b16 %v3400
        %v3487 = vunpack.c.l.b16 %v3401
        %v3488 = vunpack.c.l.b16 %v3402
        %v3489 = vunpack.c.l.b16 %v3403
        %v3490 = vunpack.c.l.b16 %v3404
        %v3491 = vunpack.c.l.b16 %v3405
        %v3492 = vunpack.c.l.b16 %v3406
        %v3493 = vunpack.c.l.b16 %v3407
        %v3494 = vunpack.c.l.b16 %v3408
        %v3495 = vunpack.c.l.b16 %v3409
        %v3496 = vunpack.c.l.b16 %v3410
        %v3497 = vunpack.c.l.b16 %v3411
        %v3498 = vunpack.c.l.b16 %v3412
        %v3499 = vunpack.c.l.b16 %v3413
        %v3500 = vunpack.c.l.b16 %v3414
        %v3501 = vunpack.c.l.b16 %v3415
        %v3502 = vpack.c.b16 %v3487, %v3486
        %v3503 = vpack.c.b16 %v3489, %v3488
        %v3504 = vpack.c.b16 %v3491, %v3490
        %v3505 = vpack.c.b16 %v3493, %v3492
        %v3506 = vpack.c.b16 %v3495, %v3494
        %v3507 = vpack.c.b16 %v3497, %v3496
        %v3508 = vpack.c.b16 %v3499, %v3498
        %v3509 = vpack.c.b16 %v3501, %v3500
        %3518 = vmatprep.subr.bf16.mxu0 0
        %3519 = vmatpush1.bf16.msra.mxu0 %v3502
        %3520 = vmatprep.subr.bf16.mxu0 0
        %3521 = vmatpush1.bf16.msra.mxu0 %v3503
        %3522 = vmatprep.subr.bf16.mxu0 0
        %3523 = vmatpush1.bf16.msra.mxu0 %v3504
        %3524 = vmatprep.subr.bf16.mxu0 0
        %3525 = vmatpush1.bf16.msra.mxu0 %v3505
        %3526 = vmatprep.subr.bf16.mxu0 0
        %3527 = vmatpush1.bf16.msra.mxu0 %v3506
        %3528 = vmatprep.subr.bf16.mxu0 0
        %3529 = vmatpush1.bf16.msra.mxu0 %v3507
        %3530 = vmatprep.subr.bf16.mxu0 0
        %3531 = vmatpush1.bf16.msra.mxu0 %v3508
        %3532 = vmatprep.subr.bf16.mxu0 0
        %3533 = vmatpush1.bf16.msra.mxu0 %v3509
        %3534 = vmatprep.subr.bf16.mxu0 0
        %3535 = vmatpush1.bf16.msra.mxu0 0
        %3536 = vmatprep.subr.bf16.mxu0 0
        %3537 = vmatpush1.bf16.msra.mxu0 0
        %3538 = vmatprep.subr.bf16.mxu0 0
        %3539 = vmatpush1.bf16.msra.mxu0 0
        %3540 = vmatprep.subr.bf16.mxu0 0
        %3541 = vmatpush1.bf16.msra.mxu0 0
        %3542 = vmatprep.subr.bf16.mxu0 0
        %3543 = vmatpush1.bf16.msra.mxu0 0
        %3544 = vmatprep.subr.bf16.mxu0 0
        %3545 = vmatpush1.bf16.msra.mxu0 0
        %3546 = vmatprep.subr.bf16.mxu0 0
        %3547 = vmatpush1.bf16.msra.mxu0 0
        %3548 = vmatprep.subr.bf16.mxu0 0
        %3549 = vmatpush1.bf16.msra.mxu0 0
        %3550 = vmatprep.mubr.bf16.mxu0 0
        %3551 = vmatmul.mubr.bf16.gmra.mrb[0].mxu0 %v3456
        %v3552 = vpop.f32.mrb[0].mxu0
        %v3553 = vadd.f32 0.0, %v3552
        %v3554 = vpop.f32.mrb[0].mxu0
        %v3555 = vpop.f32.mrb[0].mxu0
        %v3556 = vadd.f32 0.0, %v3555
        %v3557 = vpop.f32.mrb[0].mxu0
        %3558 = vmatprep.mubr.bf16.mxu0 0
        %3559 = vmatmul.mubr.bf16.gmra.mrb[0].mxu0 %v3458
        %v3560 = vpop.f32.mrb[0].mxu0
        %v3561 = vadd.f32 0.0, %v3560
        %v3562 = vpop.f32.mrb[0].mxu0
        %v3563 = vpop.f32.mrb[0].mxu0
        %v3564 = vadd.f32 0.0, %v3563
        %v3565 = vpop.f32.mrb[0].mxu0
        %3566 = vmatprep.mubr.bf16.mxu0 0
        %3567 = vmatmul.mubr.bf16.gmra.mrb[0].mxu0 %v3460
        %v3568 = vpop.f32.mrb[0].mxu0
        %v3569 = vadd.f32 0.0, %v3568
        %v3570 = vpop.f32.mrb[0].mxu0
        %v3571 = vpop.f32.mrb[0].mxu0
        %v3572 = vadd.f32 0.0, %v3571
        %v3573 = vpop.f32.mrb[0].mxu0
        %3574 = vmatprep.mubr.bf16.mxu0 0
        %3575 = vmatmul.mubr.bf16.gmra.mrb[0].mxu0 %v3462
        %v3576 = vpop.f32.mrb[0].mxu0
        %v3577 = vadd.f32 0.0, %v3576
        %v3578 = vpop.f32.mrb[0].mxu0
        %v3579 = vpop.f32.mrb[0].mxu0
        %v3580 = vadd.f32 0.0, %v3579
        %v3581 = vpop.f32.mrb[0].mxu0
        %3582 = vmatprep.mubr.bf16.mxu0 0
        %3583 = vmatmul.mubr.bf16.gmra.mrb[0].mxu0 %v3464
        %v3584 = vpop.f32.mrb[0].mxu0
        %v3585 = vadd.f32 0.0, %v3584
        %v3586 = vpop.f32.mrb[0].mxu0
        %v3587 = vpop.f32.mrb[0].mxu0
        %v3588 = vadd.f32 0.0, %v3587
        %v3589 = vpop.f32.mrb[0].mxu0
        %3590 = vdwg.mxu0
        %v3591 = vadd.f32 %v3416, %v3553
        %v3592 = vadd.f32 %v3417, %v3556
        %v3593 = vadd.f32 %v3418, %v3561
        %v3594 = vadd.f32 %v3419, %v3564
        %v3595 = vadd.f32 %v3420, %v3569
        %v3596 = vadd.f32 %v3421, %v3572
        %v3597 = vadd.f32 %v3422, %v3577
        %v3598 = vadd.f32 %v3423, %v3580
        %v3599 = vadd.f32 %v3424, %v3585
        %v3600 = vadd.f32 %v3425, %v3588
        %3601 = vst [vmem:[#allocation2] sm:$0xff] %v3591
        %3602 = vst [vmem:[#allocation2 + $0x8] sm:$0xff] %v3592
        %3603 = vst [vmem:[#allocation2 + $0x10] sm:$0xff] %v3593
        %3604 = vst [vmem:[#allocation2 + $0x18] sm:$0xff] %v3594
        %3605 = vst [vmem:[#allocation2 + $0x20] sm:$0xff] %v3595
        %3606 = vst [vmem:[#allocation2 + $0x28] sm:$0xff] %v3596
        %3607 = vst [vmem:[#allocation2 + $0x30] sm:$0xff] %v3597
        %3608 = vst [vmem:[#allocation2 + $0x38] sm:$0xff] %v3598
        %3609 = vst [vmem:[#allocation2 + $0x40] sm:$0xff] %v3599
        %3610 = vst [vmem:[#allocation2 + $0x48] sm:$0xff] %v3600
        %v3611 = vld [vmem:[#allocation3 + $0x4] sm:$0xe]
        %v3612 = vld [vmem:[#allocation3 + $0x8] sm:$0xf]
        %v3613 = vld [vmem:[#allocation3 + $0xc] sm:$0xf]
        %v3614 = vld [vmem:[#allocation3 + $0x10] sm:$0xf]
        %v3615 = vld [vmem:[#allocation3 + $0x14] sm:$0xf]
        %v3616 = vld [vmem:[#allocation3 + $0x18] sm:$0xf]
        %v3617 = vld [vmem:[#allocation3 + $0x1c] sm:$0xf]
        %v3618 = vld [vmem:[#allocation3 + $0x20] sm:$0xf]
        %v3619 = vld [vmem:[#allocation3 + $0x24] sm:$0xf]
        %v3620 = vld [vmem:[#allocation3 + $0x28] sm:$0xf]
        %v3621 = vld [vmem:[#allocation3 + $0x2c] sm:$0x1]
        %v3622 = vld [vmem:[#allocation9 + $0xc0] sm:$0xf]
        %v3623 = vld [vmem:[#allocation9 + $0xc4] sm:$0xf]
        %v3624 = vld [vmem:[#allocation9 + $0xc8] sm:$0xf]
        %v3625 = vld [vmem:[#allocation9 + $0xcc] sm:$0xf]
        %v3626 = vld [vmem:[#allocation9 + $0xd0] sm:$0xf]
        %v3627 = vld [vmem:[#allocation9 + $0xd4] sm:$0xf]
        %v3628 = vld [vmem:[#allocation9 + $0xd8] sm:$0xf]
        %v3629 = vld [vmem:[#allocation9 + $0xdc] sm:$0xf]
        %v3630 = vld [vmem:[#allocation9 + $0xe0] sm:$0xf]
        %v3631 = vld [vmem:[#allocation9 + $0xe4] sm:$0xf]
        %v3632 = vld [vmem:[#allocation9 + $0xe8] sm:$0xf]
        %v3633 = vld [vmem:[#allocation9 + $0xec] sm:$0xf]
        %v3634 = vld [vmem:[#allocation9 + $0xf0] sm:$0xf]
        %v3635 = vld [vmem:[#allocation9 + $0xf4] sm:$0xf]
        %v3636 = vld [vmem:[#allocation9 + $0xf8] sm:$0xf]
        %v3637 = vld [vmem:[#allocation9 + $0xfc] sm:$0xf]
        %v3638 = vld [vmem:[#allocation2] sm:$0xff]
        %v3639 = vld [vmem:[#allocation2 + $0x8] sm:$0xff]
        %v3640 = vld [vmem:[#allocation2 + $0x10] sm:$0xff]
        %v3641 = vld [vmem:[#allocation2 + $0x18] sm:$0xff]
        %v3642 = vld [vmem:[#allocation2 + $0x20] sm:$0xff]
        %v3643 = vld [vmem:[#allocation2 + $0x28] sm:$0xff]
        %v3644 = vld [vmem:[#allocation2 + $0x30] sm:$0xff]
        %v3645 = vld [vmem:[#allocation2 + $0x38] sm:$0xff]
        %v3646 = vld [vmem:[#allocation2 + $0x40] sm:$0xff]
        %v3647 = vld [vmem:[#allocation2 + $0x48] sm:$0xff]
        %v3659 = vunpack.c.l.b16 %v3611
        %v3660 = vunpack.c.l.b16 %v3612
        %v3661 = vunpack.c.l.b16 %v3613
        %v3662 = vunpack.c.l.b16 %v3614
        %v3663 = vunpack.c.l.b16 %v3615
        %v3664 = vunpack.c.l.b16 %v3616
        %v3665 = vunpack.c.l.b16 %v3617
        %v3666 = vunpack.c.l.b16 %v3618
        %v3667 = vunpack.c.l.b16 %v3619
        %v3668 = vunpack.c.l.b16 %v3620
        %v3669 = vunpack.c.l.b16 %v3621
        %v3670 = vpack.c.b16 %v3660, %v3659
        %v3671 = vpack.c.b16 %v3662, %v3661
        %v3672 = vpack.c.b16 %v3664, %v3663
        %v3673 = vpack.c.b16 %v3666, %v3665
        %v3674 = vpack.c.b16 %v3668, %v3667
        %v3675 = vpack.c.b16 %v3669, %v3669
        %v3676 = vrot.slane %v3670, 1
        %v3677 = vrot.slane %v3671, 1
        %v3678 = vsel %vm596, %v3676, %v3677
        %v3679 = vrot.slane %v3672, 1
        %v3680 = vsel %vm596, %v3677, %v3679
        %v3681 = vrot.slane %v3673, 1
        %v3682 = vsel %vm596, %v3679, %v3681
        %v3683 = vrot.slane %v3674, 1
        %v3684 = vsel %vm596, %v3681, %v3683
        %v3685 = vrot.slane %v3675, 1
        %v3686 = vsel %vm596, %v3683, %v3685
        %v3708 = vunpack.c.l.b16 %v3622
        %v3709 = vunpack.c.l.b16 %v3623
        %v3710 = vunpack.c.l.b16 %v3624
        %v3711 = vunpack.c.l.b16 %v3625
        %v3712 = vunpack.c.l.b16 %v3626
        %v3713 = vunpack.c.l.b16 %v3627
        %v3714 = vunpack.c.l.b16 %v3628
        %v3715 = vunpack.c.l.b16 %v3629
        %v3716 = vunpack.c.l.b16 %v3630
        %v3717 = vunpack.c.l.b16 %v3631
        %v3718 = vunpack.c.l.b16 %v3632
        %v3719 = vunpack.c.l.b16 %v3633
        %v3720 = vunpack.c.l.b16 %v3634
        %v3721 = vunpack.c.l.b16 %v3635
        %v3722 = vunpack.c.l.b16 %v3636
        %v3723 = vunpack.c.l.b16 %v3637
        %v3724 = vpack.c.b16 %v3709, %v3708
        %v3725 = vpack.c.b16 %v3711, %v3710
        %v3726 = vpack.c.b16 %v3713, %v3712
        %v3727 = vpack.c.b16 %v3715, %v3714
        %v3728 = vpack.c.b16 %v3717, %v3716
        %v3729 = vpack.c.b16 %v3719, %v3718
        %v3730 = vpack.c.b16 %v3721, %v3720
        %v3731 = vpack.c.b16 %v3723, %v3722
        %3740 = vmatprep.subr.bf16.mxu0 0
        %3741 = vmatpush1.bf16.msra.mxu0 %v3724
        %3742 = vmatprep.subr.bf16.mxu0 0
        %3743 = vmatpush1.bf16.msra.mxu0 %v3725
        %3744 = vmatprep.subr.bf16.mxu0 0
        %3745 = vmatpush1.bf16.msra.mxu0 %v3726
        %3746 = vmatprep.subr.bf16.mxu0 0
        %3747 = vmatpush1.bf16.msra.mxu0 %v3727
        %3748 = vmatprep.subr.bf16.mxu0 0
        %3749 = vmatpush1.bf16.msra.mxu0 %v3728
        %3750 = vmatprep.subr.bf16.mxu0 0
        %3751 = vmatpush1.bf16.msra.mxu0 %v3729
        %3752 = vmatprep.subr.bf16.mxu0 0
        %3753 = vmatpush1.bf16.msra.mxu0 %v3730
        %3754 = vmatprep.subr.bf16.mxu0 0
        %3755 = vmatpush1.bf16.msra.mxu0 %v3731
        %3756 = vmatprep.subr.bf16.mxu0 0
        %3757 = vmatpush1.bf16.msra.mxu0 0
        %3758 = vmatprep.subr.bf16.mxu0 0
        %3759 = vmatpush1.bf16.msra.mxu0 0
        %3760 = vmatprep.subr.bf16.mxu0 0
        %3761 = vmatpush1.bf16.msra.mxu0 0
        %3762 = vmatprep.subr.bf16.mxu0 0
        %3763 = vmatpush1.bf16.msra.mxu0 0
        %3764 = vmatprep.subr.bf16.mxu0 0
        %3765 = vmatpush1.bf16.msra.mxu0 0
        %3766 = vmatprep.subr.bf16.mxu0 0
        %3767 = vmatpush1.bf16.msra.mxu0 0
        %3768 = vmatprep.subr.bf16.mxu0 0
        %3769 = vmatpush1.bf16.msra.mxu0 0
        %3770 = vmatprep.subr.bf16.mxu0 0
        %3771 = vmatpush1.bf16.msra.mxu0 0
        %3772 = vmatprep.mubr.bf16.mxu0 0
        %3773 = vmatmul.mubr.bf16.gmra.mrb[0].mxu0 %v3678
        %v3774 = vpop.f32.mrb[0].mxu0
        %v3775 = vadd.f32 0.0, %v3774
        %v3776 = vpop.f32.mrb[0].mxu0
        %v3777 = vpop.f32.mrb[0].mxu0
        %v3778 = vadd.f32 0.0, %v3777
        %v3779 = vpop.f32.mrb[0].mxu0
        %3780 = vmatprep.mubr.bf16.mxu0 0
        %3781 = vmatmul.mubr.bf16.gmra.mrb[0].mxu0 %v3680
        %v3782 = vpop.f32.mrb[0].mxu0
        %v3783 = vadd.f32 0.0, %v3782
        %v3784 = vpop.f32.mrb[0].mxu0
        %v3785 = vpop.f32.mrb[0].mxu0
        %v3786 = vadd.f32 0.0, %v3785
        %v3787 = vpop.f32.mrb[0].mxu0
        %3788 = vmatprep.mubr.bf16.mxu0 0
        %3789 = vmatmul.mubr.bf16.gmra.mrb[0].mxu0 %v3682
        %v3790 = vpop.f32.mrb[0].mxu0
        %v3791 = vadd.f32 0.0, %v3790
        %v3792 = vpop.f32.mrb[0].mxu0
        %v3793 = vpop.f32.mrb[0].mxu0
        %v3794 = vadd.f32 0.0, %v3793
        %v3795 = vpop.f32.mrb[0].mxu0
        %3796 = vmatprep.mubr.bf16.mxu0 0
        %3797 = vmatmul.mubr.bf16.gmra.mrb[0].mxu0 %v3684
        %v3798 = vpop.f32.mrb[0].mxu0
        %v3799 = vadd.f32 0.0, %v3798
        %v3800 = vpop.f32.mrb[0].mxu0
        %v3801 = vpop.f32.mrb[0].mxu0
        %v3802 = vadd.f32 0.0, %v3801
        %v3803 = vpop.f32.mrb[0].mxu0
        %3804 = vmatprep.mubr.bf16.mxu0 0
        %3805 = vmatmul.mubr.bf16.gmra.mrb[0].mxu0 %v3686
        %v3806 = vpop.f32.mrb[0].mxu0
        %v3807 = vadd.f32 0.0, %v3806
        %v3808 = vpop.f32.mrb[0].mxu0
        %v3809 = vpop.f32.mrb[0].mxu0
        %v3810 = vadd.f32 0.0, %v3809
        %v3811 = vpop.f32.mrb[0].mxu0
        %3812 = vdwg.mxu0
        %v3813 = vadd.f32 %v3638, %v3775
        %v3814 = vadd.f32 %v3639, %v3778
        %v3815 = vadd.f32 %v3640, %v3783
        %v3816 = vadd.f32 %v3641, %v3786
        %v3817 = vadd.f32 %v3642, %v3791
        %v3818 = vadd.f32 %v3643, %v3794
        %v3819 = vadd.f32 %v3644, %v3799
        %v3820 = vadd.f32 %v3645, %v3802
        %v3821 = vadd.f32 %v3646, %v3807
        %v3822 = vadd.f32 %v3647, %v3810
        %3823 = vst [vmem:[#allocation2] sm:$0xff] %v3813
        %3824 = vst [vmem:[#allocation2 + $0x8] sm:$0xff] %v3814
        %3825 = vst [vmem:[#allocation2 + $0x10] sm:$0xff] %v3815
        %3826 = vst [vmem:[#allocation2 + $0x18] sm:$0xff] %v3816
        %3827 = vst [vmem:[#allocation2 + $0x20] sm:$0xff] %v3817
        %3828 = vst [vmem:[#allocation2 + $0x28] sm:$0xff] %v3818
        %3829 = vst [vmem:[#allocation2 + $0x30] sm:$0xff] %v3819
        %3830 = vst [vmem:[#allocation2 + $0x38] sm:$0xff] %v3820
        %3831 = vst [vmem:[#allocation2 + $0x40] sm:$0xff] %v3821
        %3832 = vst [vmem:[#allocation2 + $0x48] sm:$0xff] %v3822
        %v3833 = vld [vmem:[#allocation3 + $0x4] sm:$0xe]
        %v3834 = vld [vmem:[#allocation3 + $0x8] sm:$0xf]
        %v3835 = vld [vmem:[#allocation3 + $0xc] sm:$0xf]
        %v3836 = vld [vmem:[#allocation3 + $0x10] sm:$0xf]
        %v3837 = vld [vmem:[#allocation3 + $0x14] sm:$0xf]
        %v3838 = vld [vmem:[#allocation3 + $0x18] sm:$0xf]
        %v3839 = vld [vmem:[#allocation3 + $0x1c] sm:$0xf]
        %v3840 = vld [vmem:[#allocation3 + $0x20] sm:$0xf]
        %v3841 = vld [vmem:[#allocation3 + $0x24] sm:$0xf]
        %v3842 = vld [vmem:[#allocation3 + $0x28] sm:$0xf]
        %v3843 = vld [vmem:[#allocation3 + $0x2c] sm:$0x3]
        %v3844 = vld [vmem:[#allocation9 + $0x100] sm:$0xf]
        %v3845 = vld [vmem:[#allocation9 + $0x104] sm:$0xf]
        %v3846 = vld [vmem:[#allocation9 + $0x108] sm:$0xf]
        %v3847 = vld [vmem:[#allocation9 + $0x10c] sm:$0xf]
        %v3848 = vld [vmem:[#allocation9 + $0x110] sm:$0xf]
        %v3849 = vld [vmem:[#allocation9 + $0x114] sm:$0xf]
        %v3850 = vld [vmem:[#allocation9 + $0x118] sm:$0xf]
        %v3851 = vld [vmem:[#allocation9 + $0x11c] sm:$0xf]
        %v3852 = vld [vmem:[#allocation9 + $0x120] sm:$0xf]
        %v3853 = vld [vmem:[#allocation9 + $0x124] sm:$0xf]
        %v3854 = vld [vmem:[#allocation9 + $0x128] sm:$0xf]
        %v3855 = vld [vmem:[#allocation9 + $0x12c] sm:$0xf]
        %v3856 = vld [vmem:[#allocation9 + $0x130] sm:$0xf]
        %v3857 = vld [vmem:[#allocation9 + $0x134] sm:$0xf]
        %v3858 = vld [vmem:[#allocation9 + $0x138] sm:$0xf]
        %v3859 = vld [vmem:[#allocation9 + $0x13c] sm:$0xf]
        %v3860 = vld [vmem:[#allocation2] sm:$0xff]
        %v3861 = vld [vmem:[#allocation2 + $0x8] sm:$0xff]
        %v3862 = vld [vmem:[#allocation2 + $0x10] sm:$0xff]
        %v3863 = vld [vmem:[#allocation2 + $0x18] sm:$0xff]
        %v3864 = vld [vmem:[#allocation2 + $0x20] sm:$0xff]
        %v3865 = vld [vmem:[#allocation2 + $0x28] sm:$0xff]
        %v3866 = vld [vmem:[#allocation2 + $0x30] sm:$0xff]
        %v3867 = vld [vmem:[#allocation2 + $0x38] sm:$0xff]
        %v3868 = vld [vmem:[#allocation2 + $0x40] sm:$0xff]
        %v3869 = vld [vmem:[#allocation2 + $0x48] sm:$0xff]
        %v3881 = vunpack.c.l.b16 %v3833
        %v3882 = vunpack.c.l.b16 %v3834
        %v3883 = vunpack.c.l.b16 %v3835
        %v3884 = vunpack.c.l.b16 %v3836
        %v3885 = vunpack.c.l.b16 %v3837
        %v3886 = vunpack.c.l.b16 %v3838
        %v3887 = vunpack.c.l.b16 %v3839
        %v3888 = vunpack.c.l.b16 %v3840
        %v3889 = vunpack.c.l.b16 %v3841
        %v3890 = vunpack.c.l.b16 %v3842
        %v3891 = vunpack.c.l.b16 %v3843
        %v3892 = vpack.c.b16 %v3882, %v3881
        %v3893 = vpack.c.b16 %v3884, %v3883
        %v3894 = vpack.c.b16 %v3886, %v3885
        %v3895 = vpack.c.b16 %v3888, %v3887
        %v3896 = vpack.c.b16 %v3890, %v3889
        %v3897 = vpack.c.b16 %v3891, %v3891
        %v3899 = vshrl.u32 %v3892, 16
        %v3901 = vrot.slane %v3899, 1
        %v3902 = vshll.u32 %v3892, 16
        %v3904 = vrot.slane %v3902, 2
        %v3905 = vor.u32 %v3901, %v3904
        %v3907 = vshrl.u32 %v3893, 16
        %v3909 = vrot.slane %v3907, 1
        %v3910 = vshll.u32 %v3893, 16
        %v3912 = vrot.slane %v3910, 2
        %v3913 = vor.u32 %v3909, %v3912
        %v3914 = vsel %vm2230, %v3905, %v3913
        %v3916 = vshrl.u32 %v3894, 16
        %v3918 = vrot.slane %v3916, 1
        %v3919 = vshll.u32 %v3894, 16
        %v3921 = vrot.slane %v3919, 2
        %v3922 = vor.u32 %v3918, %v3921
        %v3923 = vsel %vm2230, %v3913, %v3922
        %v3925 = vshrl.u32 %v3895, 16
        %v3927 = vrot.slane %v3925, 1
        %v3928 = vshll.u32 %v3895, 16
        %v3930 = vrot.slane %v3928, 2
        %v3931 = vor.u32 %v3927, %v3930
        %v3932 = vsel %vm2230, %v3922, %v3931
        %v3934 = vshrl.u32 %v3896, 16
        %v3936 = vrot.slane %v3934, 1
        %v3937 = vshll.u32 %v3896, 16
        %v3939 = vrot.slane %v3937, 2
        %v3940 = vor.u32 %v3936, %v3939
        %v3941 = vsel %vm2230, %v3931, %v3940
        %v3943 = vshrl.u32 %v3897, 16
        %v3945 = vrot.slane %v3943, 1
        %v3946 = vshll.u32 %v3897, 16
        %v3948 = vrot.slane %v3946, 2
        %v3949 = vor.u32 %v3945, %v3948
        %v3950 = vsel %vm2230, %v3940, %v3949
        %v3972 = vunpack.c.l.b16 %v3844
        %v3973 = vunpack.c.l.b16 %v3845
        %v3974 = vunpack.c.l.b16 %v3846
        %v3975 = vunpack.c.l.b16 %v3847
        %v3976 = vunpack.c.l.b16 %v3848
        %v3977 = vunpack.c.l.b16 %v3849
        %v3978 = vunpack.c.l.b16 %v3850
        %v3979 = vunpack.c.l.b16 %v3851
        %v3980 = vunpack.c.l.b16 %v3852
        %v3981 = vunpack.c.l.b16 %v3853
        %v3982 = vunpack.c.l.b16 %v3854
        %v3983 = vunpack.c.l.b16 %v3855
        %v3984 = vunpack.c.l.b16 %v3856
        %v3985 = vunpack.c.l.b16 %v3857
        %v3986 = vunpack.c.l.b16 %v3858
        %v3987 = vunpack.c.l.b16 %v3859
        %v3988 = vpack.c.b16 %v3973, %v3972
        %v3989 = vpack.c.b16 %v3975, %v3974
        %v3990 = vpack.c.b16 %v3977, %v3976
        %v3991 = vpack.c.b16 %v3979, %v3978
        %v3992 = vpack.c.b16 %v3981, %v3980
        %v3993 = vpack.c.b16 %v3983, %v3982
        %v3994 = vpack.c.b16 %v3985, %v3984
        %v3995 = vpack.c.b16 %v3987, %v3986
        %4004 = vmatprep.subr.bf16.mxu0 0
        %4005 = vmatpush1.bf16.msra.mxu0 %v3988
        %4006 = vmatprep.subr.bf16.mxu0 0
        %4007 = vmatpush1.bf16.msra.mxu0 %v3989
        %4008 = vmatprep.subr.bf16.mxu0 0
        %4009 = vmatpush1.bf16.msra.mxu0 %v3990
        %4010 = vmatprep.subr.bf16.mxu0 0
        %4011 = vmatpush1.bf16.msra.mxu0 %v3991
        %4012 = vmatprep.subr.bf16.mxu0 0
        %4013 = vmatpush1.bf16.msra.mxu0 %v3992
        %4014 = vmatprep.subr.bf16.mxu0 0
        %4015 = vmatpush1.bf16.msra.mxu0 %v3993
        %4016 = vmatprep.subr.bf16.mxu0 0
        %4017 = vmatpush1.bf16.msra.mxu0 %v3994
        %4018 = vmatprep.subr.bf16.mxu0 0
        %4019 = vmatpush1.bf16.msra.mxu0 %v3995
        %4020 = vmatprep.subr.bf16.mxu0 0
        %4021 = vmatpush1.bf16.msra.mxu0 0
        %4022 = vmatprep.subr.bf16.mxu0 0
        %4023 = vmatpush1.bf16.msra.mxu0 0
        %4024 = vmatprep.subr.bf16.mxu0 0
        %4025 = vmatpush1.bf16.msra.mxu0 0
        %4026 = vmatprep.subr.bf16.mxu0 0
        %4027 = vmatpush1.bf16.msra.mxu0 0
        %4028 = vmatprep.subr.bf16.mxu0 0
        %4029 = vmatpush1.bf16.msra.mxu0 0
        %4030 = vmatprep.subr.bf16.mxu0 0
        %4031 = vmatpush1.bf16.msra.mxu0 0
        %4032 = vmatprep.subr.bf16.mxu0 0
        %4033 = vmatpush1.bf16.msra.mxu0 0
        %4034 = vmatprep.subr.bf16.mxu0 0
        %4035 = vmatpush1.bf16.msra.mxu0 0
        %4036 = vmatprep.mubr.bf16.mxu0 0
        %4037 = vmatmul.mubr.bf16.gmra.mrb[0].mxu0 %v3914
        %v4038 = vpop.f32.mrb[0].mxu0
        %v4039 = vadd.f32 0.0, %v4038
        %v4040 = vpop.f32.mrb[0].mxu0
        %v4041 = vpop.f32.mrb[0].mxu0
        %v4042 = vadd.f32 0.0, %v4041
        %v4043 = vpop.f32.mrb[0].mxu0
        %4044 = vmatprep.mubr.bf16.mxu0 0
        %4045 = vmatmul.mubr.bf16.gmra.mrb[0].mxu0 %v3923
        %v4046 = vpop.f32.mrb[0].mxu0
        %v4047 = vadd.f32 0.0, %v4046
        %v4048 = vpop.f32.mrb[0].mxu0
        %v4049 = vpop.f32.mrb[0].mxu0
        %v4050 = vadd.f32 0.0, %v4049
        %v4051 = vpop.f32.mrb[0].mxu0
        %4052 = vmatprep.mubr.bf16.mxu0 0
        %4053 = vmatmul.mubr.bf16.gmra.mrb[0].mxu0 %v3932
        %v4054 = vpop.f32.mrb[0].mxu0
        %v4055 = vadd.f32 0.0, %v4054
        %v4056 = vpop.f32.mrb[0].mxu0
        %v4057 = vpop.f32.mrb[0].mxu0
        %v4058 = vadd.f32 0.0, %v4057
        %v4059 = vpop.f32.mrb[0].mxu0
        %4060 = vmatprep.mubr.bf16.mxu0 0
        %4061 = vmatmul.mubr.bf16.gmra.mrb[0].mxu0 %v3941
        %v4062 = vpop.f32.mrb[0].mxu0
        %v4063 = vadd.f32 0.0, %v4062
        %v4064 = vpop.f32.mrb[0].mxu0
        %v4065 = vpop.f32.mrb[0].mxu0
        %v4066 = vadd.f32 0.0, %v4065
        %v4067 = vpop.f32.mrb[0].mxu0
        %4068 = vmatprep.mubr.bf16.mxu0 0
        %4069 = vmatmul.mubr.bf16.gmra.mrb[0].mxu0 %v3950
        %v4070 = vpop.f32.mrb[0].mxu0
        %v4071 = vadd.f32 0.0, %v4070
        %v4072 = vpop.f32.mrb[0].mxu0
        %v4073 = vpop.f32.mrb[0].mxu0
        %v4074 = vadd.f32 0.0, %v4073
        %v4075 = vpop.f32.mrb[0].mxu0
        %4076 = vdwg.mxu0
        %v4077 = vadd.f32 %v3860, %v4039
        %v4078 = vadd.f32 %v3861, %v4042
        %v4079 = vadd.f32 %v3862, %v4047
        %v4080 = vadd.f32 %v3863, %v4050
        %v4081 = vadd.f32 %v3864, %v4055
        %v4082 = vadd.f32 %v3865, %v4058
        %v4083 = vadd.f32 %v3866, %v4063
        %v4084 = vadd.f32 %v3867, %v4066
        %v4085 = vadd.f32 %v3868, %v4071
        %v4086 = vadd.f32 %v3869, %v4074
        %4087 = vst [vmem:[#allocation2] sm:$0xff] %v4077
        %4088 = vst [vmem:[#allocation2 + $0x8] sm:$0xff] %v4078
        %4089 = vst [vmem:[#allocation2 + $0x10] sm:$0xff] %v4079
        %4090 = vst [vmem:[#allocation2 + $0x18] sm:$0xff] %v4080
        %4091 = vst [vmem:[#allocation2 + $0x20] sm:$0xff] %v4081
        %4092 = vst [vmem:[#allocation2 + $0x28] sm:$0xff] %v4082
        %4093 = vst [vmem:[#allocation2 + $0x30] sm:$0xff] %v4083
        %4094 = vst [vmem:[#allocation2 + $0x38] sm:$0xff] %v4084
        %4095 = vst [vmem:[#allocation2 + $0x40] sm:$0xff] %v4085
        %4096 = vst [vmem:[#allocation2 + $0x48] sm:$0xff] %v4086
        %v4097 = vld [vmem:[#allocation3 + $0x4] sm:$0xc]
        %v4098 = vld [vmem:[#allocation3 + $0x8] sm:$0xf]
        %v4099 = vld [vmem:[#allocation3 + $0xc] sm:$0xf]
        %v4100 = vld [vmem:[#allocation3 + $0x10] sm:$0xf]
        %v4101 = vld [vmem:[#allocation3 + $0x14] sm:$0xf]
        %v4102 = vld [vmem:[#allocation3 + $0x18] sm:$0xf]
        %v4103 = vld [vmem:[#allocation3 + $0x1c] sm:$0xf]
        %v4104 = vld [vmem:[#allocation3 + $0x20] sm:$0xf]
        %v4105 = vld [vmem:[#allocation3 + $0x24] sm:$0xf]
        %v4106 = vld [vmem:[#allocation3 + $0x28] sm:$0xf]
        %v4107 = vld [vmem:[#allocation3 + $0x2c] sm:$0x3]
        %v4108 = vld [vmem:[#allocation9 + $0x140] sm:$0xf]
        %v4109 = vld [vmem:[#allocation9 + $0x144] sm:$0xf]
        %v4110 = vld [vmem:[#allocation9 + $0x148] sm:$0xf]
        %v4111 = vld [vmem:[#allocation9 + $0x14c] sm:$0xf]
        %v4112 = vld [vmem:[#allocation9 + $0x150] sm:$0xf]
        %v4113 = vld [vmem:[#allocation9 + $0x154] sm:$0xf]
        %v4114 = vld [vmem:[#allocation9 + $0x158] sm:$0xf]
        %v4115 = vld [vmem:[#allocation9 + $0x15c] sm:$0xf]
        %v4116 = vld [vmem:[#allocation9 + $0x160] sm:$0xf]
        %v4117 = vld [vmem:[#allocation9 + $0x164] sm:$0xf]
        %v4118 = vld [vmem:[#allocation9 + $0x168] sm:$0xf]
        %v4119 = vld [vmem:[#allocation9 + $0x16c] sm:$0xf]
        %v4120 = vld [vmem:[#allocation9 + $0x170] sm:$0xf]
        %v4121 = vld [vmem:[#allocation9 + $0x174] sm:$0xf]
        %v4122 = vld [vmem:[#allocation9 + $0x178] sm:$0xf]
        %v4123 = vld [vmem:[#allocation9 + $0x17c] sm:$0xf]
        %v4124 = vld [vmem:[#allocation2] sm:$0xff]
        %v4125 = vld [vmem:[#allocation2 + $0x8] sm:$0xff]
        %v4126 = vld [vmem:[#allocation2 + $0x10] sm:$0xff]
        %v4127 = vld [vmem:[#allocation2 + $0x18] sm:$0xff]
        %v4128 = vld [vmem:[#allocation2 + $0x20] sm:$0xff]
        %v4129 = vld [vmem:[#allocation2 + $0x28] sm:$0xff]
        %v4130 = vld [vmem:[#allocation2 + $0x30] sm:$0xff]
        %v4131 = vld [vmem:[#allocation2 + $0x38] sm:$0xff]
        %v4132 = vld [vmem:[#allocation2 + $0x40] sm:$0xff]
        %v4133 = vld [vmem:[#allocation2 + $0x48] sm:$0xff]
        %v4145 = vunpack.c.l.b16 %v4097
        %v4146 = vunpack.c.l.b16 %v4098
        %v4147 = vunpack.c.l.b16 %v4099
        %v4148 = vunpack.c.l.b16 %v4100
        %v4149 = vunpack.c.l.b16 %v4101
        %v4150 = vunpack.c.l.b16 %v4102
        %v4151 = vunpack.c.l.b16 %v4103
        %v4152 = vunpack.c.l.b16 %v4104
        %v4153 = vunpack.c.l.b16 %v4105
        %v4154 = vunpack.c.l.b16 %v4106
        %v4155 = vunpack.c.l.b16 %v4107
        %v4156 = vpack.c.b16 %v4146, %v4145
        %v4157 = vpack.c.b16 %v4148, %v4147
        %v4158 = vpack.c.b16 %v4150, %v4149
        %v4159 = vpack.c.b16 %v4152, %v4151
        %v4160 = vpack.c.b16 %v4154, %v4153
        %v4161 = vpack.c.b16 %v4155, %v4155
        %v4162 = vrot.slane %v4156, 2
        %v4163 = vrot.slane %v4157, 2
        %v4164 = vsel %vm1075, %v4162, %v4163
        %v4165 = vrot.slane %v4158, 2
        %v4166 = vsel %vm1075, %v4163, %v4165
        %v4167 = vrot.slane %v4159, 2
        %v4168 = vsel %vm1075, %v4165, %v4167
        %v4169 = vrot.slane %v4160, 2
        %v4170 = vsel %vm1075, %v4167, %v4169
        %v4171 = vrot.slane %v4161, 2
        %v4172 = vsel %vm1075, %v4169, %v4171
        %v4194 = vunpack.c.l.b16 %v4108
        %v4195 = vunpack.c.l.b16 %v4109
        %v4196 = vunpack.c.l.b16 %v4110
        %v4197 = vunpack.c.l.b16 %v4111
        %v4198 = vunpack.c.l.b16 %v4112
        %v4199 = vunpack.c.l.b16 %v4113
        %v4200 = vunpack.c.l.b16 %v4114
        %v4201 = vunpack.c.l.b16 %v4115
        %v4202 = vunpack.c.l.b16 %v4116
        %v4203 = vunpack.c.l.b16 %v4117
        %v4204 = vunpack.c.l.b16 %v4118
        %v4205 = vunpack.c.l.b16 %v4119
        %v4206 = vunpack.c.l.b16 %v4120
        %v4207 = vunpack.c.l.b16 %v4121
        %v4208 = vunpack.c.l.b16 %v4122
        %v4209 = vunpack.c.l.b16 %v4123
        %v4210 = vpack.c.b16 %v4195, %v4194
        %v4211 = vpack.c.b16 %v4197, %v4196
        %v4212 = vpack.c.b16 %v4199, %v4198
        %v4213 = vpack.c.b16 %v4201, %v4200
        %v4214 = vpack.c.b16 %v4203, %v4202
        %v4215 = vpack.c.b16 %v4205, %v4204
        %v4216 = vpack.c.b16 %v4207, %v4206
        %v4217 = vpack.c.b16 %v4209, %v4208
        %4226 = vmatprep.subr.bf16.mxu0 0
        %4227 = vmatpush1.bf16.msra.mxu0 %v4210
        %4228 = vmatprep.subr.bf16.mxu0 0
        %4229 = vmatpush1.bf16.msra.mxu0 %v4211
        %4230 = vmatprep.subr.bf16.mxu0 0
        %4231 = vmatpush1.bf16.msra.mxu0 %v4212
        %4232 = vmatprep.subr.bf16.mxu0 0
        %4233 = vmatpush1.bf16.msra.mxu0 %v4213
        %4234 = vmatprep.subr.bf16.mxu0 0
        %4235 = vmatpush1.bf16.msra.mxu0 %v4214
        %4236 = vmatprep.subr.bf16.mxu0 0
        %4237 = vmatpush1.bf16.msra.mxu0 %v4215
        %4238 = vmatprep.subr.bf16.mxu0 0
        %4239 = vmatpush1.bf16.msra.mxu0 %v4216
        %4240 = vmatprep.subr.bf16.mxu0 0
        %4241 = vmatpush1.bf16.msra.mxu0 %v4217
        %4242 = vmatprep.subr.bf16.mxu0 0
        %4243 = vmatpush1.bf16.msra.mxu0 0
        %4244 = vmatprep.subr.bf16.mxu0 0
        %4245 = vmatpush1.bf16.msra.mxu0 0
        %4246 = vmatprep.subr.bf16.mxu0 0
        %4247 = vmatpush1.bf16.msra.mxu0 0
        %4248 = vmatprep.subr.bf16.mxu0 0
        %4249 = vmatpush1.bf16.msra.mxu0 0
        %4250 = vmatprep.subr.bf16.mxu0 0
        %4251 = vmatpush1.bf16.msra.mxu0 0
        %4252 = vmatprep.subr.bf16.mxu0 0
        %4253 = vmatpush1.bf16.msra.mxu0 0
        %4254 = vmatprep.subr.bf16.mxu0 0
        %4255 = vmatpush1.bf16.msra.mxu0 0
        %4256 = vmatprep.subr.bf16.mxu0 0
        %4257 = vmatpush1.bf16.msra.mxu0 0
        %4258 = vmatprep.mubr.bf16.mxu0 0
        %4259 = vmatmul.mubr.bf16.gmra.mrb[0].mxu0 %v4164
        %v4260 = vpop.f32.mrb[0].mxu0
        %v4261 = vadd.f32 0.0, %v4260
        %v4262 = vpop.f32.mrb[0].mxu0
        %v4263 = vpop.f32.mrb[0].mxu0
        %v4264 = vadd.f32 0.0, %v4263
        %v4265 = vpop.f32.mrb[0].mxu0
        %4266 = vmatprep.mubr.bf16.mxu0 0
        %4267 = vmatmul.mubr.bf16.gmra.mrb[0].mxu0 %v4166
        %v4268 = vpop.f32.mrb[0].mxu0
        %v4269 = vadd.f32 0.0, %v4268
        %v4270 = vpop.f32.mrb[0].mxu0
        %v4271 = vpop.f32.mrb[0].mxu0
        %v4272 = vadd.f32 0.0, %v4271
        %v4273 = vpop.f32.mrb[0].mxu0
        %4274 = vmatprep.mubr.bf16.mxu0 0
        %4275 = vmatmul.mubr.bf16.gmra.mrb[0].mxu0 %v4168
        %v4276 = vpop.f32.mrb[0].mxu0
        %v4277 = vadd.f32 0.0, %v4276
        %v4278 = vpop.f32.mrb[0].mxu0
        %v4279 = vpop.f32.mrb[0].mxu0
        %v4280 = vadd.f32 0.0, %v4279
        %v4281 = vpop.f32.mrb[0].mxu0
        %4282 = vmatprep.mubr.bf16.mxu0 0
        %4283 = vmatmul.mubr.bf16.gmra.mrb[0].mxu0 %v4170
        %v4284 = vpop.f32.mrb[0].mxu0
        %v4285 = vadd.f32 0.0, %v4284
        %v4286 = vpop.f32.mrb[0].mxu0
        %v4287 = vpop.f32.mrb[0].mxu0
        %v4288 = vadd.f32 0.0, %v4287
        %v4289 = vpop.f32.mrb[0].mxu0
        %4290 = vmatprep.mubr.bf16.mxu0 0
        %4291 = vmatmul.mubr.bf16.gmra.mrb[0].mxu0 %v4172
        %v4292 = vpop.f32.mrb[0].mxu0
        %v4293 = vadd.f32 0.0, %v4292
        %v4294 = vpop.f32.mrb[0].mxu0
        %v4295 = vpop.f32.mrb[0].mxu0
        %v4296 = vadd.f32 0.0, %v4295
        %v4297 = vpop.f32.mrb[0].mxu0
        %4298 = vdwg.mxu0
        %v4299 = vadd.f32 %v4124, %v4261
        %v4300 = vadd.f32 %v4125, %v4264
        %v4301 = vadd.f32 %v4126, %v4269
        %v4302 = vadd.f32 %v4127, %v4272
        %v4303 = vadd.f32 %v4128, %v4277
        %v4304 = vadd.f32 %v4129, %v4280
        %v4305 = vadd.f32 %v4130, %v4285
        %v4306 = vadd.f32 %v4131, %v4288
        %v4307 = vadd.f32 %v4132, %v4293
        %v4308 = vadd.f32 %v4133, %v4296
        %4309 = vst [vmem:[#allocation2] sm:$0xff] %v4299
        %4310 = vst [vmem:[#allocation2 + $0x8] sm:$0xff] %v4300
        %4311 = vst [vmem:[#allocation2 + $0x10] sm:$0xff] %v4301
        %4312 = vst [vmem:[#allocation2 + $0x18] sm:$0xff] %v4302
        %4313 = vst [vmem:[#allocation2 + $0x20] sm:$0xff] %v4303
        %4314 = vst [vmem:[#allocation2 + $0x28] sm:$0xff] %v4304
        %4315 = vst [vmem:[#allocation2 + $0x30] sm:$0xff] %v4305
        %4316 = vst [vmem:[#allocation2 + $0x38] sm:$0xff] %v4306
        %4317 = vst [vmem:[#allocation2 + $0x40] sm:$0xff] %v4307
        %4318 = vst [vmem:[#allocation2 + $0x48] sm:$0xff] %v4308
        %v4319 = vld [vmem:[#allocation3 + $0x8] sm:$0xc]
        %v4320 = vld [vmem:[#allocation3 + $0xc] sm:$0xf]
        %v4321 = vld [vmem:[#allocation3 + $0x10] sm:$0xf]
        %v4322 = vld [vmem:[#allocation3 + $0x14] sm:$0xf]
        %v4323 = vld [vmem:[#allocation3 + $0x18] sm:$0xf]
        %v4324 = vld [vmem:[#allocation3 + $0x1c] sm:$0xf]
        %v4325 = vld [vmem:[#allocation3 + $0x20] sm:$0xf]
        %v4326 = vld [vmem:[#allocation3 + $0x24] sm:$0xf]
        %v4327 = vld [vmem:[#allocation3 + $0x28] sm:$0xf]
        %v4328 = vld [vmem:[#allocation3 + $0x2c] sm:$0xf]
        %v4329 = vld [vmem:[#allocation3 + $0x30] sm:$0x3]
        %v4330 = vld [vmem:[#allocation9 + $0x180] sm:$0xf]
        %v4331 = vld [vmem:[#allocation9 + $0x184] sm:$0xf]
        %v4332 = vld [vmem:[#allocation9 + $0x188] sm:$0xf]
        %v4333 = vld [vmem:[#allocation9 + $0x18c] sm:$0xf]
        %v4334 = vld [vmem:[#allocation9 + $0x190] sm:$0xf]
        %v4335 = vld [vmem:[#allocation9 + $0x194] sm:$0xf]
        %v4336 = vld [vmem:[#allocation9 + $0x198] sm:$0xf]
        %v4337 = vld [vmem:[#allocation9 + $0x19c] sm:$0xf]
        %v4338 = vld [vmem:[#allocation9 + $0x1a0] sm:$0xf]
        %v4339 = vld [vmem:[#allocation9 + $0x1a4] sm:$0xf]
        %v4340 = vld [vmem:[#allocation9 + $0x1a8] sm:$0xf]
        %v4341 = vld [vmem:[#allocation9 + $0x1ac] sm:$0xf]
        %v4342 = vld [vmem:[#allocation9 + $0x1b0] sm:$0xf]
        %v4343 = vld [vmem:[#allocation9 + $0x1b4] sm:$0xf]
        %v4344 = vld [vmem:[#allocation9 + $0x1b8] sm:$0xf]
        %v4345 = vld [vmem:[#allocation9 + $0x1bc] sm:$0xf]
        %v4346 = vld [vmem:[#allocation2] sm:$0xff]
        %v4347 = vld [vmem:[#allocation2 + $0x8] sm:$0xff]
        %v4348 = vld [vmem:[#allocation2 + $0x10] sm:$0xff]
        %v4349 = vld [vmem:[#allocation2 + $0x18] sm:$0xff]
        %v4350 = vld [vmem:[#allocation2 + $0x20] sm:$0xff]
        %v4351 = vld [vmem:[#allocation2 + $0x28] sm:$0xff]
        %v4352 = vld [vmem:[#allocation2 + $0x30] sm:$0xff]
        %v4353 = vld [vmem:[#allocation2 + $0x38] sm:$0xff]
        %v4354 = vld [vmem:[#allocation2 + $0x40] sm:$0xff]
        %v4355 = vld [vmem:[#allocation2 + $0x48] sm:$0xff]
        %v4367 = vunpack.c.l.b16 %v4319
        %v4368 = vunpack.c.l.b16 %v4320
        %v4369 = vunpack.c.l.b16 %v4321
        %v4370 = vunpack.c.l.b16 %v4322
        %v4371 = vunpack.c.l.b16 %v4323
        %v4372 = vunpack.c.l.b16 %v4324
        %v4373 = vunpack.c.l.b16 %v4325
        %v4374 = vunpack.c.l.b16 %v4326
        %v4375 = vunpack.c.l.b16 %v4327
        %v4376 = vunpack.c.l.b16 %v4328
        %v4377 = vunpack.c.l.b16 %v4329
        %v4378 = vpack.c.b16 %v4368, %v4367
        %v4379 = vpack.c.b16 %v4370, %v4369
        %v4380 = vpack.c.b16 %v4372, %v4371
        %v4381 = vpack.c.b16 %v4374, %v4373
        %v4382 = vpack.c.b16 %v4376, %v4375
        %v4383 = vpack.c.b16 %v4377, %v4377
        %v4384 = vrot.slane %v4378, 2
        %v4385 = vrot.slane %v4379, 2
        %v4386 = vsel %vm1075, %v4384, %v4385
        %v4387 = vrot.slane %v4380, 2
        %v4388 = vsel %vm1075, %v4385, %v4387
        %v4389 = vrot.slane %v4381, 2
        %v4390 = vsel %vm1075, %v4387, %v4389
        %v4391 = vrot.slane %v4382, 2
        %v4392 = vsel %vm1075, %v4389, %v4391
        %v4393 = vrot.slane %v4383, 2
        %v4394 = vsel %vm1075, %v4391, %v4393
        %v4416 = vunpack.c.l.b16 %v4330
        %v4417 = vunpack.c.l.b16 %v4331
        %v4418 = vunpack.c.l.b16 %v4332
        %v4419 = vunpack.c.l.b16 %v4333
        %v4420 = vunpack.c.l.b16 %v4334
        %v4421 = vunpack.c.l.b16 %v4335
        %v4422 = vunpack.c.l.b16 %v4336
        %v4423 = vunpack.c.l.b16 %v4337
        %v4424 = vunpack.c.l.b16 %v4338
        %v4425 = vunpack.c.l.b16 %v4339
        %v4426 = vunpack.c.l.b16 %v4340
        %v4427 = vunpack.c.l.b16 %v4341
        %v4428 = vunpack.c.l.b16 %v4342
        %v4429 = vunpack.c.l.b16 %v4343
        %v4430 = vunpack.c.l.b16 %v4344
        %v4431 = vunpack.c.l.b16 %v4345
        %v4432 = vpack.c.b16 %v4417, %v4416
        %v4433 = vpack.c.b16 %v4419, %v4418
        %v4434 = vpack.c.b16 %v4421, %v4420
        %v4435 = vpack.c.b16 %v4423, %v4422
        %v4436 = vpack.c.b16 %v4425, %v4424
        %v4437 = vpack.c.b16 %v4427, %v4426
        %v4438 = vpack.c.b16 %v4429, %v4428
        %v4439 = vpack.c.b16 %v4431, %v4430
        %4448 = vmatprep.subr.bf16.mxu0 0
        %4449 = vmatpush1.bf16.msra.mxu0 %v4432
        %4450 = vmatprep.subr.bf16.mxu0 0
        %4451 = vmatpush1.bf16.msra.mxu0 %v4433
        %4452 = vmatprep.subr.bf16.mxu0 0
        %4453 = vmatpush1.bf16.msra.mxu0 %v4434
        %4454 = vmatprep.subr.bf16.mxu0 0
        %4455 = vmatpush1.bf16.msra.mxu0 %v4435
        %4456 = vmatprep.subr.bf16.mxu0 0
        %4457 = vmatpush1.bf16.msra.mxu0 %v4436
        %4458 = vmatprep.subr.bf16.mxu0 0
        %4459 = vmatpush1.bf16.msra.mxu0 %v4437
        %4460 = vmatprep.subr.bf16.mxu0 0
        %4461 = vmatpush1.bf16.msra.mxu0 %v4438
        %4462 = vmatprep.subr.bf16.mxu0 0
        %4463 = vmatpush1.bf16.msra.mxu0 %v4439
        %4464 = vmatprep.subr.bf16.mxu0 0
        %4465 = vmatpush1.bf16.msra.mxu0 0
        %4466 = vmatprep.subr.bf16.mxu0 0
        %4467 = vmatpush1.bf16.msra.mxu0 0
        %4468 = vmatprep.subr.bf16.mxu0 0
        %4469 = vmatpush1.bf16.msra.mxu0 0
        %4470 = vmatprep.subr.bf16.mxu0 0
        %4471 = vmatpush1.bf16.msra.mxu0 0
        %4472 = vmatprep.subr.bf16.mxu0 0
        %4473 = vmatpush1.bf16.msra.mxu0 0
        %4474 = vmatprep.subr.bf16.mxu0 0
        %4475 = vmatpush1.bf16.msra.mxu0 0
        %4476 = vmatprep.subr.bf16.mxu0 0
        %4477 = vmatpush1.bf16.msra.mxu0 0
        %4478 = vmatprep.subr.bf16.mxu0 0
        %4479 = vmatpush1.bf16.msra.mxu0 0
        %4480 = vmatprep.mubr.bf16.mxu0 0
        %4481 = vmatmul.mubr.bf16.gmra.mrb[0].mxu0 %v4386
        %v4482 = vpop.f32.mrb[0].mxu0
        %v4483 = vadd.f32 0.0, %v4482
        %v4484 = vpop.f32.mrb[0].mxu0
        %v4485 = vpop.f32.mrb[0].mxu0
        %v4486 = vadd.f32 0.0, %v4485
        %v4487 = vpop.f32.mrb[0].mxu0
        %4488 = vmatprep.mubr.bf16.mxu0 0
        %4489 = vmatmul.mubr.bf16.gmra.mrb[0].mxu0 %v4388
        %v4490 = vpop.f32.mrb[0].mxu0
        %v4491 = vadd.f32 0.0, %v4490
        %v4492 = vpop.f32.mrb[0].mxu0
        %v4493 = vpop.f32.mrb[0].mxu0
        %v4494 = vadd.f32 0.0, %v4493
        %v4495 = vpop.f32.mrb[0].mxu0
        %4496 = vmatprep.mubr.bf16.mxu0 0
        %4497 = vmatmul.mubr.bf16.gmra.mrb[0].mxu0 %v4390
        %v4498 = vpop.f32.mrb[0].mxu0
        %v4499 = vadd.f32 0.0, %v4498
        %v4500 = vpop.f32.mrb[0].mxu0
        %v4501 = vpop.f32.mrb[0].mxu0
        %v4502 = vadd.f32 0.0, %v4501
        %v4503 = vpop.f32.mrb[0].mxu0
        %4504 = vmatprep.mubr.bf16.mxu0 0
        %4505 = vmatmul.mubr.bf16.gmra.mrb[0].mxu0 %v4392
        %v4506 = vpop.f32.mrb[0].mxu0
        %v4507 = vadd.f32 0.0, %v4506
        %v4508 = vpop.f32.mrb[0].mxu0
        %v4509 = vpop.f32.mrb[0].mxu0
        %v4510 = vadd.f32 0.0, %v4509
        %v4511 = vpop.f32.mrb[0].mxu0
        %4512 = vmatprep.mubr.bf16.mxu0 0
        %4513 = vmatmul.mubr.bf16.gmra.mrb[0].mxu0 %v4394
        %v4514 = vpop.f32.mrb[0].mxu0
        %v4515 = vadd.f32 0.0, %v4514
        %v4516 = vpop.f32.mrb[0].mxu0
        %v4517 = vpop.f32.mrb[0].mxu0
        %v4518 = vadd.f32 0.0, %v4517
        %v4519 = vpop.f32.mrb[0].mxu0
        %4520 = vdwg.mxu0
        %v4521 = vadd.f32 %v4346, %v4483
        %v4522 = vadd.f32 %v4347, %v4486
        %v4523 = vadd.f32 %v4348, %v4491
        %v4524 = vadd.f32 %v4349, %v4494
        %v4525 = vadd.f32 %v4350, %v4499
        %v4526 = vadd.f32 %v4351, %v4502
        %v4527 = vadd.f32 %v4352, %v4507
        %v4528 = vadd.f32 %v4353, %v4510
        %v4529 = vadd.f32 %v4354, %v4515
        %v4530 = vadd.f32 %v4355, %v4518
        %4531 = vst [vmem:[#allocation2] sm:$0xff] %v4521
        %4532 = vst [vmem:[#allocation2 + $0x8] sm:$0xff] %v4522
        %4533 = vst [vmem:[#allocation2 + $0x10] sm:$0xff] %v4523
        %4534 = vst [vmem:[#allocation2 + $0x18] sm:$0xff] %v4524
        %4535 = vst [vmem:[#allocation2 + $0x20] sm:$0xff] %v4525
        %4536 = vst [vmem:[#allocation2 + $0x28] sm:$0xff] %v4526
        %4537 = vst [vmem:[#allocation2 + $0x30] sm:$0xff] %v4527
        %4538 = vst [vmem:[#allocation2 + $0x38] sm:$0xff] %v4528
        %4539 = vst [vmem:[#allocation2 + $0x40] sm:$0xff] %v4529
        %4540 = vst [vmem:[#allocation2 + $0x48] sm:$0xff] %v4530
        %v4541 = vld [vmem:[#allocation3 + $0x8] sm:$0xc]
        %v4542 = vld [vmem:[#allocation3 + $0xc] sm:$0xf]
        %v4543 = vld [vmem:[#allocation3 + $0x10] sm:$0xf]
        %v4544 = vld [vmem:[#allocation3 + $0x14] sm:$0xf]
        %v4545 = vld [vmem:[#allocation3 + $0x18] sm:$0xf]
        %v4546 = vld [vmem:[#allocation3 + $0x1c] sm:$0xf]
        %v4547 = vld [vmem:[#allocation3 + $0x20] sm:$0xf]
        %v4548 = vld [vmem:[#allocation3 + $0x24] sm:$0xf]
        %v4549 = vld [vmem:[#allocation3 + $0x28] sm:$0xf]
        %v4550 = vld [vmem:[#allocation3 + $0x2c] sm:$0xf]
        %v4551 = vld [vmem:[#allocation3 + $0x30] sm:$0x7]
        %v4552 = vld [vmem:[#allocation9 + $0x1c0] sm:$0xf]
        %v4553 = vld [vmem:[#allocation9 + $0x1c4] sm:$0xf]
        %v4554 = vld [vmem:[#allocation9 + $0x1c8] sm:$0xf]
        %v4555 = vld [vmem:[#allocation9 + $0x1cc] sm:$0xf]
        %v4556 = vld [vmem:[#allocation9 + $0x1d0] sm:$0xf]
        %v4557 = vld [vmem:[#allocation9 + $0x1d4] sm:$0xf]
        %v4558 = vld [vmem:[#allocation9 + $0x1d8] sm:$0xf]
        %v4559 = vld [vmem:[#allocation9 + $0x1dc] sm:$0xf]
        %v4560 = vld [vmem:[#allocation9 + $0x1e0] sm:$0xf]
        %v4561 = vld [vmem:[#allocation9 + $0x1e4] sm:$0xf]
        %v4562 = vld [vmem:[#allocation9 + $0x1e8] sm:$0xf]
        %v4563 = vld [vmem:[#allocation9 + $0x1ec] sm:$0xf]
        %v4564 = vld [vmem:[#allocation9 + $0x1f0] sm:$0xf]
        %v4565 = vld [vmem:[#allocation9 + $0x1f4] sm:$0xf]
        %v4566 = vld [vmem:[#allocation9 + $0x1f8] sm:$0xf]
        %v4567 = vld [vmem:[#allocation9 + $0x1fc] sm:$0xf]
        %v4568 = vld [vmem:[#allocation2] sm:$0xff]
        %v4569 = vld [vmem:[#allocation2 + $0x8] sm:$0xff]
        %v4570 = vld [vmem:[#allocation2 + $0x10] sm:$0xff]
        %v4571 = vld [vmem:[#allocation2 + $0x18] sm:$0xff]
        %v4572 = vld [vmem:[#allocation2 + $0x20] sm:$0xff]
        %v4573 = vld [vmem:[#allocation2 + $0x28] sm:$0xff]
        %v4574 = vld [vmem:[#allocation2 + $0x30] sm:$0xff]
        %v4575 = vld [vmem:[#allocation2 + $0x38] sm:$0xff]
        %v4576 = vld [vmem:[#allocation2 + $0x40] sm:$0xff]
        %v4577 = vld [vmem:[#allocation2 + $0x48] sm:$0xff]
        %v4589 = vunpack.c.l.b16 %v4541
        %v4590 = vunpack.c.l.b16 %v4542
        %v4591 = vunpack.c.l.b16 %v4543
        %v4592 = vunpack.c.l.b16 %v4544
        %v4593 = vunpack.c.l.b16 %v4545
        %v4594 = vunpack.c.l.b16 %v4546
        %v4595 = vunpack.c.l.b16 %v4547
        %v4596 = vunpack.c.l.b16 %v4548
        %v4597 = vunpack.c.l.b16 %v4549
        %v4598 = vunpack.c.l.b16 %v4550
        %v4599 = vunpack.c.l.b16 %v4551
        %v4600 = vpack.c.b16 %v4590, %v4589
        %v4601 = vpack.c.b16 %v4592, %v4591
        %v4602 = vpack.c.b16 %v4594, %v4593
        %v4603 = vpack.c.b16 %v4596, %v4595
        %v4604 = vpack.c.b16 %v4598, %v4597
        %v4605 = vpack.c.b16 %v4599, %v4599
        %v4607 = vshrl.u32 %v4600, 16
        %v4609 = vrot.slane %v4607, 2
        %v4610 = vshll.u32 %v4600, 16
        %v4612 = vrot.slane %v4610, 3
        %v4613 = vor.u32 %v4609, %v4612
        %v4615 = vshrl.u32 %v4601, 16
        %v4617 = vrot.slane %v4615, 2
        %v4618 = vshll.u32 %v4601, 16
        %v4620 = vrot.slane %v4618, 3
        %v4621 = vor.u32 %v4617, %v4620
        %v4622 = vsel %vm1521, %v4613, %v4621
        %v4624 = vshrl.u32 %v4602, 16
        %v4626 = vrot.slane %v4624, 2
        %v4627 = vshll.u32 %v4602, 16
        %v4629 = vrot.slane %v4627, 3
        %v4630 = vor.u32 %v4626, %v4629
        %v4631 = vsel %vm1521, %v4621, %v4630
        %v4633 = vshrl.u32 %v4603, 16
        %v4635 = vrot.slane %v4633, 2
        %v4636 = vshll.u32 %v4603, 16
        %v4638 = vrot.slane %v4636, 3
        %v4639 = vor.u32 %v4635, %v4638
        %v4640 = vsel %vm1521, %v4630, %v4639
        %v4642 = vshrl.u32 %v4604, 16
        %v4644 = vrot.slane %v4642, 2
        %v4645 = vshll.u32 %v4604, 16
        %v4647 = vrot.slane %v4645, 3
        %v4648 = vor.u32 %v4644, %v4647
        %v4649 = vsel %vm1521, %v4639, %v4648
        %v4651 = vshrl.u32 %v4605, 16
        %v4653 = vrot.slane %v4651, 2
        %v4654 = vshll.u32 %v4605, 16
        %v4656 = vrot.slane %v4654, 3
        %v4657 = vor.u32 %v4653, %v4656
        %v4658 = vsel %vm1521, %v4648, %v4657
        %v4680 = vunpack.c.l.b16 %v4552
        %v4681 = vunpack.c.l.b16 %v4553
        %v4682 = vunpack.c.l.b16 %v4554
        %v4683 = vunpack.c.l.b16 %v4555
        %v4684 = vunpack.c.l.b16 %v4556
        %v4685 = vunpack.c.l.b16 %v4557
        %v4686 = vunpack.c.l.b16 %v4558
        %v4687 = vunpack.c.l.b16 %v4559
        %v4688 = vunpack.c.l.b16 %v4560
        %v4689 = vunpack.c.l.b16 %v4561
        %v4690 = vunpack.c.l.b16 %v4562
        %v4691 = vunpack.c.l.b16 %v4563
        %v4692 = vunpack.c.l.b16 %v4564
        %v4693 = vunpack.c.l.b16 %v4565
        %v4694 = vunpack.c.l.b16 %v4566
        %v4695 = vunpack.c.l.b16 %v4567
        %v4696 = vpack.c.b16 %v4681, %v4680
        %v4697 = vpack.c.b16 %v4683, %v4682
        %v4698 = vpack.c.b16 %v4685, %v4684
        %v4699 = vpack.c.b16 %v4687, %v4686
        %v4700 = vpack.c.b16 %v4689, %v4688
        %v4701 = vpack.c.b16 %v4691, %v4690
        %v4702 = vpack.c.b16 %v4693, %v4692
        %v4703 = vpack.c.b16 %v4695, %v4694
        %4712 = vmatprep.subr.bf16.mxu0 0
        %4713 = vmatpush1.bf16.msra.mxu0 %v4696
        %4714 = vmatprep.subr.bf16.mxu0 0
        %4715 = vmatpush1.bf16.msra.mxu0 %v4697
        %4716 = vmatprep.subr.bf16.mxu0 0
        %4717 = vmatpush1.bf16.msra.mxu0 %v4698
        %4718 = vmatprep.subr.bf16.mxu0 0
        %4719 = vmatpush1.bf16.msra.mxu0 %v4699
        %4720 = vmatprep.subr.bf16.mxu0 0
        %4721 = vmatpush1.bf16.msra.mxu0 %v4700
        %4722 = vmatprep.subr.bf16.mxu0 0
        %4723 = vmatpush1.bf16.msra.mxu0 %v4701
        %4724 = vmatprep.subr.bf16.mxu0 0
        %4725 = vmatpush1.bf16.msra.mxu0 %v4702
        %4726 = vmatprep.subr.bf16.mxu0 0
        %4727 = vmatpush1.bf16.msra.mxu0 %v4703
        %4728 = vmatprep.subr.bf16.mxu0 0
        %4729 = vmatpush1.bf16.msra.mxu0 0
        %4730 = vmatprep.subr.bf16.mxu0 0
        %4731 = vmatpush1.bf16.msra.mxu0 0
        %4732 = vmatprep.subr.bf16.mxu0 0
        %4733 = vmatpush1.bf16.msra.mxu0 0
        %4734 = vmatprep.subr.bf16.mxu0 0
        %4735 = vmatpush1.bf16.msra.mxu0 0
        %4736 = vmatprep.subr.bf16.mxu0 0
        %4737 = vmatpush1.bf16.msra.mxu0 0
        %4738 = vmatprep.subr.bf16.mxu0 0
        %4739 = vmatpush1.bf16.msra.mxu0 0
        %4740 = vmatprep.subr.bf16.mxu0 0
        %4741 = vmatpush1.bf16.msra.mxu0 0
        %4742 = vmatprep.subr.bf16.mxu0 0
        %4743 = vmatpush1.bf16.msra.mxu0 0
        %4744 = vmatprep.mubr.bf16.mxu0 0
        %4745 = vmatmul.mubr.bf16.gmra.mrb[0].mxu0 %v4622
        %v4746 = vpop.f32.mrb[0].mxu0
        %v4747 = vadd.f32 0.0, %v4746
        %v4748 = vpop.f32.mrb[0].mxu0
        %v4749 = vpop.f32.mrb[0].mxu0
        %v4750 = vadd.f32 0.0, %v4749
        %v4751 = vpop.f32.mrb[0].mxu0
        %4752 = vmatprep.mubr.bf16.mxu0 0
        %4753 = vmatmul.mubr.bf16.gmra.mrb[0].mxu0 %v4631
        %v4754 = vpop.f32.mrb[0].mxu0
        %v4755 = vadd.f32 0.0, %v4754
        %v4756 = vpop.f32.mrb[0].mxu0
        %v4757 = vpop.f32.mrb[0].mxu0
        %v4758 = vadd.f32 0.0, %v4757
        %v4759 = vpop.f32.mrb[0].mxu0
        %4760 = vmatprep.mubr.bf16.mxu0 0
        %4761 = vmatmul.mubr.bf16.gmra.mrb[0].mxu0 %v4640
        %v4762 = vpop.f32.mrb[0].mxu0
        %v4763 = vadd.f32 0.0, %v4762
        %v4764 = vpop.f32.mrb[0].mxu0
        %v4765 = vpop.f32.mrb[0].mxu0
        %v4766 = vadd.f32 0.0, %v4765
        %v4767 = vpop.f32.mrb[0].mxu0
        %4768 = vmatprep.mubr.bf16.mxu0 0
        %4769 = vmatmul.mubr.bf16.gmra.mrb[0].mxu0 %v4649
        %v4770 = vpop.f32.mrb[0].mxu0
        %v4771 = vadd.f32 0.0, %v4770
        %v4772 = vpop.f32.mrb[0].mxu0
        %v4773 = vpop.f32.mrb[0].mxu0
        %v4774 = vadd.f32 0.0, %v4773
        %v4775 = vpop.f32.mrb[0].mxu0
        %4776 = vmatprep.mubr.bf16.mxu0 0
        %4777 = vmatmul.mubr.bf16.gmra.mrb[0].mxu0 %v4658
        %v4778 = vpop.f32.mrb[0].mxu0
        %v4779 = vadd.f32 0.0, %v4778
        %v4780 = vpop.f32.mrb[0].mxu0
        %v4781 = vpop.f32.mrb[0].mxu0
        %v4782 = vadd.f32 0.0, %v4781
        %v4783 = vpop.f32.mrb[0].mxu0
        %4784 = vdwg.mxu0
        %v4785 = vadd.f32 %v4568, %v4747
        %v4786 = vadd.f32 %v4569, %v4750
        %v4787 = vadd.f32 %v4570, %v4755
        %v4788 = vadd.f32 %v4571, %v4758
        %v4789 = vadd.f32 %v4572, %v4763
        %v4790 = vadd.f32 %v4573, %v4766
        %v4791 = vadd.f32 %v4574, %v4771
        %v4792 = vadd.f32 %v4575, %v4774
        %v4793 = vadd.f32 %v4576, %v4779
        %v4794 = vadd.f32 %v4577, %v4782
        %4795 = vst [vmem:[#allocation2] sm:$0xff] %v4785
        %4796 = vst [vmem:[#allocation2 + $0x8] sm:$0xff] %v4786
        %4797 = vst [vmem:[#allocation2 + $0x10] sm:$0xff] %v4787
        %4798 = vst [vmem:[#allocation2 + $0x18] sm:$0xff] %v4788
        %4799 = vst [vmem:[#allocation2 + $0x20] sm:$0xff] %v4789
        %4800 = vst [vmem:[#allocation2 + $0x28] sm:$0xff] %v4790
        %4801 = vst [vmem:[#allocation2 + $0x30] sm:$0xff] %v4791
        %4802 = vst [vmem:[#allocation2 + $0x38] sm:$0xff] %v4792
        %4803 = vst [vmem:[#allocation2 + $0x40] sm:$0xff] %v4793
        %4804 = vst [vmem:[#allocation2 + $0x48] sm:$0xff] %v4794
        %v4805 = vld [vmem:[#allocation3 + $0x8] sm:$0x8]
        %v4806 = vld [vmem:[#allocation3 + $0xc] sm:$0xf]
        %v4807 = vld [vmem:[#allocation3 + $0x10] sm:$0xf]
        %v4808 = vld [vmem:[#allocation3 + $0x14] sm:$0xf]
        %v4809 = vld [vmem:[#allocation3 + $0x18] sm:$0xf]
        %v4810 = vld [vmem:[#allocation3 + $0x1c] sm:$0xf]
        %v4811 = vld [vmem:[#allocation3 + $0x20] sm:$0xf]
        %v4812 = vld [vmem:[#allocation3 + $0x24] sm:$0xf]
        %v4813 = vld [vmem:[#allocation3 + $0x28] sm:$0xf]
        %v4814 = vld [vmem:[#allocation3 + $0x2c] sm:$0xf]
        %v4815 = vld [vmem:[#allocation3 + $0x30] sm:$0x7]
        %v4816 = vld [vmem:[#allocation9 + $0x200] sm:$0xf]
        %v4817 = vld [vmem:[#allocation9 + $0x204] sm:$0xf]
        %v4818 = vld [vmem:[#allocation9 + $0x208] sm:$0xf]
        %v4819 = vld [vmem:[#allocation9 + $0x20c] sm:$0xf]
        %v4820 = vld [vmem:[#allocation9 + $0x210] sm:$0xf]
        %v4821 = vld [vmem:[#allocation9 + $0x214] sm:$0xf]
        %v4822 = vld [vmem:[#allocation9 + $0x218] sm:$0xf]
        %v4823 = vld [vmem:[#allocation9 + $0x21c] sm:$0xf]
        %v4824 = vld [vmem:[#allocation9 + $0x220] sm:$0xf]
        %v4825 = vld [vmem:[#allocation9 + $0x224] sm:$0xf]
        %v4826 = vld [vmem:[#allocation9 + $0x228] sm:$0xf]
        %v4827 = vld [vmem:[#allocation9 + $0x22c] sm:$0xf]
        %v4828 = vld [vmem:[#allocation9 + $0x230] sm:$0xf]
        %v4829 = vld [vmem:[#allocation9 + $0x234] sm:$0xf]
        %v4830 = vld [vmem:[#allocation9 + $0x238] sm:$0xf]
        %v4831 = vld [vmem:[#allocation9 + $0x23c] sm:$0xf]
        %v4832 = vld [vmem:[#allocation2] sm:$0xff]
        %v4833 = vld [vmem:[#allocation2 + $0x8] sm:$0xff]
        %v4834 = vld [vmem:[#allocation2 + $0x10] sm:$0xff]
        %v4835 = vld [vmem:[#allocation2 + $0x18] sm:$0xff]
        %v4836 = vld [vmem:[#allocation2 + $0x20] sm:$0xff]
        %v4837 = vld [vmem:[#allocation2 + $0x28] sm:$0xff]
        %v4838 = vld [vmem:[#allocation2 + $0x30] sm:$0xff]
        %v4839 = vld [vmem:[#allocation2 + $0x38] sm:$0xff]
        %v4840 = vld [vmem:[#allocation2 + $0x40] sm:$0xff]
        %v4841 = vld [vmem:[#allocation2 + $0x48] sm:$0xff]
        %v4853 = vunpack.c.l.b16 %v4805
        %v4854 = vunpack.c.l.b16 %v4806
        %v4855 = vunpack.c.l.b16 %v4807
        %v4856 = vunpack.c.l.b16 %v4808
        %v4857 = vunpack.c.l.b16 %v4809
        %v4858 = vunpack.c.l.b16 %v4810
        %v4859 = vunpack.c.l.b16 %v4811
        %v4860 = vunpack.c.l.b16 %v4812
        %v4861 = vunpack.c.l.b16 %v4813
        %v4862 = vunpack.c.l.b16 %v4814
        %v4863 = vunpack.c.l.b16 %v4815
        %v4864 = vpack.c.b16 %v4854, %v4853
        %v4865 = vpack.c.b16 %v4856, %v4855
        %v4866 = vpack.c.b16 %v4858, %v4857
        %v4867 = vpack.c.b16 %v4860, %v4859
        %v4868 = vpack.c.b16 %v4862, %v4861
        %v4869 = vpack.c.b16 %v4863, %v4863
        %v4870 = vrot.slane %v4864, 3
        %v4871 = vrot.slane %v4865, 3
        %v4872 = vsel %vm1298, %v4870, %v4871
        %v4873 = vrot.slane %v4866, 3
        %v4874 = vsel %vm1298, %v4871, %v4873
        %v4875 = vrot.slane %v4867, 3
        %v4876 = vsel %vm1298, %v4873, %v4875
        %v4877 = vrot.slane %v4868, 3
        %v4878 = vsel %vm1298, %v4875, %v4877
        %v4879 = vrot.slane %v4869, 3
        %v4880 = vsel %vm1298, %v4877, %v4879
        %v4902 = vunpack.c.l.b16 %v4816
        %v4903 = vunpack.c.l.b16 %v4817
        %v4904 = vunpack.c.l.b16 %v4818
        %v4905 = vunpack.c.l.b16 %v4819
        %v4906 = vunpack.c.l.b16 %v4820
        %v4907 = vunpack.c.l.b16 %v4821
        %v4908 = vunpack.c.l.b16 %v4822
        %v4909 = vunpack.c.l.b16 %v4823
        %v4910 = vunpack.c.l.b16 %v4824
        %v4911 = vunpack.c.l.b16 %v4825
        %v4912 = vunpack.c.l.b16 %v4826
        %v4913 = vunpack.c.l.b16 %v4827
        %v4914 = vunpack.c.l.b16 %v4828
        %v4915 = vunpack.c.l.b16 %v4829
        %v4916 = vunpack.c.l.b16 %v4830
        %v4917 = vunpack.c.l.b16 %v4831
        %v4918 = vpack.c.b16 %v4903, %v4902
        %v4919 = vpack.c.b16 %v4905, %v4904
        %v4920 = vpack.c.b16 %v4907, %v4906
        %v4921 = vpack.c.b16 %v4909, %v4908
        %v4922 = vpack.c.b16 %v4911, %v4910
        %v4923 = vpack.c.b16 %v4913, %v4912
        %v4924 = vpack.c.b16 %v4915, %v4914
        %v4925 = vpack.c.b16 %v4917, %v4916
        %4934 = vmatprep.subr.bf16.mxu0 0
        %4935 = vmatpush1.bf16.msra.mxu0 %v4918
        %4936 = vmatprep.subr.bf16.mxu0 0
        %4937 = vmatpush1.bf16.msra.mxu0 %v4919
        %4938 = vmatprep.subr.bf16.mxu0 0
        %4939 = vmatpush1.bf16.msra.mxu0 %v4920
        %4940 = vmatprep.subr.bf16.mxu0 0
        %4941 = vmatpush1.bf16.msra.mxu0 %v4921
        %4942 = vmatprep.subr.bf16.mxu0 0
        %4943 = vmatpush1.bf16.msra.mxu0 %v4922
        %4944 = vmatprep.subr.bf16.mxu0 0
        %4945 = vmatpush1.bf16.msra.mxu0 %v4923
        %4946 = vmatprep.subr.bf16.mxu0 0
        %4947 = vmatpush1.bf16.msra.mxu0 %v4924
        %4948 = vmatprep.subr.bf16.mxu0 0
        %4949 = vmatpush1.bf16.msra.mxu0 %v4925
        %4950 = vmatprep.subr.bf16.mxu0 0
        %4951 = vmatpush1.bf16.msra.mxu0 0
        %4952 = vmatprep.subr.bf16.mxu0 0
        %4953 = vmatpush1.bf16.msra.mxu0 0
        %4954 = vmatprep.subr.bf16.mxu0 0
        %4955 = vmatpush1.bf16.msra.mxu0 0
        %4956 = vmatprep.subr.bf16.mxu0 0
        %4957 = vmatpush1.bf16.msra.mxu0 0
        %4958 = vmatprep.subr.bf16.mxu0 0
        %4959 = vmatpush1.bf16.msra.mxu0 0
        %4960 = vmatprep.subr.bf16.mxu0 0
        %4961 = vmatpush1.bf16.msra.mxu0 0
        %4962 = vmatprep.subr.bf16.mxu0 0
        %4963 = vmatpush1.bf16.msra.mxu0 0
        %4964 = vmatprep.subr.bf16.mxu0 0
        %4965 = vmatpush1.bf16.msra.mxu0 0
        %4966 = vmatprep.mubr.bf16.mxu0 0
        %4967 = vmatmul.mubr.bf16.gmra.mrb[0].mxu0 %v4872
        %v4968 = vpop.f32.mrb[0].mxu0
        %v4969 = vadd.f32 0.0, %v4968
        %v4970 = vpop.f32.mrb[0].mxu0
        %v4971 = vpop.f32.mrb[0].mxu0
        %v4972 = vadd.f32 0.0, %v4971
        %v4973 = vpop.f32.mrb[0].mxu0
        %4974 = vmatprep.mubr.bf16.mxu0 0
        %4975 = vmatmul.mubr.bf16.gmra.mrb[0].mxu0 %v4874
        %v4976 = vpop.f32.mrb[0].mxu0
        %v4977 = vadd.f32 0.0, %v4976
        %v4978 = vpop.f32.mrb[0].mxu0
        %v4979 = vpop.f32.mrb[0].mxu0
        %v4980 = vadd.f32 0.0, %v4979
        %v4981 = vpop.f32.mrb[0].mxu0
        %4982 = vmatprep.mubr.bf16.mxu0 0
        %4983 = vmatmul.mubr.bf16.gmra.mrb[0].mxu0 %v4876
        %v4984 = vpop.f32.mrb[0].mxu0
        %v4985 = vadd.f32 0.0, %v4984
        %v4986 = vpop.f32.mrb[0].mxu0
        %v4987 = vpop.f32.mrb[0].mxu0
        %v4988 = vadd.f32 0.0, %v4987
        %v4989 = vpop.f32.mrb[0].mxu0
        %4990 = vmatprep.mubr.bf16.mxu0 0
        %4991 = vmatmul.mubr.bf16.gmra.mrb[0].mxu0 %v4878
        %v4992 = vpop.f32.mrb[0].mxu0
        %v4993 = vadd.f32 0.0, %v4992
        %v4994 = vpop.f32.mrb[0].mxu0
        %v4995 = vpop.f32.mrb[0].mxu0
        %v4996 = vadd.f32 0.0, %v4995
        %v4997 = vpop.f32.mrb[0].mxu0
        %4998 = vmatprep.mubr.bf16.mxu0 0
        %4999 = vmatmul.mubr.bf16.gmra.mrb[0].mxu0 %v4880
        %v5000 = vpop.f32.mrb[0].mxu0
        %v5001 = vadd.f32 0.0, %v5000
        %v5002 = vpop.f32.mrb[0].mxu0
        %v5003 = vpop.f32.mrb[0].mxu0
        %v5004 = vadd.f32 0.0, %v5003
        %v5005 = vpop.f32.mrb[0].mxu0
        %5006 = vdwg.mxu0
        %v5007 = vadd.f32 %v4832, %v4969
        %v5008 = vadd.f32 %v4833, %v4972
        %v5009 = vadd.f32 %v4834, %v4977
        %v5010 = vadd.f32 %v4835, %v4980
        %v5011 = vadd.f32 %v4836, %v4985
        %v5012 = vadd.f32 %v4837, %v4988
        %v5013 = vadd.f32 %v4838, %v4993
        %v5014 = vadd.f32 %v4839, %v4996
        %v5015 = vadd.f32 %v4840, %v5001
        %v5016 = vadd.f32 %v4841, %v5004
        %5017 = vst [vmem:[#allocation2] sm:$0xff] %v5007
        %5018 = vst [vmem:[#allocation2 + $0x8] sm:$0xff] %v5008
        %5019 = vst [vmem:[#allocation2 + $0x10] sm:$0xff] %v5009
        %5020 = vst [vmem:[#allocation2 + $0x18] sm:$0xff] %v5010
        %5021 = vst [vmem:[#allocation2 + $0x20] sm:$0xff] %v5011
        %5022 = vst [vmem:[#allocation2 + $0x28] sm:$0xff] %v5012
        %5023 = vst [vmem:[#allocation2 + $0x30] sm:$0xff] %v5013
        %5024 = vst [vmem:[#allocation2 + $0x38] sm:$0xff] %v5014
        %5025 = vst [vmem:[#allocation2 + $0x40] sm:$0xff] %v5015
        %5026 = vst [vmem:[#allocation2 + $0x48] sm:$0xff] %v5016
        %v5027 = vld [vmem:[#allocation2] sm:$0xff]
        %v5028 = vld [vmem:[#allocation2 + $0x8] sm:$0xff]
        %v5029 = vld [vmem:[#allocation2 + $0x10] sm:$0xff]
        %v5030 = vld [vmem:[#allocation2 + $0x18] sm:$0xff]
        %v5031 = vld [vmem:[#allocation2 + $0x20] sm:$0xff]
        %v5032 = vld [vmem:[#allocation2 + $0x28] sm:$0xff]
        %v5033 = vld [vmem:[#allocation2 + $0x30] sm:$0xff]
        %v5034 = vld [vmem:[#allocation2 + $0x38] sm:$0xff]
        %v5035 = vld [vmem:[#allocation2 + $0x40] sm:$0xff]
        %v5036 = vld [vmem:[#allocation2 + $0x48] sm:$0xff]
        %v5037 = vld [vmem:[%s4] sm:$0x1]
        %v5039 = vlaneseq
        %v5040 = vshrl.u32 %v5039, 7
        %v5041 = vsub.s32 0, %v5040
        %v5042 = vrot.slane %v5037, %v5041
        %v5044 = vadd.f32 %v5027, %v5042
        %v5045 = vadd.f32 %v5028, %v5042
        %v5046 = vadd.f32 %v5029, %v5042
        %v5047 = vadd.f32 %v5030, %v5042
        %v5048 = vadd.f32 %v5031, %v5042
        %v5049 = vadd.f32 %v5032, %v5042
        %v5050 = vadd.f32 %v5033, %v5042
        %v5051 = vadd.f32 %v5034, %v5042
        %v5052 = vadd.f32 %v5035, %v5042
        %v5053 = vadd.f32 %v5036, %v5042
        %v5054 = vmax.f32 %v5044, 0.0
        %v5055 = vmax.f32 %v5045, 0.0
        %v5056 = vmax.f32 %v5046, 0.0
        %v5057 = vmax.f32 %v5047, 0.0
        %v5058 = vmax.f32 %v5048, 0.0
        %v5059 = vmax.f32 %v5049, 0.0
        %v5060 = vmax.f32 %v5050, 0.0
        %v5061 = vmax.f32 %v5051, 0.0
        %v5062 = vmax.f32 %v5052, 0.0
        %v5063 = vmax.f32 %v5053, 0.0
        %v5064 = vpack.c.bf16 %v5055, %v5054
        %v5065 = vpack.c.bf16 %v5057, %v5056
        %v5066 = vpack.c.bf16 %v5059, %v5058
        %v5067 = vpack.c.bf16 %v5061, %v5060
        %v5068 = vpack.c.bf16 %v5063, %v5062
        %v5074 = vunpack.c.l.b16 %v5064
        %v5075 = vunpack.c.h.b16 %v5064
        %v5076 = vunpack.c.l.b16 %v5065
        %v5077 = vunpack.c.h.b16 %v5065
        %v5078 = vunpack.c.l.b16 %v5066
        %v5079 = vunpack.c.h.b16 %v5066
        %v5080 = vunpack.c.l.b16 %v5067
        %v5081 = vunpack.c.h.b16 %v5067
        %v5082 = vunpack.c.l.b16 %v5068
        %v5083 = vunpack.c.h.b16 %v5068
        %v5084 = vpack.c.b16 %v5074, %v5074
        %v5085 = vpack.c.b16 %v5075, %v5075
        %v5086 = vpack.c.b16 %v5076, %v5076
        %v5087 = vpack.c.b16 %v5077, %v5077
        %v5088 = vpack.c.b16 %v5078, %v5078
        %v5089 = vpack.c.b16 %v5079, %v5079
        %v5090 = vpack.c.b16 %v5080, %v5080
        %v5091 = vpack.c.b16 %v5081, %v5081
        %v5092 = vpack.c.b16 %v5082, %v5082
        %v5093 = vpack.c.b16 %v5083, %v5083
        %5104 = vst [vmem:[%s352] sm:$0xf] %v5084
        %5105 = vst [vmem:[%s352 + $0x4] sm:$0xf] %v5085
        %5106 = vst [vmem:[%s352 + $0x8] sm:$0xf] %v5086
        %5107 = vst [vmem:[%s352 + $0xc] sm:$0xf] %v5087
        %5108 = vst [vmem:[%s352 + $0x10] sm:$0xf] %v5088
        %5109 = vst [vmem:[%s352 + $0x14] sm:$0xf] %v5089
        %5110 = vst [vmem:[%s352 + $0x18] sm:$0xf] %v5090
        %5111 = vst [vmem:[%s352 + $0x1c] sm:$0xf] %v5091
        %5112 = vst [vmem:[%s352 + $0x20] sm:$0xf] %v5092
        %5113 = vst [vmem:[%s352 + $0x24] sm:$0xf] %v5093
        %s5114 = sand.u32 %s207, 1
        %s5115 = scalar_lea.sflag [#allocation6], %s5114
        %s5116 = sand.u32 %s207, 1
        %s5117 = smul.addr %s5116, 40
        %s5118 = scalar_lea.vmem [#allocation10], %s5117
        // Predicated region
        $region65: #{tpu_custom_call.1} parent=51 // pred_check
          %p5119 = pneg %p217
        $region66: #{tpu_custom_call.1} parent=51 // pred_check_branch
          %5121 = sbr.rel (%p5119) target = $region68
        $region67: #{tpu_custom_call.1} parent=51 // pred_region
          %s5123 = ssub.s32 640, 640
          %5124 = vsyncadd %s5115, %s5123
          %s5125 = smul.addr %s26, 10
          %s5126 = smul.addr %s5125, 64
          %s5127 = scalar_lea.hbm %s8, %s5126
          %s5128 = sshll.u32 %s5118, 4
          %s5129 = int_to_ptr.vmem [resolvable:$true] %s5128
          %5134 = dma.vmem_to_hbm [thread:$0]  %s5129, 640, %s5127, %s5115, 64, 64, 4
        $region68: #{tpu_custom_call.1} parent=51 // pred_fallthru
          _
      $region52: #{tpu_custom_call.1} parent=5 // pred_fallthru
        _
      %p5135 = scmp.le.s32.totalorder 2, %s21
      // Predicated region
      $region69: #{tpu_custom_call.1} parent=5 // pred_check
        %p5136 = pneg %p5135
      $region70: #{tpu_custom_call.1} parent=5 // pred_check_branch
        %5138 = sbr.rel (%p5136) target = $region72
      $region71: #{tpu_custom_call.1} parent=5 // pred_region
        %s5139 = ssub.s32 %s21, 2
        // Predicated region
        $region73: #{tpu_custom_call.1} parent=71 // pred_check
          %p5140 = pneg %p223
        $region74: #{tpu_custom_call.1} parent=71 // pred_check_branch
          %5142 = sbr.rel (%p5140) target = $region76
        $region75: #{tpu_custom_call.1} parent=71 // pred_region
          %s5143 = sand.u32 %s208, 1
          %s5144 = scalar_lea.sflag [#allocation6], %s5143
          %s5145 = sand.u32 %s208, 1
          %s5146 = smul.addr %s5145, 40
          %s5147 = scalar_lea.vmem [#allocation10], %s5146
          %5148 = dma.done %s5144, 640
        $region76: #{tpu_custom_call.1} parent=71 // pred_fallthru
          _
      $region72: #{tpu_custom_call.1} parent=5 // pred_fallthru
        _
    $region6: #{tpu_custom_call.1} parent=1 // loop_footer
      %s25 = sadd.s32 1, %s21
    $region7: #{tpu_custom_call.1} parent=1 // loop_footer_branch
      %20 = sbr.rel target = $region3
    $region8: #{tpu_custom_call.1} parent=1 // loop_exit
      _
    %5149 = vsyncpa [#allocation5], 1
    %s5150 = scalar_lea.sflag [#allocation5], 1
    %5151 = vsyncpa %s5150, 1
    %5152 = vsyncpa [#allocation8], 1
    %5153 = vsyncpa [#allocation6], 1
    %s5154 = scalar_lea.sflag [#allocation6], 1
    %5155 = vsyncpa %s5154, 1

</llo_original>
